<compile_context>
chip_gen: v7x
topology: tpu7x:2x2x1
jax: 0.10.0
libtpu: 0.0.40
codegen_flags: <defaults>
</compile_context>

<pallas_src>
import functools

import jax
import jax.numpy as jnp
from jax.experimental import pallas as pl
from jax.experimental.pallas import tpu as pltpu

NCLASSES = 250


def _round_up(x, m):
    return (x + m - 1) // m * m


# --------------------------------------------------------------------------
# Pallas kernels
# --------------------------------------------------------------------------

def _matmul_kernel(a_ref, b_ref, bias_ref, o_ref, acc_ref, *, relu):
    """Tiled matmul with K-reduction grid axis, fused bias (+ optional ReLU)."""
    k = pl.program_id(2)

    @pl.when(k == 0)
    def _():
        acc_ref[...] = jnp.zeros_like(acc_ref)

    acc_ref[...] += jnp.dot(a_ref[...], b_ref[...],
                            preferred_element_type=jnp.float32)

    @pl.when(k == pl.num_programs(2) - 1)
    def _():
        r = acc_ref[...] + bias_ref[...]
        if relu:
            r = jnp.maximum(r, 0.0)
        o_ref[...] = r.astype(o_ref.dtype)


def matmul_bias(a, b, bias, *, relu=False):
    """C = A @ B + bias (optionally ReLU).  a: (M,K), b: (K,N), bias: (N,).

    Operands are fed to the MXU as bf16, accumulation is f32, output is f32.
    Tiles adapt to the problem: tm shrinks for skinny M, K/N are padded only
    to 128 and tk divides the padded K so no zero blocks are streamed.
    """
    M, K = a.shape
    _, N = b.shape
    Kp = _round_up(K, 128)
    Np = _round_up(N, 128)
    tm = 128 if M >= 128 else _round_up(M, 16)
    Mp = _round_up(M, tm)
    tn = 128
    if Kp <= 512:
        tk = Kp
    elif Kp % 512 == 0:
        tk = 512
    elif Kp % 256 == 0:
        tk = 256
    else:
        tk = 128

    a_p = jnp.pad(a, ((0, Mp - M), (0, Kp - K))).astype(jnp.bfloat16)
    b_p = jnp.pad(b, ((0, Kp - K), (0, Np - N))).astype(jnp.bfloat16)
    bias_p = jnp.pad(bias, (0, Np - N)).reshape(1, Np).astype(jnp.float32)
    grid = (Mp // tm, Np // tn, Kp // tk)

    out = pl.pallas_call(
        functools.partial(_matmul_kernel, relu=relu),
        out_shape=jax.ShapeDtypeStruct((Mp, Np), jnp.float32),
        grid_spec=pltpu.PrefetchScalarGridSpec(
            num_scalar_prefetch=0,
            grid=grid,
            in_specs=[
                pl.BlockSpec((tm, tk), lambda i, j, k: (i, k)),
                pl.BlockSpec((tk, tn), lambda i, j, k: (k, j)),
                pl.BlockSpec((1, tn), lambda i, j, k: (0, j)),
            ],
            out_specs=pl.BlockSpec((tm, tn), lambda i, j, k: (i, j)),
            scratch_shapes=[pltpu.VMEM((tm, tn), jnp.float32)],
        ),
        compiler_params=pltpu.CompilerParams(
            dimension_semantics=("parallel", "parallel", "arbitrary")),
    )(a_p, b_p, bias_p)
    return out[:M, :N]


def _pool_relu_kernel(a_ref, b_ref, c_ref, d_ref, o_ref):
    """Elementwise max over the four 2x2-window planes, fused with ReLU."""
    m = jnp.maximum(jnp.maximum(a_ref[...], b_ref[...]),
                    jnp.maximum(c_ref[...], d_ref[...]))
    o_ref[...] = jnp.maximum(m, 0.0)


def maxpool2x2_relu(x, tr=128):
    """relu(max_pool2d(x, 2)) (floor mode).  x: NHWC, f32."""
    N, H, W, C = x.shape
    oh, ow = H // 2, W // 2
    xe = x[:, :2 * oh, :2 * ow, :]
    # Non-overlapping 2x2 windows -> four quarter-size planes (a permutation
    # of the data, no k^2 expansion and no jnp.stack copy).
    w00 = xe[:, 0::2, 0::2, :].reshape(-1, C)
    w01 = xe[:, 0::2, 1::2, :].reshape(-1, C)
    w10 = xe[:, 1::2, 0::2, :].reshape(-1, C)
    w11 = xe[:, 1::2, 1::2, :].reshape(-1, C)
    R = N * oh * ow
    Rp = _round_up(R, tr)

    def _pad(t):
        return jnp.pad(t, ((0, Rp - R), (0, 0)))

    out = pl.pallas_call(
        _pool_relu_kernel,
        out_shape=jax.ShapeDtypeStruct((Rp, C), jnp.float32),
        grid_spec=pltpu.PrefetchScalarGridSpec(
            num_scalar_prefetch=0,
            grid=(Rp // tr,),
            in_specs=[pl.BlockSpec((tr, C), lambda i: (i, 0))] * 4,
            out_specs=pl.BlockSpec((tr, C), lambda i: (i, 0)),
        ),
        compiler_params=pltpu.CompilerParams(
            dimension_semantics=("parallel",)),
    )(_pad(w00), _pad(w01), _pad(w10), _pad(w11))
    return out[:R].reshape(N, oh, ow, C)


# --------------------------------------------------------------------------
# Convolution = im2col (plain-JAX glue, built in bf16) + Pallas matmul kernel
# --------------------------------------------------------------------------

def _im2col(x, kh, kw):
    """x: NHWC (valid conv, stride 1).  Returns (N*oh*ow, kh*kw*C) patches."""
    x = x.astype(jnp.bfloat16)          # halve im2col HBM traffic
    N, H, W, C = x.shape
    oh = H - kh + 1
    ow = W - kw + 1
    cols = []
    for i in range(kh):
        for j in range(kw):
            cols.append(x[:, i:i + oh, j:j + ow, :])
    patches = jnp.stack(cols, axis=3)   # (N, oh, ow, kh*kw, C)
    return patches.reshape(N * oh * ow, kh * kw * C), (N, oh, ow)


def conv2d(x, w, b, *, relu=False):
    """x: NHWC, w: (Cout, Cin, KH, KW) (PyTorch OIHW), b: (Cout,)."""
    Cout, Cin, KH, KW = w.shape
    patches, (n, oh, ow) = _im2col(x, KH, KW)
    wmat = jnp.transpose(w, (2, 3, 1, 0)).reshape(KH * KW * Cin, Cout)
    out = matmul_bias(patches, wmat, b, relu=relu)
    return out.reshape(n, oh, ow, Cout)


# --------------------------------------------------------------------------
# Parameters (deterministic uniform(-1/sqrt(fan_in), 1/sqrt(fan_in)) init)
# --------------------------------------------------------------------------

def init_params(key):
    def u(k, shape, fan_in):
        bound = 1.0 / float(fan_in) ** 0.5
        return jax.random.uniform(k, shape, jnp.float32, -bound, bound)

    keys = jax.random.split(key, 10)
    p = {}
    p["w1"] = u(keys[0], (10, 3, 5, 5), 3 * 25)
    p["b1"] = u(keys[1], (10,), 3 * 25)
    p["w2"] = u(keys[2], (20, 10, 5, 5), 10 * 25)
    p["b2"] = u(keys[3], (20,), 10 * 25)
    p["w3"] = u(keys[4], (20, 20, 5, 5), 20 * 25)
    p["b3"] = u(keys[5], (20,), 20 * 25)
    p["w_fc1"] = u(keys[6], (50, 320), 320)
    p["b_fc1"] = u(keys[7], (50,), 320)
    p["w_fc2"] = u(keys[8], (NCLASSES, 50), 50)
    p["b_fc2"] = u(keys[9], (NCLASSES,), 50)
    return p


# --------------------------------------------------------------------------
# Forward pass (mirrors Net.forward)
# --------------------------------------------------------------------------

def net_forward(params, x_nchw):
    x = jnp.transpose(x_nchw, (0, 2, 3, 1)).astype(jnp.float32)  # NCHW -> NHWC
    bs = x.shape[0]

    # conv1 -> maxpool(2) -> relu   (ReLU fused into the pool kernel)
    x = conv2d(x, params["w1"], params["b1"])
    x = maxpool2x2_relu(x)

    # conv2 -> maxpool(2) -> relu
    x = conv2d(x, params["w2"], params["b2"])
    x = maxpool2x2_relu(x)

    # conv3 -> maxpool(2) -> relu
    x = conv2d(x, params["w3"], params["b3"])
    x = maxpool2x2_relu(x)

    # flatten in NCHW order to match torch's x.view(-1, 320)
    flat = jnp.transpose(x, (0, 3, 1, 2)).reshape(bs, -1)        # (bs, 320)

    # fc1 + relu, then fc2 (same Pallas matmul kernel, skinny tm=16)
    h = matmul_bias(flat, params["w_fc1"].T, params["b_fc1"], relu=True)
    return matmul_bias(h, params["w_fc2"].T, params["b_fc2"], relu=False)


if __name__ == "__main__":
    key = jax.random.PRNGKey(0)
    pkey, xkey = jax.random.split(key)
    params = init_params(pkey)

    # 64x64 input: conv/pool chain gives 20ch x 4 x 4 = 320 features, matching
    # the x.view(-1, 320) in the torch module.  Batch = 2, channels = 3.
    x = jax.random.normal(xkey, (2, 3, 64, 64), jnp.float32)

    fwd = jax.jit(net_forward)
    y = jax.block_until_ready(fwd(params, x))

    assert y.shape == (2, NCLASSES), y.shape
    assert bool(jnp.all(jnp.isfinite(y)))
    print("KERNEL_OK")
</pallas_src>

<mosaic_0001>
module attributes {stable_mosaic.version = 11 : i64} {
  func.func @_matmul_kernel(%arg0: i32, %arg1: i32, %arg2: i32, %arg3: memref<128x128xbf16, #tpu.memory_space<vmem>>, %arg4: memref<128x128xbf16, #tpu.memory_space<vmem>>, %arg5: memref<1x128xf32, #tpu.memory_space<vmem>>, %arg6: memref<128x128xf32, #tpu.memory_space<vmem>>, %arg7: memref<128x128xf32, #tpu.memory_space<vmem>>) attributes {dimension_semantics = [#tpu.dimension_semantics<parallel>, #tpu.dimension_semantics<parallel>, #tpu.dimension_semantics<arbitrary>], iteration_bounds = array<i64: 57, 1, 1>, scalar_prefetch = 0 : i64, scratch_operands = 1 : i64, tpu.core_type = #tpu.core_type<tc>, window_params = [{transform_indices = @transform_0, window_bounds = array<i64: 128, 128>}, {transform_indices = @transform_1, window_bounds = array<i64: 128, 128>}, {transform_indices = @transform_2, window_bounds = array<i64: 1, 128>}, {transform_indices = @transform_3, window_bounds = array<i64: 128, 128>}]} {
    %c0_i32 = arith.constant 0 : i32
    %0 = arith.cmpi eq, %arg2, %c0_i32 : i32
    %1 = arith.extui %0 : i1 to i32
    %c0_i32_0 = arith.constant 0 : i32
    %2 = arith.cmpi ne, %1, %c0_i32_0 : i32
    scf.if %2 {
      %cst_10 = arith.constant 0.000000e+00 : f32
      %12 = vector.broadcast %cst_10 : f32 to vector<128x128xf32>
      %c0_11 = arith.constant 0 : index
      %c0_12 = arith.constant 0 : index
      %13 = vector.load %arg7[%c0_11, %c0_12] : memref<128x128xf32, #tpu.memory_space<vmem>>, vector<128x128xf32>
      tpu.vector_store %arg7[%c0_11, %c0_12], %12 {strides = array<i32>} : memref<128x128xf32, #tpu.memory_space<vmem>>, vector<128x128xf32>,
    } else {
    }
    %c0 = arith.constant 0 : index
    %c0_1 = arith.constant 0 : index
    %3 = vector.load %arg7[%c0, %c0_1] : memref<128x128xf32, #tpu.memory_space<vmem>>, vector<128x128xf32>
    %c0_2 = arith.constant 0 : index
    %c0_3 = arith.constant 0 : index
    %4 = vector.load %arg3[%c0_2, %c0_3] : memref<128x128xbf16, #tpu.memory_space<vmem>>, vector<128x128xbf16>
    %c0_4 = arith.constant 0 : index
    %c0_5 = arith.constant 0 : index
    %5 = vector.load %arg4[%c0_4, %c0_5] : memref<128x128xbf16, #tpu.memory_space<vmem>>, vector<128x128xbf16>
    %cst = arith.constant dense<0.000000e+00> : vector<128x128xf32>
    %6 = tpu.matmul %4, %5, %cst {dimension_numbers = #tpu.dot_dimension_numbers<[1], [0], [0], [1], [0, 0, 1, 1], [], []>} : vector<128x128xbf16>, vector<128x128xbf16>, vector<128x128xf32> -> vector<128x128xf32>
    %7 = arith.addf %3, %6 : vector<128x128xf32>
    %c0_6 = arith.constant 0 : index
    %c0_7 = arith.constant 0 : index
    %8 = vector.load %arg7[%c0_6, %c0_7] : memref<128x128xf32, #tpu.memory_space<vmem>>, vector<128x128xf32>
    tpu.vector_store %arg7[%c0_6, %c0_7], %7 {strides = array<i32>} : memref<128x128xf32, #tpu.memory_space<vmem>>, vector<128x128xf32>,
    %c0_i32_8 = arith.constant 0 : i32
    %9 = arith.cmpi eq, %arg2, %c0_i32_8 : i32
    %10 = arith.extui %9 : i1 to i32
    %c0_i32_9 = arith.constant 0 : i32
    %11 = arith.cmpi ne, %10, %c0_i32_9 : i32
    scf.if %11 {
      %c0_10 = arith.constant 0 : index
      %c0_11 = arith.constant 0 : index
      %12 = vector.load %arg7[%c0_10, %c0_11] : memref<128x128xf32, #tpu.memory_space<vmem>>, vector<128x128xf32>
      %c0_12 = arith.constant 0 : index
      %c0_13 = arith.constant 0 : index
      %13 = vector.load %arg5[%c0_12, %c0_13] : memref<1x128xf32, #tpu.memory_space<vmem>>, vector<1x128xf32>
      %14 = vector.broadcast %13 : vector<1x128xf32> to vector<128x128xf32>
      %15 = arith.addf %12, %14 : vector<128x128xf32>
      %c0_14 = arith.constant 0 : index
      %c0_15 = arith.constant 0 : index
      %16 = vector.load %arg6[%c0_14, %c0_15] : memref<128x128xf32, #tpu.memory_space<vmem>>, vector<128x128xf32>
      tpu.vector_store %arg6[%c0_14, %c0_15], %15 {strides = array<i32>} : memref<128x128xf32, #tpu.memory_space<vmem>>, vector<128x128xf32>,
    } else {
    }
    return
  }
  func.func @transform_0(%arg0: i32, %arg1: i32, %arg2: i32) -> (i32, i32) {
    %c0_i32 = arith.constant 0 : i32
    return %arg0, %arg2 : i32, i32
  }
  func.func @transform_1(%arg0: i32, %arg1: i32, %arg2: i32) -> (i32, i32) {
    %c0_i32 = arith.constant 0 : i32
    return %arg2, %arg1 : i32, i32
  }
  func.func @transform_2(%arg0: i32, %arg1: i32, %arg2: i32) -> (i32, i32) {
    %c0_i32 = arith.constant 0 : i32
    %c0_i32_0 = arith.constant 0 : i32
    return %c0_i32, %arg1 : i32, i32
  }
  func.func @transform_3(%arg0: i32, %arg1: i32, %arg2: i32) -> (i32, i32) {
    %c0_i32 = arith.constant 0 : i32
    return %arg0, %arg1 : i32, i32
  }
}

module attributes {stable_mosaic.version = 11 : i64} {
  func.func @_pool_relu_kernel(%arg0: i32, %arg1: memref<128x10xf32, #tpu.memory_space<vmem>>, %arg2: memref<128x10xf32, #tpu.memory_space<vmem>>, %arg3: memref<128x10xf32, #tpu.memory_space<vmem>>, %arg4: memref<128x10xf32, #tpu.memory_space<vmem>>, %arg5: memref<128x10xf32, #tpu.memory_space<vmem>>) attributes {dimension_semantics = [#tpu.dimension_semantics<parallel>], iteration_bounds = array<i64: 15>, scalar_prefetch = 0 : i64, scratch_operands = 0 : i64, tpu.core_type = #tpu.core_type<tc>, window_params = [{transform_indices = @transform_0, window_bounds = array<i64: 128, 10>}, {transform_indices = @transform_1, window_bounds = array<i64: 128, 10>}, {transform_indices = @transform_2, window_bounds = array<i64: 128, 10>}, {transform_indices = @transform_3, window_bounds = array<i64: 128, 10>}, {transform_indices = @transform_4, window_bounds = array<i64: 128, 10>}]} {
    %c0 = arith.constant 0 : index
    %c0_0 = arith.constant 0 : index
    %0 = vector.load %arg1[%c0, %c0_0] : memref<128x10xf32, #tpu.memory_space<vmem>>, vector<128x10xf32>
    %c0_1 = arith.constant 0 : index
    %c0_2 = arith.constant 0 : index
    %1 = vector.load %arg2[%c0_1, %c0_2] : memref<128x10xf32, #tpu.memory_space<vmem>>, vector<128x10xf32>
    %2 = arith.maximumf %0, %1 : vector<128x10xf32>
    %c0_3 = arith.constant 0 : index
    %c0_4 = arith.constant 0 : index
    %3 = vector.load %arg3[%c0_3, %c0_4] : memref<128x10xf32, #tpu.memory_space<vmem>>, vector<128x10xf32>
    %c0_5 = arith.constant 0 : index
    %c0_6 = arith.constant 0 : index
    %4 = vector.load %arg4[%c0_5, %c0_6] : memref<128x10xf32, #tpu.memory_space<vmem>>, vector<128x10xf32>
    %5 = arith.maximumf %3, %4 : vector<128x10xf32>
    %6 = arith.maximumf %2, %5 : vector<128x10xf32>
    %cst = arith.constant 0.000000e+00 : f32
    %7 = vector.broadcast %cst : f32 to vector<128x10xf32>
    %8 = arith.maximumf %6, %7 : vector<128x10xf32>
    %c0_7 = arith.constant 0 : index
    %c0_8 = arith.constant 0 : index
    %9 = vector.load %arg5[%c0_7, %c0_8] : memref<128x10xf32, #tpu.memory_space<vmem>>, vector<128x10xf32>
    tpu.vector_store %arg5[%c0_7, %c0_8], %8 {strides = array<i32>} : memref<128x10xf32, #tpu.memory_space<vmem>>, vector<128x10xf32>,
    return
  }
  func.func @transform_0(%arg0: i32) -> (i32, i32) {
    %c0_i32 = arith.constant 0 : i32
    %c0_i32_0 = arith.constant 0 : i32
    return %arg0, %c0_i32 : i32, i32
  }
  func.func @transform_1(%arg0: i32) -> (i32, i32) {
    %c0_i32 = arith.constant 0 : i32
    %c0_i32_0 = arith.constant 0 : i32
    return %arg0, %c0_i32 : i32, i32
  }
  func.func @transform_2(%arg0: i32) -> (i32, i32) {
    %c0_i32 = arith.constant 0 : i32
    %c0_i32_0 = arith.constant 0 : i32
    return %arg0, %c0_i32 : i32, i32
  }
  func.func @transform_3(%arg0: i32) -> (i32, i32) {
    %c0_i32 = arith.constant 0 : i32
    %c0_i32_0 = arith.constant 0 : i32
    return %arg0, %c0_i32 : i32, i32
  }
  func.func @transform_4(%arg0: i32) -> (i32, i32) {
    %c0_i32 = arith.constant 0 : i32
    %c0_i32_0 = arith.constant 0 : i32
    return %arg0, %c0_i32 : i32, i32
  }
}

module attributes {stable_mosaic.version = 11 : i64} {
  func.func @_matmul_kernel(%arg0: i32, %arg1: i32, %arg2: i32, %arg3: memref<128x256xbf16, #tpu.memory_space<vmem>>, %arg4: memref<256x128xbf16, #tpu.memory_space<vmem>>, %arg5: memref<1x128xf32, #tpu.memory_space<vmem>>, %arg6: memref<128x128xf32, #tpu.memory_space<vmem>>, %arg7: memref<128x128xf32, #tpu.memory_space<vmem>>) attributes {dimension_semantics = [#tpu.dimension_semantics<parallel>, #tpu.dimension_semantics<parallel>, #tpu.dimension_semantics<arbitrary>], iteration_bounds = array<i64: 11, 1, 1>, scalar_prefetch = 0 : i64, scratch_operands = 1 : i64, tpu.core_type = #tpu.core_type<tc>, window_params = [{transform_indices = @transform_0, window_bounds = array<i64: 128, 256>}, {transform_indices = @transform_1, window_bounds = array<i64: 256, 128>}, {transform_indices = @transform_2, window_bounds = array<i64: 1, 128>}, {transform_indices = @transform_3, window_bounds = array<i64: 128, 128>}]} {
    %c0_i32 = arith.constant 0 : i32
    %0 = arith.cmpi eq, %arg2, %c0_i32 : i32
    %1 = arith.extui %0 : i1 to i32
    %c0_i32_0 = arith.constant 0 : i32
    %2 = arith.cmpi ne, %1, %c0_i32_0 : i32
    scf.if %2 {
      %cst_10 = arith.constant 0.000000e+00 : f32
      %12 = vector.broadcast %cst_10 : f32 to vector<128x128xf32>
      %c0_11 = arith.constant 0 : index
      %c0_12 = arith.constant 0 : index
      %13 = vector.load %arg7[%c0_11, %c0_12] : memref<128x128xf32, #tpu.memory_space<vmem>>, vector<128x128xf32>
      tpu.vector_store %arg7[%c0_11, %c0_12], %12 {strides = array<i32>} : memref<128x128xf32, #tpu.memory_space<vmem>>, vector<128x128xf32>,
    } else {
    }
    %c0 = arith.constant 0 : index
    %c0_1 = arith.constant 0 : index
    %3 = vector.load %arg7[%c0, %c0_1] : memref<128x128xf32, #tpu.memory_space<vmem>>, vector<128x128xf32>
    %c0_2 = arith.constant 0 : index
    %c0_3 = arith.constant 0 : index
    %4 = vector.load %arg3[%c0_2, %c0_3] : memref<128x256xbf16, #tpu.memory_space<vmem>>, vector<128x256xbf16>
    %c0_4 = arith.constant 0 : index
    %c0_5 = arith.constant 0 : index
    %5 = vector.load %arg4[%c0_4, %c0_5] : memref<256x128xbf16, #tpu.memory_space<vmem>>, vector<256x128xbf16>
    %cst = arith.constant dense<0.000000e+00> : vector<128x128xf32>
    %6 = tpu.matmul %4, %5, %cst {dimension_numbers = #tpu.dot_dimension_numbers<[1], [0], [0], [1], [0, 0, 1, 1], [], []>} : vector<128x256xbf16>, vector<256x128xbf16>, vector<128x128xf32> -> vector<128x128xf32>
    %7 = arith.addf %3, %6 : vector<128x128xf32>
    %c0_6 = arith.constant 0 : index
    %c0_7 = arith.constant 0 : index
    %8 = vector.load %arg7[%c0_6, %c0_7] : memref<128x128xf32, #tpu.memory_space<vmem>>, vector<128x128xf32>
    tpu.vector_store %arg7[%c0_6, %c0_7], %7 {strides = array<i32>} : memref<128x128xf32, #tpu.memory_space<vmem>>, vector<128x128xf32>,
    %c0_i32_8 = arith.constant 0 : i32
    %9 = arith.cmpi eq, %arg2, %c0_i32_8 : i32
    %10 = arith.extui %9 : i1 to i32
    %c0_i32_9 = arith.constant 0 : i32
    %11 = arith.cmpi ne, %10, %c0_i32_9 : i32
    scf.if %11 {
      %c0_10 = arith.constant 0 : index
      %c0_11 = arith.constant 0 : index
      %12 = vector.load %arg7[%c0_10, %c0_11] : memref<128x128xf32, #tpu.memory_space<vmem>>, vector<128x128xf32>
      %c0_12 = arith.constant 0 : index
      %c0_13 = arith.constant 0 : index
      %13 = vector.load %arg5[%c0_12, %c0_13] : memref<1x128xf32, #tpu.memory_space<vmem>>, vector<1x128xf32>
      %14 = vector.broadcast %13 : vector<1x128xf32> to vector<128x128xf32>
      %15 = arith.addf %12, %14 : vector<128x128xf32>
      %c0_14 = arith.constant 0 : index
      %c0_15 = arith.constant 0 : index
      %16 = vector.load %arg6[%c0_14, %c0_15] : memref<128x128xf32, #tpu.memory_space<vmem>>, vector<128x128xf32>
      tpu.vector_store %arg6[%c0_14, %c0_15], %15 {strides = array<i32>} : memref<128x128xf32, #tpu.memory_space<vmem>>, vector<128x128xf32>,
    } else {
    }
    return
  }
  func.func @transform_0(%arg0: i32, %arg1: i32, %arg2: i32) -> (i32, i32) {
    %c0_i32 = arith.constant 0 : i32
    return %arg0, %arg2 : i32, i32
  }
  func.func @transform_1(%arg0: i32, %arg1: i32, %arg2: i32) -> (i32, i32) {
    %c0_i32 = arith.constant 0 : i32
    return %arg2, %arg1 : i32, i32
  }
  func.func @transform_2(%arg0: i32, %arg1: i32, %arg2: i32) -> (i32, i32) {
    %c0_i32 = arith.constant 0 : i32
    %c0_i32_0 = arith.constant 0 : i32
    return %c0_i32, %arg1 : i32, i32
  }
  func.func @transform_3(%arg0: i32, %arg1: i32, %arg2: i32) -> (i32, i32) {
    %c0_i32 = arith.constant 0 : i32
    return %arg0, %arg1 : i32, i32
  }
}

module attributes {stable_mosaic.version = 11 : i64} {
  func.func @_pool_relu_kernel(%arg0: i32, %arg1: memref<128x20xf32, #tpu.memory_space<vmem>>, %arg2: memref<128x20xf32, #tpu.memory_space<vmem>>, %arg3: memref<128x20xf32, #tpu.memory_space<vmem>>, %arg4: memref<128x20xf32, #tpu.memory_space<vmem>>, %arg5: memref<128x20xf32, #tpu.memory_space<vmem>>) attributes {dimension_semantics = [#tpu.dimension_semantics<parallel>], iteration_bounds = array<i64: 3>, scalar_prefetch = 0 : i64, scratch_operands = 0 : i64, tpu.core_type = #tpu.core_type<tc>, window_params = [{transform_indices = @transform_0, window_bounds = array<i64: 128, 20>}, {transform_indices = @transform_1, window_bounds = array<i64: 128, 20>}, {transform_indices = @transform_2, window_bounds = array<i64: 128, 20>}, {transform_indices = @transform_3, window_bounds = array<i64: 128, 20>}, {transform_indices = @transform_4, window_bounds = array<i64: 128, 20>}]} {
    %c0 = arith.constant 0 : index
    %c0_0 = arith.constant 0 : index
    %0 = vector.load %arg1[%c0, %c0_0] : memref<128x20xf32, #tpu.memory_space<vmem>>, vector<128x20xf32>
    %c0_1 = arith.constant 0 : index
    %c0_2 = arith.constant 0 : index
    %1 = vector.load %arg2[%c0_1, %c0_2] : memref<128x20xf32, #tpu.memory_space<vmem>>, vector<128x20xf32>
    %2 = arith.maximumf %0, %1 : vector<128x20xf32>
    %c0_3 = arith.constant 0 : index
    %c0_4 = arith.constant 0 : index
    %3 = vector.load %arg3[%c0_3, %c0_4] : memref<128x20xf32, #tpu.memory_space<vmem>>, vector<128x20xf32>
    %c0_5 = arith.constant 0 : index
    %c0_6 = arith.constant 0 : index
    %4 = vector.load %arg4[%c0_5, %c0_6] : memref<128x20xf32, #tpu.memory_space<vmem>>, vector<128x20xf32>
    %5 = arith.maximumf %3, %4 : vector<128x20xf32>
    %6 = arith.maximumf %2, %5 : vector<128x20xf32>
    %cst = arith.constant 0.000000e+00 : f32
    %7 = vector.broadcast %cst : f32 to vector<128x20xf32>
    %8 = arith.maximumf %6, %7 : vector<128x20xf32>
    %c0_7 = arith.constant 0 : index
    %c0_8 = arith.constant 0 : index
    %9 = vector.load %arg5[%c0_7, %c0_8] : memref<128x20xf32, #tpu.memory_space<vmem>>, vector<128x20xf32>
    tpu.vector_store %arg5[%c0_7, %c0_8], %8 {strides = array<i32>} : memref<128x20xf32, #tpu.memory_space<vmem>>, vector<128x20xf32>,
    return
  }
  func.func @transform_0(%arg0: i32) -> (i32, i32) {
    %c0_i32 = arith.constant 0 : i32
    %c0_i32_0 = arith.constant 0 : i32
    return %arg0, %c0_i32 : i32, i32
  }
  func.func @transform_1(%arg0: i32) -> (i32, i32) {
    %c0_i32 = arith.constant 0 : i32
    %c0_i32_0 = arith.constant 0 : i32
    return %arg0, %c0_i32 : i32, i32
  }
  func.func @transform_2(%arg0: i32) -> (i32, i32) {
    %c0_i32 = arith.constant 0 : i32
    %c0_i32_0 = arith.constant 0 : i32
    return %arg0, %c0_i32 : i32, i32
  }
  func.func @transform_3(%arg0: i32) -> (i32, i32) {
    %c0_i32 = arith.constant 0 : i32
    %c0_i32_0 = arith.constant 0 : i32
    return %arg0, %c0_i32 : i32, i32
  }
  func.func @transform_4(%arg0: i32) -> (i32, i32) {
    %c0_i32 = arith.constant 0 : i32
    %c0_i32_0 = arith.constant 0 : i32
    return %arg0, %c0_i32 : i32, i32
  }
}

module attributes {stable_mosaic.version = 11 : i64} {
  func.func @_matmul_kernel(%arg0: i32, %arg1: i32, %arg2: i32, %arg3: memref<128x512xbf16, #tpu.memory_space<vmem>>, %arg4: memref<512x128xbf16, #tpu.memory_space<vmem>>, %arg5: memref<1x128xf32, #tpu.memory_space<vmem>>, %arg6: memref<128x128xf32, #tpu.memory_space<vmem>>, %arg7: memref<128x128xf32, #tpu.memory_space<vmem>>) attributes {dimension_semantics = [#tpu.dimension_semantics<parallel>, #tpu.dimension_semantics<parallel>, #tpu.dimension_semantics<arbitrary>], iteration_bounds = array<i64: 2, 1, 1>, scalar_prefetch = 0 : i64, scratch_operands = 1 : i64, tpu.core_type = #tpu.core_type<tc>, window_params = [{transform_indices = @transform_0, window_bounds = array<i64: 128, 512>}, {transform_indices = @transform_1, window_bounds = array<i64: 512, 128>}, {transform_indices = @transform_2, window_bounds = array<i64: 1, 128>}, {transform_indices = @transform_3, window_bounds = array<i64: 128, 128>}]} {
    %c0_i32 = arith.constant 0 : i32
    %0 = arith.cmpi eq, %arg2, %c0_i32 : i32
    %1 = arith.extui %0 : i1 to i32
    %c0_i32_0 = arith.constant 0 : i32
    %2 = arith.cmpi ne, %1, %c0_i32_0 : i32
    scf.if %2 {
      %cst_10 = arith.constant 0.000000e+00 : f32
      %12 = vector.broadcast %cst_10 : f32 to vector<128x128xf32>
      %c0_11 = arith.constant 0 : index
      %c0_12 = arith.constant 0 : index
      %13 = vector.load %arg7[%c0_11, %c0_12] : memref<128x128xf32, #tpu.memory_space<vmem>>, vector<128x128xf32>
      tpu.vector_store %arg7[%c0_11, %c0_12], %12 {strides = array<i32>} : memref<128x128xf32, #tpu.memory_space<vmem>>, vector<128x128xf32>,
    } else {
    }
    %c0 = arith.constant 0 : index
    %c0_1 = arith.constant 0 : index
    %3 = vector.load %arg7[%c0, %c0_1] : memref<128x128xf32, #tpu.memory_space<vmem>>, vector<128x128xf32>
    %c0_2 = arith.constant 0 : index
    %c0_3 = arith.constant 0 : index
    %4 = vector.load %arg3[%c0_2, %c0_3] : memref<128x512xbf16, #tpu.memory_space<vmem>>, vector<128x512xbf16>
    %c0_4 = arith.constant 0 : index
    %c0_5 = arith.constant 0 : index
    %5 = vector.load %arg4[%c0_4, %c0_5] : memref<512x128xbf16, #tpu.memory_space<vmem>>, vector<512x128xbf16>
    %cst = arith.constant dense<0.000000e+00> : vector<128x128xf32>
    %6 = tpu.matmul %4, %5, %cst {dimension_numbers = #tpu.dot_dimension_numbers<[1], [0], [0], [1], [0, 0, 1, 1], [], []>} : vector<128x512xbf16>, vector<512x128xbf16>, vector<128x128xf32> -> vector<128x128xf32>
    %7 = arith.addf %3, %6 : vector<128x128xf32>
    %c0_6 = arith.constant 0 : index
    %c0_7 = arith.constant 0 : index
    %8 = vector.load %arg7[%c0_6, %c0_7] : memref<128x128xf32, #tpu.memory_space<vmem>>, vector<128x128xf32>
    tpu.vector_store %arg7[%c0_6, %c0_7], %7 {strides = array<i32>} : memref<128x128xf32, #tpu.memory_space<vmem>>, vector<128x128xf32>,
    %c0_i32_8 = arith.constant 0 : i32
    %9 = arith.cmpi eq, %arg2, %c0_i32_8 : i32
    %10 = arith.extui %9 : i1 to i32
    %c0_i32_9 = arith.constant 0 : i32
    %11 = arith.cmpi ne, %10, %c0_i32_9 : i32
    scf.if %11 {
      %c0_10 = arith.constant 0 : index
      %c0_11 = arith.constant 0 : index
      %12 = vector.load %arg7[%c0_10, %c0_11] : memref<128x128xf32, #tpu.memory_space<vmem>>, vector<128x128xf32>
      %c0_12 = arith.constant 0 : index
      %c0_13 = arith.constant 0 : index
      %13 = vector.load %arg5[%c0_12, %c0_13] : memref<1x128xf32, #tpu.memory_space<vmem>>, vector<1x128xf32>
      %14 = vector.broadcast %13 : vector<1x128xf32> to vector<128x128xf32>
      %15 = arith.addf %12, %14 : vector<128x128xf32>
      %c0_14 = arith.constant 0 : index
      %c0_15 = arith.constant 0 : index
      %16 = vector.load %arg6[%c0_14, %c0_15] : memref<128x128xf32, #tpu.memory_space<vmem>>, vector<128x128xf32>
      tpu.vector_store %arg6[%c0_14, %c0_15], %15 {strides = array<i32>} : memref<128x128xf32, #tpu.memory_space<vmem>>, vector<128x128xf32>,
    } else {
    }
    return
  }
  func.func @transform_0(%arg0: i32, %arg1: i32, %arg2: i32) -> (i32, i32) {
    %c0_i32 = arith.constant 0 : i32
    return %arg0, %arg2 : i32, i32
  }
  func.func @transform_1(%arg0: i32, %arg1: i32, %arg2: i32) -> (i32, i32) {
    %c0_i32 = arith.constant 0 : i32
    return %arg2, %arg1 : i32, i32
  }
  func.func @transform_2(%arg0: i32, %arg1: i32, %arg2: i32) -> (i32, i32) {
    %c0_i32 = arith.constant 0 : i32
    %c0_i32_0 = arith.constant 0 : i32
    return %c0_i32, %arg1 : i32, i32
  }
  func.func @transform_3(%arg0: i32, %arg1: i32, %arg2: i32) -> (i32, i32) {
    %c0_i32 = arith.constant 0 : i32
    return %arg0, %arg1 : i32, i32
  }
}

module attributes {stable_mosaic.version = 11 : i64} {
  func.func @_pool_relu_kernel(%arg0: i32, %arg1: memref<128x20xf32, #tpu.memory_space<vmem>>, %arg2: memref<128x20xf32, #tpu.memory_space<vmem>>, %arg3: memref<128x20xf32, #tpu.memory_space<vmem>>, %arg4: memref<128x20xf32, #tpu.memory_space<vmem>>, %arg5: memref<128x20xf32, #tpu.memory_space<vmem>>) attributes {dimension_semantics = [#tpu.dimension_semantics<parallel>], iteration_bounds = array<i64: 1>, scalar_prefetch = 0 : i64, scratch_operands = 0 : i64, tpu.core_type = #tpu.core_type<tc>, window_params = [{transform_indices = @transform_0, window_bounds = array<i64: 128, 20>}, {transform_indices = @transform_1, window_bounds = array<i64: 128, 20>}, {transform_indices = @transform_2, window_bounds = array<i64: 128, 20>}, {transform_indices = @transform_3, window_bounds = array<i64: 128, 20>}, {transform_indices = @transform_4, window_bounds = array<i64: 128, 20>}]} {
    %c0 = arith.constant 0 : index
    %c0_0 = arith.constant 0 : index
    %0 = vector.load %arg1[%c0, %c0_0] : memref<128x20xf32, #tpu.memory_space<vmem>>, vector<128x20xf32>
    %c0_1 = arith.constant 0 : index
    %c0_2 = arith.constant 0 : index
    %1 = vector.load %arg2[%c0_1, %c0_2] : memref<128x20xf32, #tpu.memory_space<vmem>>, vector<128x20xf32>
    %2 = arith.maximumf %0, %1 : vector<128x20xf32>
    %c0_3 = arith.constant 0 : index
    %c0_4 = arith.constant 0 : index
    %3 = vector.load %arg3[%c0_3, %c0_4] : memref<128x20xf32, #tpu.memory_space<vmem>>, vector<128x20xf32>
    %c0_5 = arith.constant 0 : index
    %c0_6 = arith.constant 0 : index
    %4 = vector.load %arg4[%c0_5, %c0_6] : memref<128x20xf32, #tpu.memory_space<vmem>>, vector<128x20xf32>
    %5 = arith.maximumf %3, %4 : vector<128x20xf32>
    %6 = arith.maximumf %2, %5 : vector<128x20xf32>
    %cst = arith.constant 0.000000e+00 : f32
    %7 = vector.broadcast %cst : f32 to vector<128x20xf32>
    %8 = arith.maximumf %6, %7 : vector<128x20xf32>
    %c0_7 = arith.constant 0 : index
    %c0_8 = arith.constant 0 : index
    %9 = vector.load %arg5[%c0_7, %c0_8] : memref<128x20xf32, #tpu.memory_space<vmem>>, vector<128x20xf32>
    tpu.vector_store %arg5[%c0_7, %c0_8], %8 {strides = array<i32>} : memref<128x20xf32, #tpu.memory_space<vmem>>, vector<128x20xf32>,
    return
  }
  func.func @transform_0(%arg0: i32) -> (i32, i32) {
    %c0_i32 = arith.constant 0 : i32
    %c0_i32_0 = arith.constant 0 : i32
    return %arg0, %c0_i32 : i32, i32
  }
  func.func @transform_1(%arg0: i32) -> (i32, i32) {
    %c0_i32 = arith.constant 0 : i32
    %c0_i32_0 = arith.constant 0 : i32
    return %arg0, %c0_i32 : i32, i32
  }
  func.func @transform_2(%arg0: i32) -> (i32, i32) {
    %c0_i32 = arith.constant 0 : i32
    %c0_i32_0 = arith.constant 0 : i32
    return %arg0, %c0_i32 : i32, i32
  }
  func.func @transform_3(%arg0: i32) -> (i32, i32) {
    %c0_i32 = arith.constant 0 : i32
    %c0_i32_0 = arith.constant 0 : i32
    return %arg0, %c0_i32 : i32, i32
  }
  func.func @transform_4(%arg0: i32) -> (i32, i32) {
    %c0_i32 = arith.constant 0 : i32
    %c0_i32_0 = arith.constant 0 : i32
    return %arg0, %c0_i32 : i32, i32
  }
}

module attributes {stable_mosaic.version = 11 : i64} {
  func.func @_matmul_kernel(%arg0: i32, %arg1: i32, %arg2: i32, %arg3: memref<16x384xbf16, #tpu.memory_space<vmem>>, %arg4: memref<384x128xbf16, #tpu.memory_space<vmem>>, %arg5: memref<1x128xf32, #tpu.memory_space<vmem>>, %arg6: memref<16x128xf32, #tpu.memory_space<vmem>>, %arg7: memref<16x128xf32, #tpu.memory_space<vmem>>) attributes {dimension_semantics = [#tpu.dimension_semantics<parallel>, #tpu.dimension_semantics<parallel>, #tpu.dimension_semantics<arbitrary>], iteration_bounds = array<i64: 1, 1, 1>, scalar_prefetch = 0 : i64, scratch_operands = 1 : i64, tpu.core_type = #tpu.core_type<tc>, window_params = [{transform_indices = @transform_0, window_bounds = array<i64: 16, 384>}, {transform_indices = @transform_1, window_bounds = array<i64: 384, 128>}, {transform_indices = @transform_2, window_bounds = array<i64: 1, 128>}, {transform_indices = @transform_3, window_bounds = array<i64: 16, 128>}]} {
    %c0_i32 = arith.constant 0 : i32
    %0 = arith.cmpi eq, %arg2, %c0_i32 : i32
    %1 = arith.extui %0 : i1 to i32
    %c0_i32_0 = arith.constant 0 : i32
    %2 = arith.cmpi ne, %1, %c0_i32_0 : i32
    scf.if %2 {
      %cst_10 = arith.constant 0.000000e+00 : f32
      %12 = vector.broadcast %cst_10 : f32 to vector<16x128xf32>
      %c0_11 = arith.constant 0 : index
      %c0_12 = arith.constant 0 : index
      %13 = vector.load %arg7[%c0_11, %c0_12] : memref<16x128xf32, #tpu.memory_space<vmem>>, vector<16x128xf32>
      tpu.vector_store %arg7[%c0_11, %c0_12], %12 {strides = array<i32>} : memref<16x128xf32, #tpu.memory_space<vmem>>, vector<16x128xf32>,
    } else {
    }
    %c0 = arith.constant 0 : index
    %c0_1 = arith.constant 0 : index
    %3 = vector.load %arg7[%c0, %c0_1] : memref<16x128xf32, #tpu.memory_space<vmem>>, vector<16x128xf32>
    %c0_2 = arith.constant 0 : index
    %c0_3 = arith.constant 0 : index
    %4 = vector.load %arg3[%c0_2, %c0_3] : memref<16x384xbf16, #tpu.memory_space<vmem>>, vector<16x384xbf16>
    %c0_4 = arith.constant 0 : index
    %c0_5 = arith.constant 0 : index
    %5 = vector.load %arg4[%c0_4, %c0_5] : memref<384x128xbf16, #tpu.memory_space<vmem>>, vector<384x128xbf16>
    %cst = arith.constant dense<0.000000e+00> : vector<16x128xf32>
    %6 = tpu.matmul %4, %5, %cst {dimension_numbers = #tpu.dot_dimension_numbers<[1], [0], [0], [1], [0, 0, 1, 1], [], []>} : vector<16x384xbf16>, vector<384x128xbf16>, vector<16x128xf32> -> vector<16x128xf32>
    %7 = arith.addf %3, %6 : vector<16x128xf32>
    %c0_6 = arith.constant 0 : index
    %c0_7 = arith.constant 0 : index
    %8 = vector.load %arg7[%c0_6, %c0_7] : memref<16x128xf32, #tpu.memory_space<vmem>>, vector<16x128xf32>
    tpu.vector_store %arg7[%c0_6, %c0_7], %7 {strides = array<i32>} : memref<16x128xf32, #tpu.memory_space<vmem>>, vector<16x128xf32>,
    %c0_i32_8 = arith.constant 0 : i32
    %9 = arith.cmpi eq, %arg2, %c0_i32_8 : i32
    %10 = arith.extui %9 : i1 to i32
    %c0_i32_9 = arith.constant 0 : i32
    %11 = arith.cmpi ne, %10, %c0_i32_9 : i32
    scf.if %11 {
      %c0_10 = arith.constant 0 : index
      %c0_11 = arith.constant 0 : index
      %12 = vector.load %arg7[%c0_10, %c0_11] : memref<16x128xf32, #tpu.memory_space<vmem>>, vector<16x128xf32>
      %c0_12 = arith.constant 0 : index
      %c0_13 = arith.constant 0 : index
      %13 = vector.load %arg5[%c0_12, %c0_13] : memref<1x128xf32, #tpu.memory_space<vmem>>, vector<1x128xf32>
      %14 = vector.broadcast %13 : vector<1x128xf32> to vector<16x128xf32>
      %15 = arith.addf %12, %14 : vector<16x128xf32>
      %cst_14 = arith.constant 0.000000e+00 : f32
      %16 = vector.broadcast %cst_14 : f32 to vector<16x128xf32>
      %17 = arith.maximumf %15, %16 : vector<16x128xf32>
      %c0_15 = arith.constant 0 : index
      %c0_16 = arith.constant 0 : index
      %18 = vector.load %arg6[%c0_15, %c0_16] : memref<16x128xf32, #tpu.memory_space<vmem>>, vector<16x128xf32>
      tpu.vector_store %arg6[%c0_15, %c0_16], %17 {strides = array<i32>} : memref<16x128xf32, #tpu.memory_space<vmem>>, vector<16x128xf32>,
    } else {
    }
    return
  }
  func.func @transform_0(%arg0: i32, %arg1: i32, %arg2: i32) -> (i32, i32) {
    %c0_i32 = arith.constant 0 : i32
    return %arg0, %arg2 : i32, i32
  }
  func.func @transform_1(%arg0: i32, %arg1: i32, %arg2: i32) -> (i32, i32) {
    %c0_i32 = arith.constant 0 : i32
    return %arg2, %arg1 : i32, i32
  }
  func.func @transform_2(%arg0: i32, %arg1: i32, %arg2: i32) -> (i32, i32) {
    %c0_i32 = arith.constant 0 : i32
    %c0_i32_0 = arith.constant 0 : i32
    return %c0_i32, %arg1 : i32, i32
  }
  func.func @transform_3(%arg0: i32, %arg1: i32, %arg2: i32) -> (i32, i32) {
    %c0_i32 = arith.constant 0 : i32
    return %arg0, %arg1 : i32, i32
  }
}

module attributes {stable_mosaic.version = 11 : i64} {
  func.func @_matmul_kernel(%arg0: i32, %arg1: i32, %arg2: i32, %arg3: memref<16x128xbf16, #tpu.memory_space<vmem>>, %arg4: memref<128x128xbf16, #tpu.memory_space<vmem>>, %arg5: memref<1x128xf32, #tpu.memory_space<vmem>>, %arg6: memref<16x128xf32, #tpu.memory_space<vmem>>, %arg7: memref<16x128xf32, #tpu.memory_space<vmem>>) attributes {dimension_semantics = [#tpu.dimension_semantics<parallel>, #tpu.dimension_semantics<parallel>, #tpu.dimension_semantics<arbitrary>], iteration_bounds = array<i64: 1, 2, 1>, scalar_prefetch = 0 : i64, scratch_operands = 1 : i64, tpu.core_type = #tpu.core_type<tc>, window_params = [{transform_indices = @transform_0, window_bounds = array<i64: 16, 128>}, {transform_indices = @transform_1, window_bounds = array<i64: 128, 128>}, {transform_indices = @transform_2, window_bounds = array<i64: 1, 128>}, {transform_indices = @transform_3, window_bounds = array<i64: 16, 128>}]} {
    %c0_i32 = arith.constant 0 : i32
    %0 = arith.cmpi eq, %arg2, %c0_i32 : i32
    %1 = arith.extui %0 : i1 to i32
    %c0_i32_0 = arith.constant 0 : i32
    %2 = arith.cmpi ne, %1, %c0_i32_0 : i32
    scf.if %2 {
      %cst_10 = arith.constant 0.000000e+00 : f32
      %12 = vector.broadcast %cst_10 : f32 to vector<16x128xf32>
      %c0_11 = arith.constant 0 : index
      %c0_12 = arith.constant 0 : index
      %13 = vector.load %arg7[%c0_11, %c0_12] : memref<16x128xf32, #tpu.memory_space<vmem>>, vector<16x128xf32>
      tpu.vector_store %arg7[%c0_11, %c0_12], %12 {strides = array<i32>} : memref<16x128xf32, #tpu.memory_space<vmem>>, vector<16x128xf32>,
    } else {
    }
    %c0 = arith.constant 0 : index
    %c0_1 = arith.constant 0 : index
    %3 = vector.load %arg7[%c0, %c0_1] : memref<16x128xf32, #tpu.memory_space<vmem>>, vector<16x128xf32>
    %c0_2 = arith.constant 0 : index
    %c0_3 = arith.constant 0 : index
    %4 = vector.load %arg3[%c0_2, %c0_3] : memref<16x128xbf16, #tpu.memory_space<vmem>>, vector<16x128xbf16>
    %c0_4 = arith.constant 0 : index
    %c0_5 = arith.constant 0 : index
    %5 = vector.load %arg4[%c0_4, %c0_5] : memref<128x128xbf16, #tpu.memory_space<vmem>>, vector<128x128xbf16>
    %cst = arith.constant dense<0.000000e+00> : vector<16x128xf32>
    %6 = tpu.matmul %4, %5, %cst {dimension_numbers = #tpu.dot_dimension_numbers<[1], [0], [0], [1], [0, 0, 1, 1], [], []>} : vector<16x128xbf16>, vector<128x128xbf16>, vector<16x128xf32> -> vector<16x128xf32>
    %7 = arith.addf %3, %6 : vector<16x128xf32>
    %c0_6 = arith.constant 0 : index
    %c0_7 = arith.constant 0 : index
    %8 = vector.load %arg7[%c0_6, %c0_7] : memref<16x128xf32, #tpu.memory_space<vmem>>, vector<16x128xf32>
    tpu.vector_store %arg7[%c0_6, %c0_7], %7 {strides = array<i32>} : memref<16x128xf32, #tpu.memory_space<vmem>>, vector<16x128xf32>,
    %c0_i32_8 = arith.constant 0 : i32
    %9 = arith.cmpi eq, %arg2, %c0_i32_8 : i32
    %10 = arith.extui %9 : i1 to i32
    %c0_i32_9 = arith.constant 0 : i32
    %11 = arith.cmpi ne, %10, %c0_i32_9 : i32
    scf.if %11 {
      %c0_10 = arith.constant 0 : index
      %c0_11 = arith.constant 0 : index
      %12 = vector.load %arg7[%c0_10, %c0_11] : memref<16x128xf32, #tpu.memory_space<vmem>>, vector<16x128xf32>
      %c0_12 = arith.constant 0 : index
      %c0_13 = arith.constant 0 : index
      %13 = vector.load %arg5[%c0_12, %c0_13] : memref<1x128xf32, #tpu.memory_space<vmem>>, vector<1x128xf32>
      %14 = vector.broadcast %13 : vector<1x128xf32> to vector<16x128xf32>
      %15 = arith.addf %12, %14 : vector<16x128xf32>
      %c0_14 = arith.constant 0 : index
      %c0_15 = arith.constant 0 : index
      %16 = vector.load %arg6[%c0_14, %c0_15] : memref<16x128xf32, #tpu.memory_space<vmem>>, vector<16x128xf32>
      tpu.vector_store %arg6[%c0_14, %c0_15], %15 {strides = array<i32>} : memref<16x128xf32, #tpu.memory_space<vmem>>, vector<16x128xf32>,
    } else {
    }
    return
  }
  func.func @transform_0(%arg0: i32, %arg1: i32, %arg2: i32) -> (i32, i32) {
    %c0_i32 = arith.constant 0 : i32
    return %arg0, %arg2 : i32, i32
  }
  func.func @transform_1(%arg0: i32, %arg1: i32, %arg2: i32) -> (i32, i32) {
    %c0_i32 = arith.constant 0 : i32
    return %arg2, %arg1 : i32, i32
  }
  func.func @transform_2(%arg0: i32, %arg1: i32, %arg2: i32) -> (i32, i32) {
    %c0_i32 = arith.constant 0 : i32
    %c0_i32_0 = arith.constant 0 : i32
    return %c0_i32, %arg1 : i32, i32
  }
  func.func @transform_3(%arg0: i32, %arg1: i32, %arg2: i32) -> (i32, i32) {
    %c0_i32 = arith.constant 0 : i32
    return %arg0, %arg1 : i32, i32
  }
}

</mosaic_0001>

<llo_original>
// kernel: net_forward.8
$region0: #{net_forward.8}
  #allocation0 [shape = 'u32[]', space=smem, size = 0x4, offset = 0x4, fixed_abs, tag = 'smem constant byte address 0x4 - core index']
  #allocation1 [shape = 'u32[144,128]{1,0:T(1,128)}', space=vmem, size = 0x12000, scoped, tag = 'internal scratch']
  #allocation2 [shape = 'f32[128,128]{1,0:T(8,128)}', space=vmem, size = 0x10000, scoped, tag = 'scratch operand']
  %s0 = inlined_call_operand.vmem [shape: bf16[7296,128], index: 0, kind: input, shape index: {}]
  %s1 = inlined_call_operand.vmem [shape: bf16[128,128], index: 1, kind: input, shape index: {}]
  %s2 = inlined_call_operand.vmem [shape: f32[1,128], index: 2, kind: input, shape index: {}]
  %s3 = inlined_call_operand.vmem [shape: f32[7296,128], index: 3, kind: output, shape index: {}]
  %s4 = sld [smem:[#allocation0]]
  $region53: #{net_forward.8} parent=0
    _
  %s6 = ssub.s32 1, %s4
  %s7 = scalar_select 0, %s6, %s4
  loop: start=0, step=1, limit=59
  $region2: #{net_forward.8} parent=0 // loop_pre_header
    _
  $region3: #{net_forward.8} parent=0 // loop_header
    %s9 = sphi 0, %s13
    %p10 = scmp.ge.s32.totalorder %s9, 59
    %s16 = sphi 0, %s35
    %s17 = sphi 0, %s31
    %s18 = sphi 0, %s27
    %s19 = sphi 0, %s16
    %s20 = sphi 0, %s17
    %s21 = sphi 0, %s18
    %s22 = sphi 0, %s19
    %s23 = sphi 0, %s20
    %s24 = sphi 0, %s21
    %s40 = sphi 0, %s42
    %s43 = sphi 0, %s40
    %s44 = sphi 0, %s43
    %s60 = sphi 0, %s44
    %s68 = sphi 0, %s70
    %s71 = sphi 0, %s68
    %s72 = sphi 0, %s71
    %s88 = sphi 0, %s72
    %s94 = sphi 0, %s96
    %s97 = sphi 0, %s94
    %s98 = sphi 0, %s97
    %s114 = sphi 0, %s98
    %s122 = sphi 0, %s124
    %s125 = sphi 0, %s122
    %s126 = sphi 0, %s125
    %s142 = sphi 0, %s126
  $region4: #{net_forward.8} parent=0 // loop_header_branch
    %12 = sbr.rel (%p10) target = $region8
  $region5: #{net_forward.8} parent=0 // loop_body
    %s14 = ssub.s32 %s9, 1
    %s15 = ssub.s32 %s9, 2
    %s25 = sadd.s32 1, %s18
    %p26 = scmp.ge.s32.totalorder %s25, 1
    %s27 = scalar_select %p26, 0, %s25
    %s28 = sadd.s32 1, %s17
    %s29 = scalar_select %p26, %s28, %s17
    %p30 = scmp.ge.s32.totalorder %s29, 1
    %s31 = scalar_select %p30, 0, %s29
    %s32 = sadd.s32 1, %s16
    %s33 = scalar_select %p30, %s32, %s16
    %p34 = scmp.ge.s32.totalorder %s33, 57
    %s35 = scalar_select %p34, 0, %s33
    %s36 = ssub.s32 %s16, %s35
    %s37 = ssub.s32 %s18, %s27
    %s38 = sor.u32 %s36, %s37
    %p39 = scmp.eq.s32.totalorder %s38, 0
    %s41 = sadd.s32 %s40, 1
    %s42 = scalar_select %p39, %s40, %s41
    %p45 = pneg %p39
    %p46 = scmp.eq.s32.totalorder %s9, 56
    %p47 = por %p45, %p46
    %p48 = scmp.ne.s32.totalorder %s40, %s43
    %p49 = scmp.eq.s32.totalorder %s9, 0
    %p50 = por %p48, %p49
    %p51 = scmp.ne.s32.totalorder %s40, %s43
    %p52 = scmp.eq.s32.totalorder %s14, 56
    %p53 = por %p51, %p52
    %p54 = scmp.ne.s32.totalorder %s43, %s44
    %p55 = scmp.eq.s32.totalorder %s14, 0
    %p56 = por %p54, %p55
    %p57 = scmp.ne.s32.totalorder %s43, %s44
    %p58 = scmp.eq.s32.totalorder %s15, 56
    %p59 = por %p57, %p58
    %p61 = scmp.ne.s32.totalorder %s44, %s60
    %p62 = scmp.eq.s32.totalorder %s15, 0
    %p63 = por %p61, %p62
    %s64 = ssub.s32 %s18, %s27
    %s65 = ssub.s32 %s17, %s31
    %s66 = sor.u32 %s64, %s65
    %p67 = scmp.eq.s32.totalorder %s66, 0
    %s69 = sadd.s32 %s68, 1
    %s70 = scalar_select %p67, %s68, %s69
    %p73 = pneg %p67
    %p74 = scmp.eq.s32.totalorder %s9, 56
    %p75 = por %p73, %p74
    %p76 = scmp.ne.s32.totalorder %s68, %s71
    %p77 = scmp.eq.s32.totalorder %s9, 0
    %p78 = por %p76, %p77
    %p79 = scmp.ne.s32.totalorder %s68, %s71
    %p80 = scmp.eq.s32.totalorder %s14, 56
    %p81 = por %p79, %p80
    %p82 = scmp.ne.s32.totalorder %s71, %s72
    %p83 = scmp.eq.s32.totalorder %s14, 0
    %p84 = por %p82, %p83
    %p85 = scmp.ne.s32.totalorder %s71, %s72
    %p86 = scmp.eq.s32.totalorder %s15, 56
    %p87 = por %p85, %p86
    %p89 = scmp.ne.s32.totalorder %s72, %s88
    %p90 = scmp.eq.s32.totalorder %s15, 0
    %p91 = por %p89, %p90
    %s92 = ssub.s32 %s17, %s31
    %p93 = scmp.eq.s32.totalorder %s92, 0
    %s95 = sadd.s32 %s94, 1
    %s96 = scalar_select %p93, %s94, %s95
    %p99 = pneg %p93
    %p100 = scmp.eq.s32.totalorder %s9, 56
    %p101 = por %p99, %p100
    %p102 = scmp.ne.s32.totalorder %s94, %s97
    %p103 = scmp.eq.s32.totalorder %s9, 0
    %p104 = por %p102, %p103
    %p105 = scmp.ne.s32.totalorder %s94, %s97
    %p106 = scmp.eq.s32.totalorder %s14, 56
    %p107 = por %p105, %p106
    %p108 = scmp.ne.s32.totalorder %s97, %s98
    %p109 = scmp.eq.s32.totalorder %s14, 0
    %p110 = por %p108, %p109
    %p111 = scmp.ne.s32.totalorder %s97, %s98
    %p112 = scmp.eq.s32.totalorder %s15, 56
    %p113 = por %p111, %p112
    %p115 = scmp.ne.s32.totalorder %s98, %s114
    %p116 = scmp.eq.s32.totalorder %s15, 0
    %p117 = por %p115, %p116
    %s118 = ssub.s32 %s16, %s35
    %s119 = ssub.s32 %s17, %s31
    %s120 = sor.u32 %s118, %s119
    %p121 = scmp.eq.s32.totalorder %s120, 0
    %s123 = sadd.s32 %s122, 1
    %s124 = scalar_select %p121, %s122, %s123
    %p127 = pneg %p121
    %p128 = scmp.eq.s32.totalorder %s9, 56
    %p129 = por %p127, %p128
    %p130 = scmp.ne.s32.totalorder %s122, %s125
    %p131 = scmp.eq.s32.totalorder %s9, 0
    %p132 = por %p130, %p131
    %p133 = scmp.ne.s32.totalorder %s122, %s125
    %p134 = scmp.eq.s32.totalorder %s14, 56
    %p135 = por %p133, %p134
    %p136 = scmp.ne.s32.totalorder %s125, %s126
    %p137 = scmp.eq.s32.totalorder %s14, 0
    %p138 = por %p136, %p137
    %p139 = scmp.ne.s32.totalorder %s125, %s126
    %p140 = scmp.eq.s32.totalorder %s15, 56
    %p141 = por %p139, %p140
    %p143 = scmp.ne.s32.totalorder %s126, %s142
    %p144 = scmp.eq.s32.totalorder %s15, 0
    %p145 = por %p143, %p144
    %p146 = scmp.le.s32.totalorder 1, %s9
    %p147 = scmp.lt.s32.totalorder %s9, 58
    %p148 = pnand %p146, %p147
    %p149 = pneg %p148
    // Predicated region
    $region9: #{net_forward.8} parent=5 // pred_check
      _
    $region10: #{net_forward.8} parent=5 // pred_check_branch
      %151 = sbr.rel (%p148) target = $region12
    $region11: #{net_forward.8} parent=5 // pred_region
      %s152 = ssub.s32 %s9, 1
      // Predicated region
      $region13: #{net_forward.8} parent=11 // pred_check
        %p153 = pneg %p84
      $region14: #{net_forward.8} parent=11 // pred_check_branch
        %155 = sbr.rel (%p153) target = $region16
      $region15: #{net_forward.8} parent=11 // pred_region
        %s156 = smul.u32 16, %s21
        %p157 = scmp.lt.s32.totalorder %s156, 15
        %s158 = scalar_select %p157, %s156, 15
        %p159 = scmp.lt.s32.totalorder %s20, 0
        %s160 = scalar_select %p159, %s20, 0
        %s161 = sadd.s32 %s160, %s158
        %s162 = smul.addr %s161, 4
        %s163 = scalar_lea.vmem %s1, %s162
        %s164 = smul.u32 16, %s21
      $region16: #{net_forward.8} parent=11 // pred_fallthru
        _
      // Predicated region
      $region17: #{net_forward.8} parent=11 // pred_check
        %p165 = pneg %p110
      $region18: #{net_forward.8} parent=11 // pred_check_branch
        %167 = sbr.rel (%p165) target = $region20
      $region19: #{net_forward.8} parent=11 // pred_region
        %p168 = scmp.lt.s32.totalorder %s20, 0
        %s169 = scalar_select %p168, %s20, 0
        %s170 = scalar_lea.vmem %s2, %s169
      $region20: #{net_forward.8} parent=11 // pred_fallthru
        _
    $region12: #{net_forward.8} parent=5 // pred_fallthru
      _
    %p171 = scmp.lt.s32.totalorder %s9, 57
    // Predicated region
    $region21: #{net_forward.8} parent=5 // pred_check
      %p172 = pneg %p171
    $region22: #{net_forward.8} parent=5 // pred_check_branch
      %174 = sbr.rel (%p172) target = $region24
    $region23: #{net_forward.8} parent=5 // pred_region
      // Predicated region
      $region25: #{net_forward.8} parent=23 // pred_check
        %p175 = pneg %p50
      $region26: #{net_forward.8} parent=23 // pred_check_branch
        %177 = sbr.rel (%p175) target = $region28
      $region27: #{net_forward.8} parent=23 // pred_region
        %s178 = smul.u32 16, %s16
        %p179 = scmp.lt.s32.totalorder %s178, 911
        %s180 = scalar_select %p179, %s178, 911
        %p181 = scmp.lt.s32.totalorder %s18, 0
        %s182 = scalar_select %p181, %s18, 0
        %s183 = sadd.s32 %s182, %s180
        %s184 = smul.addr %s183, 4
        %s185 = scalar_lea.vmem %s0, %s184
        %s186 = smul.u32 16, %s16
      $region28: #{net_forward.8} parent=23 // pred_fallthru
        _
    $region24: #{net_forward.8} parent=5 // pred_fallthru
      _
    %p187 = scmp.le.s32.totalorder 1, %s9
    %p188 = scmp.lt.s32.totalorder %s9, 58
    %p189 = pnand %p187, %p188
    %p190 = pneg %p189
    // Predicated region
    $region29: #{net_forward.8} parent=5 // pred_check
      _
    $region30: #{net_forward.8} parent=5 // pred_check_branch
      %192 = sbr.rel (%p189) target = $region32
    $region31: #{net_forward.8} parent=5 // pred_region
      %s193 = ssub.s32 %s9, 1
      %s194 = smul.u32 16, %s19
      %p195 = scmp.lt.s32.totalorder %s194, 911
      %s196 = scalar_select %p195, %s194, 911
      %p197 = scmp.lt.s32.totalorder %s21, 0
      %s198 = scalar_select %p197, %s21, 0
      %s199 = sadd.s32 %s198, %s196
      %s200 = smul.addr %s199, 4
      %s201 = scalar_lea.vmem %s0, %s200
      %p202 = pneg %p56
      %p203 = pneg %p53
      %s204 = smul.u32 16, %s21
      %p205 = scmp.lt.s32.totalorder %s204, 15
      %s206 = scalar_select %p205, %s204, 15
      %p207 = scmp.lt.s32.totalorder %s20, 0
      %s208 = scalar_select %p207, %s20, 0
      %s209 = sadd.s32 %s208, %s206
      %s210 = smul.addr %s209, 4
      %s211 = scalar_lea.vmem %s1, %s210
      %p212 = pneg %p84
      %p213 = pneg %p81
      %p214 = scmp.lt.s32.totalorder %s20, 0
      %s215 = scalar_select %p214, %s20, 0
      %s216 = scalar_lea.vmem %s2, %s215
      %p217 = pneg %p110
      %p218 = pneg %p107
      %p219 = pneg %p138
      %p220 = pneg %p135
      %s221 = smul.u32 16, %s19
      %p222 = scmp.lt.s32.totalorder %s221, 911
      %s223 = scalar_select %p222, %s221, 911
      %p224 = scmp.lt.s32.totalorder %s20, 0
      %s225 = scalar_select %p224, %s20, 0
      %s226 = sadd.s32 %s225, %s223
      %s227 = smul.addr %s226, 8
      %s228 = scalar_lea.vmem %s3, %s227
      %s229 = smul.u32 16, %s19
      %p230 = scmp.lt.s32.totalorder %s229, 911
      %s231 = scalar_select %p230, %s229, 911
      %p232 = scmp.lt.s32.totalorder %s21, 0
      %s233 = scalar_select %p232, %s21, 0
      %s234 = sadd.s32 %s233, %s231
      %s235 = smul.addr %s234, 4
      %s236 = scalar_lea.vmem %s0, %s235
      %s237 = smul.u32 16, %s19
      %s238 = smul.u32 16, %s21
      %p239 = scmp.lt.s32.totalorder %s238, 15
      %s240 = scalar_select %p239, %s238, 15
      %p241 = scmp.lt.s32.totalorder %s20, 0
      %s242 = scalar_select %p241, %s20, 0
      %s243 = sadd.s32 %s242, %s240
      %s244 = smul.addr %s243, 4
      %s245 = scalar_lea.vmem %s1, %s244
      %s246 = smul.u32 16, %s21
      %p247 = scmp.lt.s32.totalorder %s20, 0
      %s248 = scalar_select %p247, %s20, 0
      %s249 = scalar_lea.vmem %s2, %s248
      %s250 = smul.u32 16, %s19
      %p251 = scmp.lt.s32.totalorder %s250, 911
      %s252 = scalar_select %p251, %s250, 911
      %p253 = scmp.lt.s32.totalorder %s20, 0
      %s254 = scalar_select %p253, %s20, 0
      %s255 = sadd.s32 %s254, %s252
      %s256 = smul.addr %s255, 8
      %s257 = scalar_lea.vmem %s3, %s256
      %s258 = smul.u32 16, %s19
      %p260 = scmp.eq.s32.totalorder %s21, 0
      // Predicated region
      $region33: #{net_forward.8} parent=31 // pred_check
        %p261 = pneg %p260
      $region34: #{net_forward.8} parent=31 // pred_check_branch
        %263 = sbr.rel (%p261) target = $region36
      $region35: #{net_forward.8} parent=31 // pred_region
        %264 = vst [vmem:[#allocation2] sm:$0xff] 0.0
        %265 = vst [vmem:[#allocation2 + $0x8] sm:$0xff] 0.0
        %266 = vst [vmem:[#allocation2 + $0x10] sm:$0xff] 0.0
        %267 = vst [vmem:[#allocation2 + $0x18] sm:$0xff] 0.0
        %268 = vst [vmem:[#allocation2 + $0x20] sm:$0xff] 0.0
        %269 = vst [vmem:[#allocation2 + $0x28] sm:$0xff] 0.0
        %270 = vst [vmem:[#allocation2 + $0x30] sm:$0xff] 0.0
        %271 = vst [vmem:[#allocation2 + $0x38] sm:$0xff] 0.0
        %272 = vst [vmem:[#allocation2 + $0x40] sm:$0xff] 0.0
        %273 = vst [vmem:[#allocation2 + $0x48] sm:$0xff] 0.0
        %274 = vst [vmem:[#allocation2 + $0x50] sm:$0xff] 0.0
        %275 = vst [vmem:[#allocation2 + $0x58] sm:$0xff] 0.0
        %276 = vst [vmem:[#allocation2 + $0x60] sm:$0xff] 0.0
        %277 = vst [vmem:[#allocation2 + $0x68] sm:$0xff] 0.0
        %278 = vst [vmem:[#allocation2 + $0x70] sm:$0xff] 0.0
        %279 = vst [vmem:[#allocation2 + $0x78] sm:$0xff] 0.0
      $region36: #{net_forward.8} parent=31 // pred_fallthru
        _
      %v280 = vld [vmem:[#allocation2] sm:$0xff]
      %v281 = vld [vmem:[#allocation2 + $0x8] sm:$0xff]
      %v282 = vld [vmem:[#allocation2 + $0x10] sm:$0xff]
      %v283 = vld [vmem:[#allocation2 + $0x18] sm:$0xff]
      %v284 = vld [vmem:[#allocation2 + $0x20] sm:$0xff]
      %v285 = vld [vmem:[#allocation2 + $0x28] sm:$0xff]
      %v286 = vld [vmem:[#allocation2 + $0x30] sm:$0xff]
      %v287 = vld [vmem:[#allocation2 + $0x38] sm:$0xff]
      %v288 = vld [vmem:[#allocation2 + $0x40] sm:$0xff]
      %v289 = vld [vmem:[#allocation2 + $0x48] sm:$0xff]
      %v290 = vld [vmem:[#allocation2 + $0x50] sm:$0xff]
      %v291 = vld [vmem:[#allocation2 + $0x58] sm:$0xff]
      %v292 = vld [vmem:[#allocation2 + $0x60] sm:$0xff]
      %v293 = vld [vmem:[#allocation2 + $0x68] sm:$0xff]
      %v294 = vld [vmem:[#allocation2 + $0x70] sm:$0xff]
      %v295 = vld [vmem:[#allocation2 + $0x78] sm:$0xff]
      %v296 = vld [vmem:[%s236] sm:$0xf]
      %v297 = vld [vmem:[%s236 + $0x4] sm:$0xf]
      %v298 = vld [vmem:[%s236 + $0x8] sm:$0xf]
      %v299 = vld [vmem:[%s236 + $0xc] sm:$0xf]
      %v300 = vld [vmem:[%s236 + $0x10] sm:$0xf]
      %v301 = vld [vmem:[%s236 + $0x14] sm:$0xf]
      %v302 = vld [vmem:[%s236 + $0x18] sm:$0xf]
      %v303 = vld [vmem:[%s236 + $0x1c] sm:$0xf]
      %v304 = vld [vmem:[%s236 + $0x20] sm:$0xf]
      %v305 = vld [vmem:[%s236 + $0x24] sm:$0xf]
      %v306 = vld [vmem:[%s236 + $0x28] sm:$0xf]
      %v307 = vld [vmem:[%s236 + $0x2c] sm:$0xf]
      %v308 = vld [vmem:[%s236 + $0x30] sm:$0xf]
      %v309 = vld [vmem:[%s236 + $0x34] sm:$0xf]
      %v310 = vld [vmem:[%s236 + $0x38] sm:$0xf]
      %v311 = vld [vmem:[%s236 + $0x3c] sm:$0xf]
      %v312 = vld [vmem:[%s245] sm:$0xf]
      %v313 = vld [vmem:[%s245 + $0x4] sm:$0xf]
      %v314 = vld [vmem:[%s245 + $0x8] sm:$0xf]
      %v315 = vld [vmem:[%s245 + $0xc] sm:$0xf]
      %v316 = vld [vmem:[%s245 + $0x10] sm:$0xf]
      %v317 = vld [vmem:[%s245 + $0x14] sm:$0xf]
      %v318 = vld [vmem:[%s245 + $0x18] sm:$0xf]
      %v319 = vld [vmem:[%s245 + $0x1c] sm:$0xf]
      %v320 = vld [vmem:[%s245 + $0x20] sm:$0xf]
      %v321 = vld [vmem:[%s245 + $0x24] sm:$0xf]
      %v322 = vld [vmem:[%s245 + $0x28] sm:$0xf]
      %v323 = vld [vmem:[%s245 + $0x2c] sm:$0xf]
      %v324 = vld [vmem:[%s245 + $0x30] sm:$0xf]
      %v325 = vld [vmem:[%s245 + $0x34] sm:$0xf]
      %v326 = vld [vmem:[%s245 + $0x38] sm:$0xf]
      %v327 = vld [vmem:[%s245 + $0x3c] sm:$0xf]
      %v344 = vunpack.c.l.b16 %v296
      %v345 = vunpack.c.l.b16 %v297
      %v346 = vunpack.c.l.b16 %v298
      %v347 = vunpack.c.l.b16 %v299
      %v348 = vunpack.c.l.b16 %v300
      %v349 = vunpack.c.l.b16 %v301
      %v350 = vunpack.c.l.b16 %v302
      %v351 = vunpack.c.l.b16 %v303
      %v352 = vunpack.c.l.b16 %v304
      %v353 = vunpack.c.l.b16 %v305
      %v354 = vunpack.c.l.b16 %v306
      %v355 = vunpack.c.l.b16 %v307
      %v356 = vunpack.c.l.b16 %v308
      %v357 = vunpack.c.l.b16 %v309
      %v358 = vunpack.c.l.b16 %v310
      %v359 = vunpack.c.l.b16 %v311
      %v360 = vpack.c.b16 %v345, %v344
      %v361 = vpack.c.b16 %v347, %v346
      %v362 = vpack.c.b16 %v349, %v348
      %v363 = vpack.c.b16 %v351, %v350
      %v364 = vpack.c.b16 %v353, %v352
      %v365 = vpack.c.b16 %v355, %v354
      %v366 = vpack.c.b16 %v357, %v356
      %v367 = vpack.c.b16 %v359, %v358
      %v392 = vunpack.c.l.b16 %v312
      %v393 = vunpack.c.l.b16 %v313
      %v394 = vunpack.c.l.b16 %v314
      %v395 = vunpack.c.l.b16 %v315
      %v396 = vunpack.c.l.b16 %v316
      %v397 = vunpack.c.l.b16 %v317
      %v398 = vunpack.c.l.b16 %v318
      %v399 = vunpack.c.l.b16 %v319
      %v400 = vunpack.c.l.b16 %v320
      %v401 = vunpack.c.l.b16 %v321
      %v402 = vunpack.c.l.b16 %v322
      %v403 = vunpack.c.l.b16 %v323
      %v404 = vunpack.c.l.b16 %v324
      %v405 = vunpack.c.l.b16 %v325
      %v406 = vunpack.c.l.b16 %v326
      %v407 = vunpack.c.l.b16 %v327
      %v408 = vpack.c.b16 %v393, %v392
      %v409 = vpack.c.b16 %v395, %v394
      %v410 = vpack.c.b16 %v397, %v396
      %v411 = vpack.c.b16 %v399, %v398
      %v412 = vpack.c.b16 %v401, %v400
      %v413 = vpack.c.b16 %v403, %v402
      %v414 = vpack.c.b16 %v405, %v404
      %v415 = vpack.c.b16 %v407, %v406
      %424 = vmatprep.subr.bf16.mxu0 0
      %425 = vmatpush1.bf16.msra.mxu0 %v408
      %426 = vmatprep.subr.bf16.mxu0 0
      %427 = vmatpush1.bf16.msra.mxu0 %v409
      %428 = vmatprep.subr.bf16.mxu0 0
      %429 = vmatpush1.bf16.msra.mxu0 %v410
      %430 = vmatprep.subr.bf16.mxu0 0
      %431 = vmatpush1.bf16.msra.mxu0 %v411
      %432 = vmatprep.subr.bf16.mxu0 0
      %433 = vmatpush1.bf16.msra.mxu0 %v412
      %434 = vmatprep.subr.bf16.mxu0 0
      %435 = vmatpush1.bf16.msra.mxu0 %v413
      %436 = vmatprep.subr.bf16.mxu0 0
      %437 = vmatpush1.bf16.msra.mxu0 %v414
      %438 = vmatprep.subr.bf16.mxu0 0
      %439 = vmatpush1.bf16.msra.mxu0 %v415
      %440 = vmatprep.subr.bf16.mxu0 0
      %441 = vmatpush1.bf16.msra.mxu0 0
      %442 = vmatprep.subr.bf16.mxu0 0
      %443 = vmatpush1.bf16.msra.mxu0 0
      %444 = vmatprep.subr.bf16.mxu0 0
      %445 = vmatpush1.bf16.msra.mxu0 0
      %446 = vmatprep.subr.bf16.mxu0 0
      %447 = vmatpush1.bf16.msra.mxu0 0
      %448 = vmatprep.subr.bf16.mxu0 0
      %449 = vmatpush1.bf16.msra.mxu0 0
      %450 = vmatprep.subr.bf16.mxu0 0
      %451 = vmatpush1.bf16.msra.mxu0 0
      %452 = vmatprep.subr.bf16.mxu0 0
      %453 = vmatpush1.bf16.msra.mxu0 0
      %454 = vmatprep.subr.bf16.mxu0 0
      %455 = vmatpush1.bf16.msra.mxu0 0
      %456 = vmatprep.mubr.bf16.mxu0 0
      %457 = vmatmul.mubr.bf16.gmra.mrb[0].mxu0 %v360
      %v458 = vpop.f32.mrb[0].mxu0
      %v459 = vadd.f32 0.0, %v458
      %v460 = vpop.f32.mrb[0].mxu0
      %v461 = vpop.f32.mrb[0].mxu0
      %v462 = vadd.f32 0.0, %v461
      %v463 = vpop.f32.mrb[0].mxu0
      %464 = vmatprep.mubr.bf16.mxu0 0
      %465 = vmatmul.mubr.bf16.gmra.mrb[0].mxu0 %v361
      %v466 = vpop.f32.mrb[0].mxu0
      %v467 = vadd.f32 0.0, %v466
      %v468 = vpop.f32.mrb[0].mxu0
      %v469 = vpop.f32.mrb[0].mxu0
      %v470 = vadd.f32 0.0, %v469
      %v471 = vpop.f32.mrb[0].mxu0
      %472 = vmatprep.mubr.bf16.mxu0 0
      %473 = vmatmul.mubr.bf16.gmra.mrb[0].mxu0 %v362
      %v474 = vpop.f32.mrb[0].mxu0
      %v475 = vadd.f32 0.0, %v474
      %v476 = vpop.f32.mrb[0].mxu0
      %v477 = vpop.f32.mrb[0].mxu0
      %v478 = vadd.f32 0.0, %v477
      %v479 = vpop.f32.mrb[0].mxu0
      %480 = vmatprep.mubr.bf16.mxu0 0
      %481 = vmatmul.mubr.bf16.gmra.mrb[0].mxu0 %v363
      %v482 = vpop.f32.mrb[0].mxu0
      %v483 = vadd.f32 0.0, %v482
      %v484 = vpop.f32.mrb[0].mxu0
      %v485 = vpop.f32.mrb[0].mxu0
      %v486 = vadd.f32 0.0, %v485
      %v487 = vpop.f32.mrb[0].mxu0
      %488 = vmatprep.mubr.bf16.mxu0 0
      %489 = vmatmul.mubr.bf16.gmra.mrb[0].mxu0 %v364
      %v490 = vpop.f32.mrb[0].mxu0
      %v491 = vadd.f32 0.0, %v490
      %v492 = vpop.f32.mrb[0].mxu0
      %v493 = vpop.f32.mrb[0].mxu0
      %v494 = vadd.f32 0.0, %v493
      %v495 = vpop.f32.mrb[0].mxu0
      %496 = vmatprep.mubr.bf16.mxu0 0
      %497 = vmatmul.mubr.bf16.gmra.mrb[0].mxu0 %v365
      %v498 = vpop.f32.mrb[0].mxu0
      %v499 = vadd.f32 0.0, %v498
      %v500 = vpop.f32.mrb[0].mxu0
      %v501 = vpop.f32.mrb[0].mxu0
      %v502 = vadd.f32 0.0, %v501
      %v503 = vpop.f32.mrb[0].mxu0
      %504 = vmatprep.mubr.bf16.mxu0 0
      %505 = vmatmul.mubr.bf16.gmra.mrb[0].mxu0 %v366
      %v506 = vpop.f32.mrb[0].mxu0
      %v507 = vadd.f32 0.0, %v506
      %v508 = vpop.f32.mrb[0].mxu0
      %v509 = vpop.f32.mrb[0].mxu0
      %v510 = vadd.f32 0.0, %v509
      %v511 = vpop.f32.mrb[0].mxu0
      %512 = vmatprep.mubr.bf16.mxu0 0
      %513 = vmatmul.mubr.bf16.gmra.mrb[0].mxu0 %v367
      %v514 = vpop.f32.mrb[0].mxu0
      %v515 = vadd.f32 0.0, %v514
      %v516 = vpop.f32.mrb[0].mxu0
      %v517 = vpop.f32.mrb[0].mxu0
      %v518 = vadd.f32 0.0, %v517
      %v519 = vpop.f32.mrb[0].mxu0
      %520 = vdwg.mxu0
      %v521 = vadd.f32 %v280, %v459
      %v522 = vadd.f32 %v281, %v462
      %v523 = vadd.f32 %v282, %v467
      %v524 = vadd.f32 %v283, %v470
      %v525 = vadd.f32 %v284, %v475
      %v526 = vadd.f32 %v285, %v478
      %v527 = vadd.f32 %v286, %v483
      %v528 = vadd.f32 %v287, %v486
      %v529 = vadd.f32 %v288, %v491
      %v530 = vadd.f32 %v289, %v494
      %v531 = vadd.f32 %v290, %v499
      %v532 = vadd.f32 %v291, %v502
      %v533 = vadd.f32 %v292, %v507
      %v534 = vadd.f32 %v293, %v510
      %v535 = vadd.f32 %v294, %v515
      %v536 = vadd.f32 %v295, %v518
      %537 = vst [vmem:[#allocation2] sm:$0xff] %v521
      %538 = vst [vmem:[#allocation2 + $0x8] sm:$0xff] %v522
      %539 = vst [vmem:[#allocation2 + $0x10] sm:$0xff] %v523
      %540 = vst [vmem:[#allocation2 + $0x18] sm:$0xff] %v524
      %541 = vst [vmem:[#allocation2 + $0x20] sm:$0xff] %v525
      %542 = vst [vmem:[#allocation2 + $0x28] sm:$0xff] %v526
      %543 = vst [vmem:[#allocation2 + $0x30] sm:$0xff] %v527
      %544 = vst [vmem:[#allocation2 + $0x38] sm:$0xff] %v528
      %545 = vst [vmem:[#allocation2 + $0x40] sm:$0xff] %v529
      %546 = vst [vmem:[#allocation2 + $0x48] sm:$0xff] %v530
      %547 = vst [vmem:[#allocation2 + $0x50] sm:$0xff] %v531
      %548 = vst [vmem:[#allocation2 + $0x58] sm:$0xff] %v532
      %549 = vst [vmem:[#allocation2 + $0x60] sm:$0xff] %v533
      %550 = vst [vmem:[#allocation2 + $0x68] sm:$0xff] %v534
      %551 = vst [vmem:[#allocation2 + $0x70] sm:$0xff] %v535
      %552 = vst [vmem:[#allocation2 + $0x78] sm:$0xff] %v536
      // Predicated region
      $region37: #{net_forward.8} parent=31 // pred_check
        %p553 = pneg %p260
      $region38: #{net_forward.8} parent=31 // pred_check_branch
        %555 = sbr.rel (%p553) target = $region40
      $region39: #{net_forward.8} parent=31 // pred_region
        %v556 = vld [vmem:[#allocation2] sm:$0xff]
        %v557 = vld [vmem:[#allocation2 + $0x8] sm:$0xff]
        %v558 = vld [vmem:[#allocation2 + $0x10] sm:$0xff]
        %v559 = vld [vmem:[#allocation2 + $0x18] sm:$0xff]
        %v560 = vld [vmem:[#allocation2 + $0x20] sm:$0xff]
        %v561 = vld [vmem:[#allocation2 + $0x28] sm:$0xff]
        %v562 = vld [vmem:[#allocation2 + $0x30] sm:$0xff]
        %v563 = vld [vmem:[#allocation2 + $0x38] sm:$0xff]
        %v564 = vld [vmem:[#allocation2 + $0x40] sm:$0xff]
        %v565 = vld [vmem:[#allocation2 + $0x48] sm:$0xff]
        %v566 = vld [vmem:[#allocation2 + $0x50] sm:$0xff]
        %v567 = vld [vmem:[#allocation2 + $0x58] sm:$0xff]
        %v568 = vld [vmem:[#allocation2 + $0x60] sm:$0xff]
        %v569 = vld [vmem:[#allocation2 + $0x68] sm:$0xff]
        %v570 = vld [vmem:[#allocation2 + $0x70] sm:$0xff]
        %v571 = vld [vmem:[#allocation2 + $0x78] sm:$0xff]
        %v572 = vld [vmem:[%s249] sm:$0x1]
        %v574 = vlaneseq
        %v575 = vshrl.u32 %v574, 7
        %v576 = vsub.s32 0, %v575
        %v577 = vrot.slane %v572, %v576
        %v579 = vadd.f32 %v556, %v577
        %v580 = vadd.f32 %v557, %v577
        %v581 = vadd.f32 %v558, %v577
        %v582 = vadd.f32 %v559, %v577
        %v583 = vadd.f32 %v560, %v577
        %v584 = vadd.f32 %v561, %v577
        %v585 = vadd.f32 %v562, %v577
        %v586 = vadd.f32 %v563, %v577
        %v587 = vadd.f32 %v564, %v577
        %v588 = vadd.f32 %v565, %v577
        %v589 = vadd.f32 %v566, %v577
        %v590 = vadd.f32 %v567, %v577
        %v591 = vadd.f32 %v568, %v577
        %v592 = vadd.f32 %v569, %v577
        %v593 = vadd.f32 %v570, %v577
        %v594 = vadd.f32 %v571, %v577
        %595 = vst [vmem:[%s257] sm:$0xff] %v579
        %596 = vst [vmem:[%s257 + $0x8] sm:$0xff] %v580
        %597 = vst [vmem:[%s257 + $0x10] sm:$0xff] %v581
        %598 = vst [vmem:[%s257 + $0x18] sm:$0xff] %v582
        %599 = vst [vmem:[%s257 + $0x20] sm:$0xff] %v583
        %600 = vst [vmem:[%s257 + $0x28] sm:$0xff] %v584
        %601 = vst [vmem:[%s257 + $0x30] sm:$0xff] %v585
        %602 = vst [vmem:[%s257 + $0x38] sm:$0xff] %v586
        %603 = vst [vmem:[%s257 + $0x40] sm:$0xff] %v587
        %604 = vst [vmem:[%s257 + $0x48] sm:$0xff] %v588
        %605 = vst [vmem:[%s257 + $0x50] sm:$0xff] %v589
        %606 = vst [vmem:[%s257 + $0x58] sm:$0xff] %v590
        %607 = vst [vmem:[%s257 + $0x60] sm:$0xff] %v591
        %608 = vst [vmem:[%s257 + $0x68] sm:$0xff] %v592
        %609 = vst [vmem:[%s257 + $0x70] sm:$0xff] %v593
        %610 = vst [vmem:[%s257 + $0x78] sm:$0xff] %v594
      $region40: #{net_forward.8} parent=31 // pred_fallthru
        _
      %s611 = smul.u32 16, %s19
      %p612 = scmp.lt.s32.totalorder %s611, 911
      %s613 = scalar_select %p612, %s611, 911
      %p614 = scmp.lt.s32.totalorder %s20, 0
      %s615 = scalar_select %p614, %s20, 0
      %s616 = sadd.s32 %s615, %s613
      %s617 = smul.addr %s616, 8
      %s618 = scalar_lea.vmem %s3, %s617
      // Predicated region
      $region41: #{net_forward.8} parent=31 // pred_check
        %p619 = pneg %p135
      $region42: #{net_forward.8} parent=31 // pred_check_branch
        %621 = sbr.rel (%p619) target = $region44
      $region43: #{net_forward.8} parent=31 // pred_region
        %s622 = smul.u32 16, %s19
      $region44: #{net_forward.8} parent=31 // pred_fallthru
        _
    $region32: #{net_forward.8} parent=5 // pred_fallthru
      _
    %p623 = scmp.le.s32.totalorder 2, %s9
    // Predicated region
    $region45: #{net_forward.8} parent=5 // pred_check
      %p624 = pneg %p623
    $region46: #{net_forward.8} parent=5 // pred_check_branch
      %626 = sbr.rel (%p624) target = $region48
    $region47: #{net_forward.8} parent=5 // pred_region
      %s627 = ssub.s32 %s9, 2
      // Predicated region
      $region49: #{net_forward.8} parent=47 // pred_check
        %p628 = pneg %p141
      $region50: #{net_forward.8} parent=47 // pred_check_branch
        %630 = sbr.rel (%p628) target = $region52
      $region51: #{net_forward.8} parent=47 // pred_region
        %s631 = smul.u32 16, %s22
        %p632 = scmp.lt.s32.totalorder %s631, 911
        %s633 = scalar_select %p632, %s631, 911
        %p634 = scmp.lt.s32.totalorder %s23, 0
        %s635 = scalar_select %p634, %s23, 0
        %s636 = sadd.s32 %s635, %s633
        %s637 = smul.addr %s636, 8
        %s638 = scalar_lea.vmem %s3, %s637
      $region52: #{net_forward.8} parent=47 // pred_fallthru
        _
    $region48: #{net_forward.8} parent=5 // pred_fallthru
      _
  $region6: #{net_forward.8} parent=0 // loop_footer
    %s13 = sadd.s32 1, %s9
  $region7: #{net_forward.8} parent=0 // loop_footer_branch
    %8 = sbr.rel target = $region3
  $region8: #{net_forward.8} parent=0 // loop_exit
    _

// kernel: net_forward.9
$region0: #{net_forward.9}
  #allocation0 [shape = 'u32[]', space=smem, size = 0x4, offset = 0x4, fixed_abs, tag = 'smem constant byte address 0x4 - core index']
  #allocation1 [shape = 'u32[144,128]{1,0:T(1,128)}', space=vmem, size = 0x12000, scoped, tag = 'internal scratch']
  %s0 = inlined_call_operand.vmem [shape: f32[1920,10], index: 0, kind: input, shape index: {}]
  %s1 = inlined_call_operand.vmem [shape: f32[1920,10], index: 1, kind: input, shape index: {}]
  %s2 = inlined_call_operand.vmem [shape: f32[1920,10], index: 2, kind: input, shape index: {}]
  %s3 = inlined_call_operand.vmem [shape: f32[1920,10], index: 3, kind: input, shape index: {}]
  %s4 = inlined_call_operand.vmem [shape: f32[1920,10], index: 4, kind: output, shape index: {}]
  %s5 = sld [smem:[#allocation0]]
  $region49: #{net_forward.9} parent=0
    _
  %s7 = ssub.s32 1, %s5
  %s8 = scalar_select 0, %s7, %s5
  loop: start=0, step=1, limit=17
  $region2: #{net_forward.9} parent=0 // loop_pre_header
    _
  $region3: #{net_forward.9} parent=0 // loop_header
    %s10 = sphi 0, %s14
    %p11 = scmp.ge.s32.totalorder %s10, 17
    %s20 = sphi 0, %s22
    %s23 = sphi 0, %s20
    %s24 = sphi 0, %s23
    %s40 = sphi 0, %s24
    %s46 = sphi 0, %s48
    %s49 = sphi 0, %s46
    %s50 = sphi 0, %s49
    %s66 = sphi 0, %s50
    %s72 = sphi 0, %s74
    %s75 = sphi 0, %s72
    %s76 = sphi 0, %s75
    %s92 = sphi 0, %s76
    %s98 = sphi 0, %s100
    %s101 = sphi 0, %s98
    %s102 = sphi 0, %s101
    %s118 = sphi 0, %s102
    %s124 = sphi 0, %s126
    %s127 = sphi 0, %s124
    %s128 = sphi 0, %s127
    %s144 = sphi 0, %s128
  $region4: #{net_forward.9} parent=0 // loop_header_branch
    %13 = sbr.rel (%p11) target = $region8
  $region5: #{net_forward.9} parent=0 // loop_body
    %s15 = ssub.s32 %s10, 1
    %s16 = ssub.s32 %s10, 2
    %s17 = sadd.s32 %s10, 1
    %s18 = ssub.s32 %s10, %s17
    %p19 = scmp.eq.s32.totalorder %s18, 0
    %s21 = sadd.s32 %s20, 1
    %s22 = scalar_select %p19, %s20, %s21
    %p25 = pneg %p19
    %p26 = scmp.eq.s32.totalorder %s10, 14
    %p27 = por %p25, %p26
    %p28 = scmp.ne.s32.totalorder %s20, %s23
    %p29 = scmp.eq.s32.totalorder %s10, 0
    %p30 = por %p28, %p29
    %p31 = scmp.ne.s32.totalorder %s20, %s23
    %p32 = scmp.eq.s32.totalorder %s15, 14
    %p33 = por %p31, %p32
    %p34 = scmp.ne.s32.totalorder %s23, %s24
    %p35 = scmp.eq.s32.totalorder %s15, 0
    %p36 = por %p34, %p35
    %p37 = scmp.ne.s32.totalorder %s23, %s24
    %p38 = scmp.eq.s32.totalorder %s16, 14
    %p39 = por %p37, %p38
    %p41 = scmp.ne.s32.totalorder %s24, %s40
    %p42 = scmp.eq.s32.totalorder %s16, 0
    %p43 = por %p41, %p42
    %s44 = ssub.s32 %s10, %s17
    %p45 = scmp.eq.s32.totalorder %s44, 0
    %s47 = sadd.s32 %s46, 1
    %s48 = scalar_select %p45, %s46, %s47
    %p51 = pneg %p45
    %p52 = scmp.eq.s32.totalorder %s10, 14
    %p53 = por %p51, %p52
    %p54 = scmp.ne.s32.totalorder %s46, %s49
    %p55 = scmp.eq.s32.totalorder %s10, 0
    %p56 = por %p54, %p55
    %p57 = scmp.ne.s32.totalorder %s46, %s49
    %p58 = scmp.eq.s32.totalorder %s15, 14
    %p59 = por %p57, %p58
    %p60 = scmp.ne.s32.totalorder %s49, %s50
    %p61 = scmp.eq.s32.totalorder %s15, 0
    %p62 = por %p60, %p61
    %p63 = scmp.ne.s32.totalorder %s49, %s50
    %p64 = scmp.eq.s32.totalorder %s16, 14
    %p65 = por %p63, %p64
    %p67 = scmp.ne.s32.totalorder %s50, %s66
    %p68 = scmp.eq.s32.totalorder %s16, 0
    %p69 = por %p67, %p68
    %s70 = ssub.s32 %s10, %s17
    %p71 = scmp.eq.s32.totalorder %s70, 0
    %s73 = sadd.s32 %s72, 1
    %s74 = scalar_select %p71, %s72, %s73
    %p77 = pneg %p71
    %p78 = scmp.eq.s32.totalorder %s10, 14
    %p79 = por %p77, %p78
    %p80 = scmp.ne.s32.totalorder %s72, %s75
    %p81 = scmp.eq.s32.totalorder %s10, 0
    %p82 = por %p80, %p81
    %p83 = scmp.ne.s32.totalorder %s72, %s75
    %p84 = scmp.eq.s32.totalorder %s15, 14
    %p85 = por %p83, %p84
    %p86 = scmp.ne.s32.totalorder %s75, %s76
    %p87 = scmp.eq.s32.totalorder %s15, 0
    %p88 = por %p86, %p87
    %p89 = scmp.ne.s32.totalorder %s75, %s76
    %p90 = scmp.eq.s32.totalorder %s16, 14
    %p91 = por %p89, %p90
    %p93 = scmp.ne.s32.totalorder %s76, %s92
    %p94 = scmp.eq.s32.totalorder %s16, 0
    %p95 = por %p93, %p94
    %s96 = ssub.s32 %s10, %s17
    %p97 = scmp.eq.s32.totalorder %s96, 0
    %s99 = sadd.s32 %s98, 1
    %s100 = scalar_select %p97, %s98, %s99
    %p103 = pneg %p97
    %p104 = scmp.eq.s32.totalorder %s10, 14
    %p105 = por %p103, %p104
    %p106 = scmp.ne.s32.totalorder %s98, %s101
    %p107 = scmp.eq.s32.totalorder %s10, 0
    %p108 = por %p106, %p107
    %p109 = scmp.ne.s32.totalorder %s98, %s101
    %p110 = scmp.eq.s32.totalorder %s15, 14
    %p111 = por %p109, %p110
    %p112 = scmp.ne.s32.totalorder %s101, %s102
    %p113 = scmp.eq.s32.totalorder %s15, 0
    %p114 = por %p112, %p113
    %p115 = scmp.ne.s32.totalorder %s101, %s102
    %p116 = scmp.eq.s32.totalorder %s16, 14
    %p117 = por %p115, %p116
    %p119 = scmp.ne.s32.totalorder %s102, %s118
    %p120 = scmp.eq.s32.totalorder %s16, 0
    %p121 = por %p119, %p120
    %s122 = ssub.s32 %s10, %s17
    %p123 = scmp.eq.s32.totalorder %s122, 0
    %s125 = sadd.s32 %s124, 1
    %s126 = scalar_select %p123, %s124, %s125
    %p129 = pneg %p123
    %p130 = scmp.eq.s32.totalorder %s10, 14
    %p131 = por %p129, %p130
    %p132 = scmp.ne.s32.totalorder %s124, %s127
    %p133 = scmp.eq.s32.totalorder %s10, 0
    %p134 = por %p132, %p133
    %p135 = scmp.ne.s32.totalorder %s124, %s127
    %p136 = scmp.eq.s32.totalorder %s15, 14
    %p137 = por %p135, %p136
    %p138 = scmp.ne.s32.totalorder %s127, %s128
    %p139 = scmp.eq.s32.totalorder %s15, 0
    %p140 = por %p138, %p139
    %p141 = scmp.ne.s32.totalorder %s127, %s128
    %p142 = scmp.eq.s32.totalorder %s16, 14
    %p143 = por %p141, %p142
    %p145 = scmp.ne.s32.totalorder %s128, %s144
    %p146 = scmp.eq.s32.totalorder %s16, 0
    %p147 = por %p145, %p146
    %p148 = scmp.le.s32.totalorder 1, %s10
    %p149 = scmp.lt.s32.totalorder %s10, 16
    %p150 = pnand %p148, %p149
    %p151 = pneg %p150
    // Predicated region
    $region9: #{net_forward.9} parent=5 // pred_check
      _
    $region10: #{net_forward.9} parent=5 // pred_check_branch
      %153 = sbr.rel (%p150) target = $region12
    $region11: #{net_forward.9} parent=5 // pred_region
      %s154 = ssub.s32 %s10, 1
    $region12: #{net_forward.9} parent=5 // pred_fallthru
      _
    %p155 = scmp.lt.s32.totalorder %s10, 15
    // Predicated region
    $region13: #{net_forward.9} parent=5 // pred_check
      %p156 = pneg %p155
    $region14: #{net_forward.9} parent=5 // pred_check_branch
      %158 = sbr.rel (%p156) target = $region16
    $region15: #{net_forward.9} parent=5 // pred_region
      // Predicated region
      $region17: #{net_forward.9} parent=15 // pred_check
        %p159 = pneg %p30
      $region18: #{net_forward.9} parent=15 // pred_check_branch
        %161 = sbr.rel (%p159) target = $region20
      $region19: #{net_forward.9} parent=15 // pred_region
        %s162 = smul.u32 16, %s10
        %p163 = scmp.lt.s32.totalorder %s162, 239
        %s164 = scalar_select %p163, %s162, 239
        %s165 = smul.addr %s164, 8
        %s166 = scalar_lea.vmem %s0, %s165
        %s167 = smul.u32 16, %s10
      $region20: #{net_forward.9} parent=15 // pred_fallthru
        _
      // Predicated region
      $region21: #{net_forward.9} parent=15 // pred_check
        %p168 = pneg %p56
      $region22: #{net_forward.9} parent=15 // pred_check_branch
        %170 = sbr.rel (%p168) target = $region24
      $region23: #{net_forward.9} parent=15 // pred_region
        %s171 = smul.u32 16, %s10
        %p172 = scmp.lt.s32.totalorder %s171, 239
        %s173 = scalar_select %p172, %s171, 239
        %s174 = smul.addr %s173, 8
        %s175 = scalar_lea.vmem %s1, %s174
        %s176 = smul.u32 16, %s10
      $region24: #{net_forward.9} parent=15 // pred_fallthru
        _
      // Predicated region
      $region25: #{net_forward.9} parent=15 // pred_check
        %p177 = pneg %p82
      $region26: #{net_forward.9} parent=15 // pred_check_branch
        %179 = sbr.rel (%p177) target = $region28
      $region27: #{net_forward.9} parent=15 // pred_region
        %s180 = smul.u32 16, %s10
        %p181 = scmp.lt.s32.totalorder %s180, 239
        %s182 = scalar_select %p181, %s180, 239
        %s183 = smul.addr %s182, 8
        %s184 = scalar_lea.vmem %s2, %s183
        %s185 = smul.u32 16, %s10
      $region28: #{net_forward.9} parent=15 // pred_fallthru
        _
      // Predicated region
      $region29: #{net_forward.9} parent=15 // pred_check
        %p186 = pneg %p108
      $region30: #{net_forward.9} parent=15 // pred_check_branch
        %188 = sbr.rel (%p186) target = $region32
      $region31: #{net_forward.9} parent=15 // pred_region
        %s189 = smul.u32 16, %s10
        %p190 = scmp.lt.s32.totalorder %s189, 239
        %s191 = scalar_select %p190, %s189, 239
        %s192 = smul.addr %s191, 8
        %s193 = scalar_lea.vmem %s3, %s192
        %s194 = smul.u32 16, %s10
      $region32: #{net_forward.9} parent=15 // pred_fallthru
        _
    $region16: #{net_forward.9} parent=5 // pred_fallthru
      _
    %p195 = scmp.le.s32.totalorder 1, %s10
    %p196 = scmp.lt.s32.totalorder %s10, 16
    %p197 = pnand %p195, %p196
    %p198 = pneg %p197
    // Predicated region
    $region33: #{net_forward.9} parent=5 // pred_check
      _
    $region34: #{net_forward.9} parent=5 // pred_check_branch
      %200 = sbr.rel (%p197) target = $region36
    $region35: #{net_forward.9} parent=5 // pred_region
      %s201 = ssub.s32 %s10, 1
      %s202 = smul.u32 16, %s15
      %p203 = scmp.lt.s32.totalorder %s202, 239
      %s204 = scalar_select %p203, %s202, 239
      %s205 = smul.addr %s204, 8
      %s206 = scalar_lea.vmem %s0, %s205
      %p207 = pneg %p36
      %p208 = pneg %p33
      %s209 = smul.u32 16, %s15
      %p210 = scmp.lt.s32.totalorder %s209, 239
      %s211 = scalar_select %p210, %s209, 239
      %s212 = smul.addr %s211, 8
      %s213 = scalar_lea.vmem %s1, %s212
      %p214 = pneg %p62
      %p215 = pneg %p59
      %s216 = smul.u32 16, %s15
      %p217 = scmp.lt.s32.totalorder %s216, 239
      %s218 = scalar_select %p217, %s216, 239
      %s219 = smul.addr %s218, 8
      %s220 = scalar_lea.vmem %s2, %s219
      %p221 = pneg %p88
      %p222 = pneg %p85
      %s223 = smul.u32 16, %s15
      %p224 = scmp.lt.s32.totalorder %s223, 239
      %s225 = scalar_select %p224, %s223, 239
      %s226 = smul.addr %s225, 8
      %s227 = scalar_lea.vmem %s3, %s226
      %p228 = pneg %p114
      %p229 = pneg %p111
      %p230 = pneg %p140
      %p231 = pneg %p137
      %s232 = smul.u32 16, %s15
      %p233 = scmp.lt.s32.totalorder %s232, 239
      %s234 = scalar_select %p233, %s232, 239
      %s235 = smul.addr %s234, 8
      %s236 = scalar_lea.vmem %s4, %s235
      %s237 = smul.u32 16, %s15
      %p238 = scmp.lt.s32.totalorder %s237, 239
      %s239 = scalar_select %p238, %s237, 239
      %s240 = smul.addr %s239, 8
      %s241 = scalar_lea.vmem %s0, %s240
      %s242 = smul.u32 16, %s15
      %s243 = smul.u32 16, %s15
      %p244 = scmp.lt.s32.totalorder %s243, 239
      %s245 = scalar_select %p244, %s243, 239
      %s246 = smul.addr %s245, 8
      %s247 = scalar_lea.vmem %s1, %s246
      %s248 = smul.u32 16, %s15
      %s249 = smul.u32 16, %s15
      %p250 = scmp.lt.s32.totalorder %s249, 239
      %s251 = scalar_select %p250, %s249, 239
      %s252 = smul.addr %s251, 8
      %s253 = scalar_lea.vmem %s2, %s252
      %s254 = smul.u32 16, %s15
      %s255 = smul.u32 16, %s15
      %p256 = scmp.lt.s32.totalorder %s255, 239
      %s257 = scalar_select %p256, %s255, 239
      %s258 = smul.addr %s257, 8
      %s259 = scalar_lea.vmem %s3, %s258
      %s260 = smul.u32 16, %s15
      %s261 = smul.u32 16, %s15
      %p262 = scmp.lt.s32.totalorder %s261, 239
      %s263 = scalar_select %p262, %s261, 239
      %s264 = smul.addr %s263, 8
      %s265 = scalar_lea.vmem %s4, %s264
      %s266 = smul.u32 16, %s15
      %v267 = vld [vmem:[%s241] sm:$0xff]
      %v268 = vld [vmem:[%s241 + $0x8] sm:$0xff]
      %v269 = vld [vmem:[%s241 + $0x10] sm:$0xff]
      %v270 = vld [vmem:[%s241 + $0x18] sm:$0xff]
      %v271 = vld [vmem:[%s241 + $0x20] sm:$0xff]
      %v272 = vld [vmem:[%s241 + $0x28] sm:$0xff]
      %v273 = vld [vmem:[%s241 + $0x30] sm:$0xff]
      %v274 = vld [vmem:[%s241 + $0x38] sm:$0xff]
      %v275 = vld [vmem:[%s241 + $0x40] sm:$0xff]
      %v276 = vld [vmem:[%s241 + $0x48] sm:$0xff]
      %v277 = vld [vmem:[%s241 + $0x50] sm:$0xff]
      %v278 = vld [vmem:[%s241 + $0x58] sm:$0xff]
      %v279 = vld [vmem:[%s241 + $0x60] sm:$0xff]
      %v280 = vld [vmem:[%s241 + $0x68] sm:$0xff]
      %v281 = vld [vmem:[%s241 + $0x70] sm:$0xff]
      %v282 = vld [vmem:[%s241 + $0x78] sm:$0xff]
      %v283 = vld [vmem:[%s247] sm:$0xff]
      %v284 = vld [vmem:[%s247 + $0x8] sm:$0xff]
      %v285 = vld [vmem:[%s247 + $0x10] sm:$0xff]
      %v286 = vld [vmem:[%s247 + $0x18] sm:$0xff]
      %v287 = vld [vmem:[%s247 + $0x20] sm:$0xff]
      %v288 = vld [vmem:[%s247 + $0x28] sm:$0xff]
      %v289 = vld [vmem:[%s247 + $0x30] sm:$0xff]
      %v290 = vld [vmem:[%s247 + $0x38] sm:$0xff]
      %v291 = vld [vmem:[%s247 + $0x40] sm:$0xff]
      %v292 = vld [vmem:[%s247 + $0x48] sm:$0xff]
      %v293 = vld [vmem:[%s247 + $0x50] sm:$0xff]
      %v294 = vld [vmem:[%s247 + $0x58] sm:$0xff]
      %v295 = vld [vmem:[%s247 + $0x60] sm:$0xff]
      %v296 = vld [vmem:[%s247 + $0x68] sm:$0xff]
      %v297 = vld [vmem:[%s247 + $0x70] sm:$0xff]
      %v298 = vld [vmem:[%s247 + $0x78] sm:$0xff]
      %v299 = vmax.f32 %v267, %v283
      %v300 = vmax.f32 %v268, %v284
      %v301 = vmax.f32 %v269, %v285
      %v302 = vmax.f32 %v270, %v286
      %v303 = vmax.f32 %v271, %v287
      %v304 = vmax.f32 %v272, %v288
      %v305 = vmax.f32 %v273, %v289
      %v306 = vmax.f32 %v274, %v290
      %v307 = vmax.f32 %v275, %v291
      %v308 = vmax.f32 %v276, %v292
      %v309 = vmax.f32 %v277, %v293
      %v310 = vmax.f32 %v278, %v294
      %v311 = vmax.f32 %v279, %v295
      %v312 = vmax.f32 %v280, %v296
      %v313 = vmax.f32 %v281, %v297
      %v314 = vmax.f32 %v282, %v298
      %v315 = vld [vmem:[%s253] sm:$0xff]
      %v316 = vld [vmem:[%s253 + $0x8] sm:$0xff]
      %v317 = vld [vmem:[%s253 + $0x10] sm:$0xff]
      %v318 = vld [vmem:[%s253 + $0x18] sm:$0xff]
      %v319 = vld [vmem:[%s253 + $0x20] sm:$0xff]
      %v320 = vld [vmem:[%s253 + $0x28] sm:$0xff]
      %v321 = vld [vmem:[%s253 + $0x30] sm:$0xff]
      %v322 = vld [vmem:[%s253 + $0x38] sm:$0xff]
      %v323 = vld [vmem:[%s253 + $0x40] sm:$0xff]
      %v324 = vld [vmem:[%s253 + $0x48] sm:$0xff]
      %v325 = vld [vmem:[%s253 + $0x50] sm:$0xff]
      %v326 = vld [vmem:[%s253 + $0x58] sm:$0xff]
      %v327 = vld [vmem:[%s253 + $0x60] sm:$0xff]
      %v328 = vld [vmem:[%s253 + $0x68] sm:$0xff]
      %v329 = vld [vmem:[%s253 + $0x70] sm:$0xff]
      %v330 = vld [vmem:[%s253 + $0x78] sm:$0xff]
      %v331 = vld [vmem:[%s259] sm:$0xff]
      %v332 = vld [vmem:[%s259 + $0x8] sm:$0xff]
      %v333 = vld [vmem:[%s259 + $0x10] sm:$0xff]
      %v334 = vld [vmem:[%s259 + $0x18] sm:$0xff]
      %v335 = vld [vmem:[%s259 + $0x20] sm:$0xff]
      %v336 = vld [vmem:[%s259 + $0x28] sm:$0xff]
      %v337 = vld [vmem:[%s259 + $0x30] sm:$0xff]
      %v338 = vld [vmem:[%s259 + $0x38] sm:$0xff]
      %v339 = vld [vmem:[%s259 + $0x40] sm:$0xff]
      %v340 = vld [vmem:[%s259 + $0x48] sm:$0xff]
      %v341 = vld [vmem:[%s259 + $0x50] sm:$0xff]
      %v342 = vld [vmem:[%s259 + $0x58] sm:$0xff]
      %v343 = vld [vmem:[%s259 + $0x60] sm:$0xff]
      %v344 = vld [vmem:[%s259 + $0x68] sm:$0xff]
      %v345 = vld [vmem:[%s259 + $0x70] sm:$0xff]
      %v346 = vld [vmem:[%s259 + $0x78] sm:$0xff]
      %v347 = vmax.f32 %v315, %v331
      %v348 = vmax.f32 %v316, %v332
      %v349 = vmax.f32 %v317, %v333
      %v350 = vmax.f32 %v318, %v334
      %v351 = vmax.f32 %v319, %v335
      %v352 = vmax.f32 %v320, %v336
      %v353 = vmax.f32 %v321, %v337
      %v354 = vmax.f32 %v322, %v338
      %v355 = vmax.f32 %v323, %v339
      %v356 = vmax.f32 %v324, %v340
      %v357 = vmax.f32 %v325, %v341
      %v358 = vmax.f32 %v326, %v342
      %v359 = vmax.f32 %v327, %v343
      %v360 = vmax.f32 %v328, %v344
      %v361 = vmax.f32 %v329, %v345
      %v362 = vmax.f32 %v330, %v346
      %v363 = vmax.f32 %v299, %v347
      %v364 = vmax.f32 %v300, %v348
      %v365 = vmax.f32 %v301, %v349
      %v366 = vmax.f32 %v302, %v350
      %v367 = vmax.f32 %v303, %v351
      %v368 = vmax.f32 %v304, %v352
      %v369 = vmax.f32 %v305, %v353
      %v370 = vmax.f32 %v306, %v354
      %v371 = vmax.f32 %v307, %v355
      %v372 = vmax.f32 %v308, %v356
      %v373 = vmax.f32 %v309, %v357
      %v374 = vmax.f32 %v310, %v358
      %v375 = vmax.f32 %v311, %v359
      %v376 = vmax.f32 %v312, %v360
      %v377 = vmax.f32 %v313, %v361
      %v378 = vmax.f32 %v314, %v362
      %v379 = vmax.f32 %v363, 0.0
      %v380 = vmax.f32 %v364, 0.0
      %v381 = vmax.f32 %v365, 0.0
      %v382 = vmax.f32 %v366, 0.0
      %v383 = vmax.f32 %v367, 0.0
      %v384 = vmax.f32 %v368, 0.0
      %v385 = vmax.f32 %v369, 0.0
      %v386 = vmax.f32 %v370, 0.0
      %v387 = vmax.f32 %v371, 0.0
      %v388 = vmax.f32 %v372, 0.0
      %v389 = vmax.f32 %v373, 0.0
      %v390 = vmax.f32 %v374, 0.0
      %v391 = vmax.f32 %v375, 0.0
      %v392 = vmax.f32 %v376, 0.0
      %v393 = vmax.f32 %v377, 0.0
      %v394 = vmax.f32 %v378, 0.0
      %vm395 = vcmask 80896
      %396 = vst.msk [vmem:[%s265] sm:$0xff] %vm395, %v379
      %397 = vst.msk [vmem:[%s265 + $0x8] sm:$0xff] %vm395, %v380
      %398 = vst.msk [vmem:[%s265 + $0x10] sm:$0xff] %vm395, %v381
      %399 = vst.msk [vmem:[%s265 + $0x18] sm:$0xff] %vm395, %v382
      %400 = vst.msk [vmem:[%s265 + $0x20] sm:$0xff] %vm395, %v383
      %401 = vst.msk [vmem:[%s265 + $0x28] sm:$0xff] %vm395, %v384
      %402 = vst.msk [vmem:[%s265 + $0x30] sm:$0xff] %vm395, %v385
      %403 = vst.msk [vmem:[%s265 + $0x38] sm:$0xff] %vm395, %v386
      %404 = vst.msk [vmem:[%s265 + $0x40] sm:$0xff] %vm395, %v387
      %405 = vst.msk [vmem:[%s265 + $0x48] sm:$0xff] %vm395, %v388
      %406 = vst.msk [vmem:[%s265 + $0x50] sm:$0xff] %vm395, %v389
      %407 = vst.msk [vmem:[%s265 + $0x58] sm:$0xff] %vm395, %v390
      %408 = vst.msk [vmem:[%s265 + $0x60] sm:$0xff] %vm395, %v391
      %409 = vst.msk [vmem:[%s265 + $0x68] sm:$0xff] %vm395, %v392
      %410 = vst.msk [vmem:[%s265 + $0x70] sm:$0xff] %vm395, %v393
      %411 = vst.msk [vmem:[%s265 + $0x78] sm:$0xff] %vm395, %v394
      %s412 = smul.u32 16, %s15
      %p413 = scmp.lt.s32.totalorder %s412, 239
      %s414 = scalar_select %p413, %s412, 239
      %s415 = smul.addr %s414, 8
      %s416 = scalar_lea.vmem %s4, %s415
      // Predicated region
      $region37: #{net_forward.9} parent=35 // pred_check
        %p417 = pneg %p137
      $region38: #{net_forward.9} parent=35 // pred_check_branch
        %419 = sbr.rel (%p417) target = $region40
      $region39: #{net_forward.9} parent=35 // pred_region
        %s420 = smul.u32 16, %s15
      $region40: #{net_forward.9} parent=35 // pred_fallthru
        _
    $region36: #{net_forward.9} parent=5 // pred_fallthru
      _
    %p421 = scmp.le.s32.totalorder 2, %s10
    // Predicated region
    $region41: #{net_forward.9} parent=5 // pred_check
      %p422 = pneg %p421
    $region42: #{net_forward.9} parent=5 // pred_check_branch
      %424 = sbr.rel (%p422) target = $region44
    $region43: #{net_forward.9} parent=5 // pred_region
      %s425 = ssub.s32 %s10, 2
      // Predicated region
      $region45: #{net_forward.9} parent=43 // pred_check
        %p426 = pneg %p143
      $region46: #{net_forward.9} parent=43 // pred_check_branch
        %428 = sbr.rel (%p426) target = $region48
      $region47: #{net_forward.9} parent=43 // pred_region
        %s429 = smul.u32 16, %s16
        %p430 = scmp.lt.s32.totalorder %s429, 239
        %s431 = scalar_select %p430, %s429, 239
        %s432 = smul.addr %s431, 8
        %s433 = scalar_lea.vmem %s4, %s432
      $region48: #{net_forward.9} parent=43 // pred_fallthru
        _
    $region44: #{net_forward.9} parent=5 // pred_fallthru
      _
  $region6: #{net_forward.9} parent=0 // loop_footer
    %s14 = sadd.s32 1, %s10
  $region7: #{net_forward.9} parent=0 // loop_footer_branch
    %9 = sbr.rel target = $region3
  $region8: #{net_forward.9} parent=0 // loop_exit
    _

// kernel: net_forward.10
$region0: #{net_forward.10}
  #allocation0 [shape = 'u32[]', space=smem, size = 0x4, offset = 0x4, fixed_abs, tag = 'smem constant byte address 0x4 - core index']
  #allocation1 [shape = 'u32[144,128]{1,0:T(1,128)}', space=vmem, size = 0x12000, scoped, tag = 'internal scratch']
  #allocation2 [shape = 'f32[128,128]{1,0:T(8,128)}', space=vmem, size = 0x10000, scoped, tag = 'scratch operand']
  %s0 = inlined_call_operand.vmem [shape: bf16[1408,256], index: 0, kind: input, shape index: {}]
  %s1 = inlined_call_operand.vmem [shape: bf16[256,128], index: 1, kind: input, shape index: {}]
  %s2 = inlined_call_operand.vmem [shape: f32[1,128], index: 2, kind: input, shape index: {}]
  %s3 = inlined_call_operand.vmem [shape: f32[1408,128], index: 3, kind: output, shape index: {}]
  %s4 = sld [smem:[#allocation0]]
  $region53: #{net_forward.10} parent=0
    _
  %s6 = ssub.s32 1, %s4
  %s7 = scalar_select 0, %s6, %s4
  loop: start=0, step=1, limit=13
  $region2: #{net_forward.10} parent=0 // loop_pre_header
    _
  $region3: #{net_forward.10} parent=0 // loop_header
    %s9 = sphi 0, %s13
    %p10 = scmp.ge.s32.totalorder %s9, 13
    %s16 = sphi 0, %s35
    %s17 = sphi 0, %s31
    %s18 = sphi 0, %s27
    %s19 = sphi 0, %s16
    %s20 = sphi 0, %s17
    %s21 = sphi 0, %s18
    %s22 = sphi 0, %s19
    %s23 = sphi 0, %s20
    %s24 = sphi 0, %s21
    %s40 = sphi 0, %s42
    %s43 = sphi 0, %s40
    %s44 = sphi 0, %s43
    %s60 = sphi 0, %s44
    %s68 = sphi 0, %s70
    %s71 = sphi 0, %s68
    %s72 = sphi 0, %s71
    %s88 = sphi 0, %s72
    %s94 = sphi 0, %s96
    %s97 = sphi 0, %s94
    %s98 = sphi 0, %s97
    %s114 = sphi 0, %s98
    %s122 = sphi 0, %s124
    %s125 = sphi 0, %s122
    %s126 = sphi 0, %s125
    %s142 = sphi 0, %s126
  $region4: #{net_forward.10} parent=0 // loop_header_branch
    %12 = sbr.rel (%p10) target = $region8
  $region5: #{net_forward.10} parent=0 // loop_body
    %s14 = ssub.s32 %s9, 1
    %s15 = ssub.s32 %s9, 2
    %s25 = sadd.s32 1, %s18
    %p26 = scmp.ge.s32.totalorder %s25, 1
    %s27 = scalar_select %p26, 0, %s25
    %s28 = sadd.s32 1, %s17
    %s29 = scalar_select %p26, %s28, %s17
    %p30 = scmp.ge.s32.totalorder %s29, 1
    %s31 = scalar_select %p30, 0, %s29
    %s32 = sadd.s32 1, %s16
    %s33 = scalar_select %p30, %s32, %s16
    %p34 = scmp.ge.s32.totalorder %s33, 11
    %s35 = scalar_select %p34, 0, %s33
    %s36 = ssub.s32 %s16, %s35
    %s37 = ssub.s32 %s18, %s27
    %s38 = sor.u32 %s36, %s37
    %p39 = scmp.eq.s32.totalorder %s38, 0
    %s41 = sadd.s32 %s40, 1
    %s42 = scalar_select %p39, %s40, %s41
    %p45 = pneg %p39
    %p46 = scmp.eq.s32.totalorder %s9, 10
    %p47 = por %p45, %p46
    %p48 = scmp.ne.s32.totalorder %s40, %s43
    %p49 = scmp.eq.s32.totalorder %s9, 0
    %p50 = por %p48, %p49
    %p51 = scmp.ne.s32.totalorder %s40, %s43
    %p52 = scmp.eq.s32.totalorder %s14, 10
    %p53 = por %p51, %p52
    %p54 = scmp.ne.s32.totalorder %s43, %s44
    %p55 = scmp.eq.s32.totalorder %s14, 0
    %p56 = por %p54, %p55
    %p57 = scmp.ne.s32.totalorder %s43, %s44
    %p58 = scmp.eq.s32.totalorder %s15, 10
    %p59 = por %p57, %p58
    %p61 = scmp.ne.s32.totalorder %s44, %s60
    %p62 = scmp.eq.s32.totalorder %s15, 0
    %p63 = por %p61, %p62
    %s64 = ssub.s32 %s18, %s27
    %s65 = ssub.s32 %s17, %s31
    %s66 = sor.u32 %s64, %s65
    %p67 = scmp.eq.s32.totalorder %s66, 0
    %s69 = sadd.s32 %s68, 1
    %s70 = scalar_select %p67, %s68, %s69
    %p73 = pneg %p67
    %p74 = scmp.eq.s32.totalorder %s9, 10
    %p75 = por %p73, %p74
    %p76 = scmp.ne.s32.totalorder %s68, %s71
    %p77 = scmp.eq.s32.totalorder %s9, 0
    %p78 = por %p76, %p77
    %p79 = scmp.ne.s32.totalorder %s68, %s71
    %p80 = scmp.eq.s32.totalorder %s14, 10
    %p81 = por %p79, %p80
    %p82 = scmp.ne.s32.totalorder %s71, %s72
    %p83 = scmp.eq.s32.totalorder %s14, 0
    %p84 = por %p82, %p83
    %p85 = scmp.ne.s32.totalorder %s71, %s72
    %p86 = scmp.eq.s32.totalorder %s15, 10
    %p87 = por %p85, %p86
    %p89 = scmp.ne.s32.totalorder %s72, %s88
    %p90 = scmp.eq.s32.totalorder %s15, 0
    %p91 = por %p89, %p90
    %s92 = ssub.s32 %s17, %s31
    %p93 = scmp.eq.s32.totalorder %s92, 0
    %s95 = sadd.s32 %s94, 1
    %s96 = scalar_select %p93, %s94, %s95
    %p99 = pneg %p93
    %p100 = scmp.eq.s32.totalorder %s9, 10
    %p101 = por %p99, %p100
    %p102 = scmp.ne.s32.totalorder %s94, %s97
    %p103 = scmp.eq.s32.totalorder %s9, 0
    %p104 = por %p102, %p103
    %p105 = scmp.ne.s32.totalorder %s94, %s97
    %p106 = scmp.eq.s32.totalorder %s14, 10
    %p107 = por %p105, %p106
    %p108 = scmp.ne.s32.totalorder %s97, %s98
    %p109 = scmp.eq.s32.totalorder %s14, 0
    %p110 = por %p108, %p109
    %p111 = scmp.ne.s32.totalorder %s97, %s98
    %p112 = scmp.eq.s32.totalorder %s15, 10
    %p113 = por %p111, %p112
    %p115 = scmp.ne.s32.totalorder %s98, %s114
    %p116 = scmp.eq.s32.totalorder %s15, 0
    %p117 = por %p115, %p116
    %s118 = ssub.s32 %s16, %s35
    %s119 = ssub.s32 %s17, %s31
    %s120 = sor.u32 %s118, %s119
    %p121 = scmp.eq.s32.totalorder %s120, 0
    %s123 = sadd.s32 %s122, 1
    %s124 = scalar_select %p121, %s122, %s123
    %p127 = pneg %p121
    %p128 = scmp.eq.s32.totalorder %s9, 10
    %p129 = por %p127, %p128
    %p130 = scmp.ne.s32.totalorder %s122, %s125
    %p131 = scmp.eq.s32.totalorder %s9, 0
    %p132 = por %p130, %p131
    %p133 = scmp.ne.s32.totalorder %s122, %s125
    %p134 = scmp.eq.s32.totalorder %s14, 10
    %p135 = por %p133, %p134
    %p136 = scmp.ne.s32.totalorder %s125, %s126
    %p137 = scmp.eq.s32.totalorder %s14, 0
    %p138 = por %p136, %p137
    %p139 = scmp.ne.s32.totalorder %s125, %s126
    %p140 = scmp.eq.s32.totalorder %s15, 10
    %p141 = por %p139, %p140
    %p143 = scmp.ne.s32.totalorder %s126, %s142
    %p144 = scmp.eq.s32.totalorder %s15, 0
    %p145 = por %p143, %p144
    %p146 = scmp.le.s32.totalorder 1, %s9
    %p147 = scmp.lt.s32.totalorder %s9, 12
    %p148 = pnand %p146, %p147
    %p149 = pneg %p148
    // Predicated region
    $region9: #{net_forward.10} parent=5 // pred_check
      _
    $region10: #{net_forward.10} parent=5 // pred_check_branch
      %151 = sbr.rel (%p148) target = $region12
    $region11: #{net_forward.10} parent=5 // pred_region
      %s152 = ssub.s32 %s9, 1
      // Predicated region
      $region13: #{net_forward.10} parent=11 // pred_check
        %p153 = pneg %p84
      $region14: #{net_forward.10} parent=11 // pred_check_branch
        %155 = sbr.rel (%p153) target = $region16
      $region15: #{net_forward.10} parent=11 // pred_region
        %s156 = smul.u32 32, %s21
        %p157 = scmp.lt.s32.totalorder %s156, 31
        %s158 = scalar_select %p157, %s156, 31
        %p159 = scmp.lt.s32.totalorder %s20, 0
        %s160 = scalar_select %p159, %s20, 0
        %s161 = sadd.s32 %s160, %s158
        %s162 = smul.addr %s161, 4
        %s163 = scalar_lea.vmem %s1, %s162
        %s164 = smul.u32 32, %s21
      $region16: #{net_forward.10} parent=11 // pred_fallthru
        _
      // Predicated region
      $region17: #{net_forward.10} parent=11 // pred_check
        %p165 = pneg %p110
      $region18: #{net_forward.10} parent=11 // pred_check_branch
        %167 = sbr.rel (%p165) target = $region20
      $region19: #{net_forward.10} parent=11 // pred_region
        %p168 = scmp.lt.s32.totalorder %s20, 0
        %s169 = scalar_select %p168, %s20, 0
        %s170 = scalar_lea.vmem %s2, %s169
      $region20: #{net_forward.10} parent=11 // pred_fallthru
        _
    $region12: #{net_forward.10} parent=5 // pred_fallthru
      _
    %p171 = scmp.lt.s32.totalorder %s9, 11
    // Predicated region
    $region21: #{net_forward.10} parent=5 // pred_check
      %p172 = pneg %p171
    $region22: #{net_forward.10} parent=5 // pred_check_branch
      %174 = sbr.rel (%p172) target = $region24
    $region23: #{net_forward.10} parent=5 // pred_region
      // Predicated region
      $region25: #{net_forward.10} parent=23 // pred_check
        %p175 = pneg %p50
      $region26: #{net_forward.10} parent=23 // pred_check_branch
        %177 = sbr.rel (%p175) target = $region28
      $region27: #{net_forward.10} parent=23 // pred_region
        %s178 = smul.u32 16, %s16
        %s179 = smul.u32 2, %s18
        %p180 = scmp.lt.s32.totalorder %s178, 175
        %s181 = scalar_select %p180, %s178, 175
        %p182 = scmp.lt.s32.totalorder %s179, 1
        %s183 = scalar_select %p182, %s179, 1
        %s184 = smul.addr %s181, 2
        %s185 = sadd.s32 %s183, %s184
        %s186 = smul.addr %s185, 4
        %s187 = scalar_lea.vmem %s0, %s186
        %s188 = smul.u32 16, %s16
        %s189 = smul.u32 2, %s18
      $region28: #{net_forward.10} parent=23 // pred_fallthru
        _
    $region24: #{net_forward.10} parent=5 // pred_fallthru
      _
    %p190 = scmp.le.s32.totalorder 1, %s9
    %p191 = scmp.lt.s32.totalorder %s9, 12
    %p192 = pnand %p190, %p191
    %p193 = pneg %p192
    // Predicated region
    $region29: #{net_forward.10} parent=5 // pred_check
      _
    $region30: #{net_forward.10} parent=5 // pred_check_branch
      %195 = sbr.rel (%p192) target = $region32
    $region31: #{net_forward.10} parent=5 // pred_region
      %s196 = ssub.s32 %s9, 1
      %s197 = smul.u32 16, %s19
      %s198 = smul.u32 2, %s21
      %p199 = scmp.lt.s32.totalorder %s197, 175
      %s200 = scalar_select %p199, %s197, 175
      %p201 = scmp.lt.s32.totalorder %s198, 1
      %s202 = scalar_select %p201, %s198, 1
      %s203 = smul.addr %s200, 2
      %s204 = sadd.s32 %s202, %s203
      %s205 = smul.addr %s204, 4
      %s206 = scalar_lea.vmem %s0, %s205
      %p207 = pneg %p56
      %p208 = pneg %p53
      %s209 = smul.u32 32, %s21
      %p210 = scmp.lt.s32.totalorder %s209, 31
      %s211 = scalar_select %p210, %s209, 31
      %p212 = scmp.lt.s32.totalorder %s20, 0
      %s213 = scalar_select %p212, %s20, 0
      %s214 = sadd.s32 %s213, %s211
      %s215 = smul.addr %s214, 4
      %s216 = scalar_lea.vmem %s1, %s215
      %p217 = pneg %p84
      %p218 = pneg %p81
      %p219 = scmp.lt.s32.totalorder %s20, 0
      %s220 = scalar_select %p219, %s20, 0
      %s221 = scalar_lea.vmem %s2, %s220
      %p222 = pneg %p110
      %p223 = pneg %p107
      %p224 = pneg %p138
      %p225 = pneg %p135
      %s226 = smul.u32 16, %s19
      %p227 = scmp.lt.s32.totalorder %s226, 175
      %s228 = scalar_select %p227, %s226, 175
      %p229 = scmp.lt.s32.totalorder %s20, 0
      %s230 = scalar_select %p229, %s20, 0
      %s231 = sadd.s32 %s230, %s228
      %s232 = smul.addr %s231, 8
      %s233 = scalar_lea.vmem %s3, %s232
      %s234 = smul.u32 16, %s19
      %s235 = smul.u32 2, %s21
      %p236 = scmp.lt.s32.totalorder %s234, 175
      %s237 = scalar_select %p236, %s234, 175
      %p238 = scmp.lt.s32.totalorder %s235, 1
      %s239 = scalar_select %p238, %s235, 1
      %s240 = smul.addr %s237, 2
      %s241 = sadd.s32 %s239, %s240
      %s242 = smul.addr %s241, 4
      %s243 = scalar_lea.vmem %s0, %s242
      %s244 = smul.u32 16, %s19
      %s245 = smul.u32 2, %s21
      %s246 = smul.u32 32, %s21
      %p247 = scmp.lt.s32.totalorder %s246, 31
      %s248 = scalar_select %p247, %s246, 31
      %p249 = scmp.lt.s32.totalorder %s20, 0
      %s250 = scalar_select %p249, %s20, 0
      %s251 = sadd.s32 %s250, %s248
      %s252 = smul.addr %s251, 4
      %s253 = scalar_lea.vmem %s1, %s252
      %s254 = smul.u32 32, %s21
      %p255 = scmp.lt.s32.totalorder %s20, 0
      %s256 = scalar_select %p255, %s20, 0
      %s257 = scalar_lea.vmem %s2, %s256
      %s258 = smul.u32 16, %s19
      %p259 = scmp.lt.s32.totalorder %s258, 175
      %s260 = scalar_select %p259, %s258, 175
      %p261 = scmp.lt.s32.totalorder %s20, 0
      %s262 = scalar_select %p261, %s20, 0
      %s263 = sadd.s32 %s262, %s260
      %s264 = smul.addr %s263, 8
      %s265 = scalar_lea.vmem %s3, %s264
      %s266 = smul.u32 16, %s19
      %p268 = scmp.eq.s32.totalorder %s21, 0
      // Predicated region
      $region33: #{net_forward.10} parent=31 // pred_check
        %p269 = pneg %p268
      $region34: #{net_forward.10} parent=31 // pred_check_branch
        %271 = sbr.rel (%p269) target = $region36
      $region35: #{net_forward.10} parent=31 // pred_region
        %272 = vst [vmem:[#allocation2] sm:$0xff] 0.0
        %273 = vst [vmem:[#allocation2 + $0x8] sm:$0xff] 0.0
        %274 = vst [vmem:[#allocation2 + $0x10] sm:$0xff] 0.0
        %275 = vst [vmem:[#allocation2 + $0x18] sm:$0xff] 0.0
        %276 = vst [vmem:[#allocation2 + $0x20] sm:$0xff] 0.0
        %277 = vst [vmem:[#allocation2 + $0x28] sm:$0xff] 0.0
        %278 = vst [vmem:[#allocation2 + $0x30] sm:$0xff] 0.0
        %279 = vst [vmem:[#allocation2 + $0x38] sm:$0xff] 0.0
        %280 = vst [vmem:[#allocation2 + $0x40] sm:$0xff] 0.0
        %281 = vst [vmem:[#allocation2 + $0x48] sm:$0xff] 0.0
        %282 = vst [vmem:[#allocation2 + $0x50] sm:$0xff] 0.0
        %283 = vst [vmem:[#allocation2 + $0x58] sm:$0xff] 0.0
        %284 = vst [vmem:[#allocation2 + $0x60] sm:$0xff] 0.0
        %285 = vst [vmem:[#allocation2 + $0x68] sm:$0xff] 0.0
        %286 = vst [vmem:[#allocation2 + $0x70] sm:$0xff] 0.0
        %287 = vst [vmem:[#allocation2 + $0x78] sm:$0xff] 0.0
      $region36: #{net_forward.10} parent=31 // pred_fallthru
        _
      %v288 = vld [vmem:[#allocation2] sm:$0xff]
      %v289 = vld [vmem:[#allocation2 + $0x8] sm:$0xff]
      %v290 = vld [vmem:[#allocation2 + $0x10] sm:$0xff]
      %v291 = vld [vmem:[#allocation2 + $0x18] sm:$0xff]
      %v292 = vld [vmem:[#allocation2 + $0x20] sm:$0xff]
      %v293 = vld [vmem:[#allocation2 + $0x28] sm:$0xff]
      %v294 = vld [vmem:[#allocation2 + $0x30] sm:$0xff]
      %v295 = vld [vmem:[#allocation2 + $0x38] sm:$0xff]
      %v296 = vld [vmem:[#allocation2 + $0x40] sm:$0xff]
      %v297 = vld [vmem:[#allocation2 + $0x48] sm:$0xff]
      %v298 = vld [vmem:[#allocation2 + $0x50] sm:$0xff]
      %v299 = vld [vmem:[#allocation2 + $0x58] sm:$0xff]
      %v300 = vld [vmem:[#allocation2 + $0x60] sm:$0xff]
      %v301 = vld [vmem:[#allocation2 + $0x68] sm:$0xff]
      %v302 = vld [vmem:[#allocation2 + $0x70] sm:$0xff]
      %v303 = vld [vmem:[#allocation2 + $0x78] sm:$0xff]
      %v304 = vld [vmem:[%s243] sm:$0xff]
      %v305 = vld [vmem:[%s243 + $0x8] sm:$0xff]
      %v306 = vld [vmem:[%s243 + $0x10] sm:$0xff]
      %v307 = vld [vmem:[%s243 + $0x18] sm:$0xff]
      %v308 = vld [vmem:[%s243 + $0x20] sm:$0xff]
      %v309 = vld [vmem:[%s243 + $0x28] sm:$0xff]
      %v310 = vld [vmem:[%s243 + $0x30] sm:$0xff]
      %v311 = vld [vmem:[%s243 + $0x38] sm:$0xff]
      %v312 = vld [vmem:[%s243 + $0x40] sm:$0xff]
      %v313 = vld [vmem:[%s243 + $0x48] sm:$0xff]
      %v314 = vld [vmem:[%s243 + $0x50] sm:$0xff]
      %v315 = vld [vmem:[%s243 + $0x58] sm:$0xff]
      %v316 = vld [vmem:[%s243 + $0x60] sm:$0xff]
      %v317 = vld [vmem:[%s243 + $0x68] sm:$0xff]
      %v318 = vld [vmem:[%s243 + $0x70] sm:$0xff]
      %v319 = vld [vmem:[%s243 + $0x78] sm:$0xff]
      %v320 = vld [vmem:[%s253] sm:$0xf]
      %v321 = vld [vmem:[%s253 + $0x4] sm:$0xf]
      %v322 = vld [vmem:[%s253 + $0x8] sm:$0xf]
      %v323 = vld [vmem:[%s253 + $0xc] sm:$0xf]
      %v324 = vld [vmem:[%s253 + $0x10] sm:$0xf]
      %v325 = vld [vmem:[%s253 + $0x14] sm:$0xf]
      %v326 = vld [vmem:[%s253 + $0x18] sm:$0xf]
      %v327 = vld [vmem:[%s253 + $0x1c] sm:$0xf]
      %v328 = vld [vmem:[%s253 + $0x20] sm:$0xf]
      %v329 = vld [vmem:[%s253 + $0x24] sm:$0xf]
      %v330 = vld [vmem:[%s253 + $0x28] sm:$0xf]
      %v331 = vld [vmem:[%s253 + $0x2c] sm:$0xf]
      %v332 = vld [vmem:[%s253 + $0x30] sm:$0xf]
      %v333 = vld [vmem:[%s253 + $0x34] sm:$0xf]
      %v334 = vld [vmem:[%s253 + $0x38] sm:$0xf]
      %v335 = vld [vmem:[%s253 + $0x3c] sm:$0xf]
      %v336 = vld [vmem:[%s253 + $0x40] sm:$0xf]
      %v337 = vld [vmem:[%s253 + $0x44] sm:$0xf]
      %v338 = vld [vmem:[%s253 + $0x48] sm:$0xf]
      %v339 = vld [vmem:[%s253 + $0x4c] sm:$0xf]
      %v340 = vld [vmem:[%s253 + $0x50] sm:$0xf]
      %v341 = vld [vmem:[%s253 + $0x54] sm:$0xf]
      %v342 = vld [vmem:[%s253 + $0x58] sm:$0xf]
      %v343 = vld [vmem:[%s253 + $0x5c] sm:$0xf]
      %v344 = vld [vmem:[%s253 + $0x60] sm:$0xf]
      %v345 = vld [vmem:[%s253 + $0x64] sm:$0xf]
      %v346 = vld [vmem:[%s253 + $0x68] sm:$0xf]
      %v347 = vld [vmem:[%s253 + $0x6c] sm:$0xf]
      %v348 = vld [vmem:[%s253 + $0x70] sm:$0xf]
      %v349 = vld [vmem:[%s253 + $0x74] sm:$0xf]
      %v350 = vld [vmem:[%s253 + $0x78] sm:$0xf]
      %v351 = vld [vmem:[%s253 + $0x7c] sm:$0xf]
      %v368 = vunpack.c.l.b16 %v304
      %v369 = vunpack.c.h.b16 %v304
      %v370 = vunpack.c.l.b16 %v305
      %v371 = vunpack.c.h.b16 %v305
      %v372 = vunpack.c.l.b16 %v306
      %v373 = vunpack.c.h.b16 %v306
      %v374 = vunpack.c.l.b16 %v307
      %v375 = vunpack.c.h.b16 %v307
      %v376 = vunpack.c.l.b16 %v308
      %v377 = vunpack.c.h.b16 %v308
      %v378 = vunpack.c.l.b16 %v309
      %v379 = vunpack.c.h.b16 %v309
      %v380 = vunpack.c.l.b16 %v310
      %v381 = vunpack.c.h.b16 %v310
      %v382 = vunpack.c.l.b16 %v311
      %v383 = vunpack.c.h.b16 %v311
      %v384 = vunpack.c.l.b16 %v312
      %v385 = vunpack.c.h.b16 %v312
      %v386 = vunpack.c.l.b16 %v313
      %v387 = vunpack.c.h.b16 %v313
      %v388 = vunpack.c.l.b16 %v314
      %v389 = vunpack.c.h.b16 %v314
      %v390 = vunpack.c.l.b16 %v315
      %v391 = vunpack.c.h.b16 %v315
      %v392 = vunpack.c.l.b16 %v316
      %v393 = vunpack.c.h.b16 %v316
      %v394 = vunpack.c.l.b16 %v317
      %v395 = vunpack.c.h.b16 %v317
      %v396 = vunpack.c.l.b16 %v318
      %v397 = vunpack.c.h.b16 %v318
      %v398 = vunpack.c.l.b16 %v319
      %v399 = vunpack.c.h.b16 %v319
      %v400 = vpack.c.b16 %v370, %v368
      %v401 = vpack.c.b16 %v371, %v369
      %v402 = vpack.c.b16 %v374, %v372
      %v403 = vpack.c.b16 %v375, %v373
      %v404 = vpack.c.b16 %v378, %v376
      %v405 = vpack.c.b16 %v379, %v377
      %v406 = vpack.c.b16 %v382, %v380
      %v407 = vpack.c.b16 %v383, %v381
      %v408 = vpack.c.b16 %v386, %v384
      %v409 = vpack.c.b16 %v387, %v385
      %v410 = vpack.c.b16 %v390, %v388
      %v411 = vpack.c.b16 %v391, %v389
      %v412 = vpack.c.b16 %v394, %v392
      %v413 = vpack.c.b16 %v395, %v393
      %v414 = vpack.c.b16 %v398, %v396
      %v415 = vpack.c.b16 %v399, %v397
      %v464 = vunpack.c.l.b16 %v320
      %v465 = vunpack.c.l.b16 %v321
      %v466 = vunpack.c.l.b16 %v322
      %v467 = vunpack.c.l.b16 %v323
      %v468 = vunpack.c.l.b16 %v324
      %v469 = vunpack.c.l.b16 %v325
      %v470 = vunpack.c.l.b16 %v326
      %v471 = vunpack.c.l.b16 %v327
      %v472 = vunpack.c.l.b16 %v328
      %v473 = vunpack.c.l.b16 %v329
      %v474 = vunpack.c.l.b16 %v330
      %v475 = vunpack.c.l.b16 %v331
      %v476 = vunpack.c.l.b16 %v332
      %v477 = vunpack.c.l.b16 %v333
      %v478 = vunpack.c.l.b16 %v334
      %v479 = vunpack.c.l.b16 %v335
      %v480 = vunpack.c.l.b16 %v336
      %v481 = vunpack.c.l.b16 %v337
      %v482 = vunpack.c.l.b16 %v338
      %v483 = vunpack.c.l.b16 %v339
      %v484 = vunpack.c.l.b16 %v340
      %v485 = vunpack.c.l.b16 %v341
      %v486 = vunpack.c.l.b16 %v342
      %v487 = vunpack.c.l.b16 %v343
      %v488 = vunpack.c.l.b16 %v344
      %v489 = vunpack.c.l.b16 %v345
      %v490 = vunpack.c.l.b16 %v346
      %v491 = vunpack.c.l.b16 %v347
      %v492 = vunpack.c.l.b16 %v348
      %v493 = vunpack.c.l.b16 %v349
      %v494 = vunpack.c.l.b16 %v350
      %v495 = vunpack.c.l.b16 %v351
      %v496 = vpack.c.b16 %v465, %v464
      %v497 = vpack.c.b16 %v467, %v466
      %v498 = vpack.c.b16 %v469, %v468
      %v499 = vpack.c.b16 %v471, %v470
      %v500 = vpack.c.b16 %v473, %v472
      %v501 = vpack.c.b16 %v475, %v474
      %v502 = vpack.c.b16 %v477, %v476
      %v503 = vpack.c.b16 %v479, %v478
      %v504 = vpack.c.b16 %v481, %v480
      %v505 = vpack.c.b16 %v483, %v482
      %v506 = vpack.c.b16 %v485, %v484
      %v507 = vpack.c.b16 %v487, %v486
      %v508 = vpack.c.b16 %v489, %v488
      %v509 = vpack.c.b16 %v491, %v490
      %v510 = vpack.c.b16 %v493, %v492
      %v511 = vpack.c.b16 %v495, %v494
      %528 = vmatprep.subr.bf16.mxu0 0
      %529 = vmatpush1.bf16.msra.mxu0 %v496
      %530 = vmatprep.subr.bf16.mxu0 0
      %531 = vmatpush1.bf16.msra.mxu0 %v497
      %532 = vmatprep.subr.bf16.mxu0 0
      %533 = vmatpush1.bf16.msra.mxu0 %v498
      %534 = vmatprep.subr.bf16.mxu0 0
      %535 = vmatpush1.bf16.msra.mxu0 %v499
      %536 = vmatprep.subr.bf16.mxu0 0
      %537 = vmatpush1.bf16.msra.mxu0 %v500
      %538 = vmatprep.subr.bf16.mxu0 0
      %539 = vmatpush1.bf16.msra.mxu0 %v501
      %540 = vmatprep.subr.bf16.mxu0 0
      %541 = vmatpush1.bf16.msra.mxu0 %v502
      %542 = vmatprep.subr.bf16.mxu0 0
      %543 = vmatpush1.bf16.msra.mxu0 %v503
      %544 = vmatprep.subr.bf16.mxu0 0
      %545 = vmatpush1.bf16.msra.mxu0 %v504
      %546 = vmatprep.subr.bf16.mxu0 0
      %547 = vmatpush1.bf16.msra.mxu0 %v505
      %548 = vmatprep.subr.bf16.mxu0 0
      %549 = vmatpush1.bf16.msra.mxu0 %v506
      %550 = vmatprep.subr.bf16.mxu0 0
      %551 = vmatpush1.bf16.msra.mxu0 %v507
      %552 = vmatprep.subr.bf16.mxu0 0
      %553 = vmatpush1.bf16.msra.mxu0 %v508
      %554 = vmatprep.subr.bf16.mxu0 0
      %555 = vmatpush1.bf16.msra.mxu0 %v509
      %556 = vmatprep.subr.bf16.mxu0 0
      %557 = vmatpush1.bf16.msra.mxu0 %v510
      %558 = vmatprep.subr.bf16.mxu0 0
      %559 = vmatpush1.bf16.msra.mxu0 %v511
      %560 = vmatprep.mubr.bf16.mxu0 %v401
      %561 = vmatmul.mubr.bf16.gmra.mrb[0].mxu0 %v400
      %v562 = vpop.f32.mrb[0].mxu0
      %v563 = vadd.f32 0.0, %v562
      %v564 = vpop.f32.mrb[0].mxu0
      %v565 = vpop.f32.mrb[0].mxu0
      %v566 = vadd.f32 0.0, %v565
      %v567 = vpop.f32.mrb[0].mxu0
      %568 = vmatprep.mubr.bf16.mxu0 %v403
      %569 = vmatmul.mubr.bf16.gmra.mrb[0].mxu0 %v402
      %v570 = vpop.f32.mrb[0].mxu0
      %v571 = vadd.f32 0.0, %v570
      %v572 = vpop.f32.mrb[0].mxu0
      %v573 = vpop.f32.mrb[0].mxu0
      %v574 = vadd.f32 0.0, %v573
      %v575 = vpop.f32.mrb[0].mxu0
      %576 = vmatprep.mubr.bf16.mxu0 %v405
      %577 = vmatmul.mubr.bf16.gmra.mrb[0].mxu0 %v404
      %v578 = vpop.f32.mrb[0].mxu0
      %v579 = vadd.f32 0.0, %v578
      %v580 = vpop.f32.mrb[0].mxu0
      %v581 = vpop.f32.mrb[0].mxu0
      %v582 = vadd.f32 0.0, %v581
      %v583 = vpop.f32.mrb[0].mxu0
      %584 = vmatprep.mubr.bf16.mxu0 %v407
      %585 = vmatmul.mubr.bf16.gmra.mrb[0].mxu0 %v406
      %v586 = vpop.f32.mrb[0].mxu0
      %v587 = vadd.f32 0.0, %v586
      %v588 = vpop.f32.mrb[0].mxu0
      %v589 = vpop.f32.mrb[0].mxu0
      %v590 = vadd.f32 0.0, %v589
      %v591 = vpop.f32.mrb[0].mxu0
      %592 = vmatprep.mubr.bf16.mxu0 %v409
      %593 = vmatmul.mubr.bf16.gmra.mrb[0].mxu0 %v408
      %v594 = vpop.f32.mrb[0].mxu0
      %v595 = vadd.f32 0.0, %v594
      %v596 = vpop.f32.mrb[0].mxu0
      %v597 = vpop.f32.mrb[0].mxu0
      %v598 = vadd.f32 0.0, %v597
      %v599 = vpop.f32.mrb[0].mxu0
      %600 = vmatprep.mubr.bf16.mxu0 %v411
      %601 = vmatmul.mubr.bf16.gmra.mrb[0].mxu0 %v410
      %v602 = vpop.f32.mrb[0].mxu0
      %v603 = vadd.f32 0.0, %v602
      %v604 = vpop.f32.mrb[0].mxu0
      %v605 = vpop.f32.mrb[0].mxu0
      %v606 = vadd.f32 0.0, %v605
      %v607 = vpop.f32.mrb[0].mxu0
      %608 = vmatprep.mubr.bf16.mxu0 %v413
      %609 = vmatmul.mubr.bf16.gmra.mrb[0].mxu0 %v412
      %v610 = vpop.f32.mrb[0].mxu0
      %v611 = vadd.f32 0.0, %v610
      %v612 = vpop.f32.mrb[0].mxu0
      %v613 = vpop.f32.mrb[0].mxu0
      %v614 = vadd.f32 0.0, %v613
      %v615 = vpop.f32.mrb[0].mxu0
      %616 = vmatprep.mubr.bf16.mxu0 %v415
      %617 = vmatmul.mubr.bf16.gmra.mrb[0].mxu0 %v414
      %v618 = vpop.f32.mrb[0].mxu0
      %v619 = vadd.f32 0.0, %v618
      %v620 = vpop.f32.mrb[0].mxu0
      %v621 = vpop.f32.mrb[0].mxu0
      %v622 = vadd.f32 0.0, %v621
      %v623 = vpop.f32.mrb[0].mxu0
      %624 = vdwg.mxu0
      %v625 = vadd.f32 %v288, %v563
      %v626 = vadd.f32 %v289, %v566
      %v627 = vadd.f32 %v290, %v571
      %v628 = vadd.f32 %v291, %v574
      %v629 = vadd.f32 %v292, %v579
      %v630 = vadd.f32 %v293, %v582
      %v631 = vadd.f32 %v294, %v587
      %v632 = vadd.f32 %v295, %v590
      %v633 = vadd.f32 %v296, %v595
      %v634 = vadd.f32 %v297, %v598
      %v635 = vadd.f32 %v298, %v603
      %v636 = vadd.f32 %v299, %v606
      %v637 = vadd.f32 %v300, %v611
      %v638 = vadd.f32 %v301, %v614
      %v639 = vadd.f32 %v302, %v619
      %v640 = vadd.f32 %v303, %v622
      %641 = vst [vmem:[#allocation2] sm:$0xff] %v625
      %642 = vst [vmem:[#allocation2 + $0x8] sm:$0xff] %v626
      %643 = vst [vmem:[#allocation2 + $0x10] sm:$0xff] %v627
      %644 = vst [vmem:[#allocation2 + $0x18] sm:$0xff] %v628
      %645 = vst [vmem:[#allocation2 + $0x20] sm:$0xff] %v629
      %646 = vst [vmem:[#allocation2 + $0x28] sm:$0xff] %v630
      %647 = vst [vmem:[#allocation2 + $0x30] sm:$0xff] %v631
      %648 = vst [vmem:[#allocation2 + $0x38] sm:$0xff] %v632
      %649 = vst [vmem:[#allocation2 + $0x40] sm:$0xff] %v633
      %650 = vst [vmem:[#allocation2 + $0x48] sm:$0xff] %v634
      %651 = vst [vmem:[#allocation2 + $0x50] sm:$0xff] %v635
      %652 = vst [vmem:[#allocation2 + $0x58] sm:$0xff] %v636
      %653 = vst [vmem:[#allocation2 + $0x60] sm:$0xff] %v637
      %654 = vst [vmem:[#allocation2 + $0x68] sm:$0xff] %v638
      %655 = vst [vmem:[#allocation2 + $0x70] sm:$0xff] %v639
      %656 = vst [vmem:[#allocation2 + $0x78] sm:$0xff] %v640
      // Predicated region
      $region37: #{net_forward.10} parent=31 // pred_check
        %p657 = pneg %p268
      $region38: #{net_forward.10} parent=31 // pred_check_branch
        %659 = sbr.rel (%p657) target = $region40
      $region39: #{net_forward.10} parent=31 // pred_region
        %v660 = vld [vmem:[#allocation2] sm:$0xff]
        %v661 = vld [vmem:[#allocation2 + $0x8] sm:$0xff]
        %v662 = vld [vmem:[#allocation2 + $0x10] sm:$0xff]
        %v663 = vld [vmem:[#allocation2 + $0x18] sm:$0xff]
        %v664 = vld [vmem:[#allocation2 + $0x20] sm:$0xff]
        %v665 = vld [vmem:[#allocation2 + $0x28] sm:$0xff]
        %v666 = vld [vmem:[#allocation2 + $0x30] sm:$0xff]
        %v667 = vld [vmem:[#allocation2 + $0x38] sm:$0xff]
        %v668 = vld [vmem:[#allocation2 + $0x40] sm:$0xff]
        %v669 = vld [vmem:[#allocation2 + $0x48] sm:$0xff]
        %v670 = vld [vmem:[#allocation2 + $0x50] sm:$0xff]
        %v671 = vld [vmem:[#allocation2 + $0x58] sm:$0xff]
        %v672 = vld [vmem:[#allocation2 + $0x60] sm:$0xff]
        %v673 = vld [vmem:[#allocation2 + $0x68] sm:$0xff]
        %v674 = vld [vmem:[#allocation2 + $0x70] sm:$0xff]
        %v675 = vld [vmem:[#allocation2 + $0x78] sm:$0xff]
        %v676 = vld [vmem:[%s257] sm:$0x1]
        %v678 = vlaneseq
        %v679 = vshrl.u32 %v678, 7
        %v680 = vsub.s32 0, %v679
        %v681 = vrot.slane %v676, %v680
        %v683 = vadd.f32 %v660, %v681
        %v684 = vadd.f32 %v661, %v681
        %v685 = vadd.f32 %v662, %v681
        %v686 = vadd.f32 %v663, %v681
        %v687 = vadd.f32 %v664, %v681
        %v688 = vadd.f32 %v665, %v681
        %v689 = vadd.f32 %v666, %v681
        %v690 = vadd.f32 %v667, %v681
        %v691 = vadd.f32 %v668, %v681
        %v692 = vadd.f32 %v669, %v681
        %v693 = vadd.f32 %v670, %v681
        %v694 = vadd.f32 %v671, %v681
        %v695 = vadd.f32 %v672, %v681
        %v696 = vadd.f32 %v673, %v681
        %v697 = vadd.f32 %v674, %v681
        %v698 = vadd.f32 %v675, %v681
        %699 = vst [vmem:[%s265] sm:$0xff] %v683
        %700 = vst [vmem:[%s265 + $0x8] sm:$0xff] %v684
        %701 = vst [vmem:[%s265 + $0x10] sm:$0xff] %v685
        %702 = vst [vmem:[%s265 + $0x18] sm:$0xff] %v686
        %703 = vst [vmem:[%s265 + $0x20] sm:$0xff] %v687
        %704 = vst [vmem:[%s265 + $0x28] sm:$0xff] %v688
        %705 = vst [vmem:[%s265 + $0x30] sm:$0xff] %v689
        %706 = vst [vmem:[%s265 + $0x38] sm:$0xff] %v690
        %707 = vst [vmem:[%s265 + $0x40] sm:$0xff] %v691
        %708 = vst [vmem:[%s265 + $0x48] sm:$0xff] %v692
        %709 = vst [vmem:[%s265 + $0x50] sm:$0xff] %v693
        %710 = vst [vmem:[%s265 + $0x58] sm:$0xff] %v694
        %711 = vst [vmem:[%s265 + $0x60] sm:$0xff] %v695
        %712 = vst [vmem:[%s265 + $0x68] sm:$0xff] %v696
        %713 = vst [vmem:[%s265 + $0x70] sm:$0xff] %v697
        %714 = vst [vmem:[%s265 + $0x78] sm:$0xff] %v698
      $region40: #{net_forward.10} parent=31 // pred_fallthru
        _
      %s715 = smul.u32 16, %s19
      %p716 = scmp.lt.s32.totalorder %s715, 175
      %s717 = scalar_select %p716, %s715, 175
      %p718 = scmp.lt.s32.totalorder %s20, 0
      %s719 = scalar_select %p718, %s20, 0
      %s720 = sadd.s32 %s719, %s717
      %s721 = smul.addr %s720, 8
      %s722 = scalar_lea.vmem %s3, %s721
      // Predicated region
      $region41: #{net_forward.10} parent=31 // pred_check
        %p723 = pneg %p135
      $region42: #{net_forward.10} parent=31 // pred_check_branch
        %725 = sbr.rel (%p723) target = $region44
      $region43: #{net_forward.10} parent=31 // pred_region
        %s726 = smul.u32 16, %s19
      $region44: #{net_forward.10} parent=31 // pred_fallthru
        _
    $region32: #{net_forward.10} parent=5 // pred_fallthru
      _
    %p727 = scmp.le.s32.totalorder 2, %s9
    // Predicated region
    $region45: #{net_forward.10} parent=5 // pred_check
      %p728 = pneg %p727
    $region46: #{net_forward.10} parent=5 // pred_check_branch
      %730 = sbr.rel (%p728) target = $region48
    $region47: #{net_forward.10} parent=5 // pred_region
      %s731 = ssub.s32 %s9, 2
      // Predicated region
      $region49: #{net_forward.10} parent=47 // pred_check
        %p732 = pneg %p141
      $region50: #{net_forward.10} parent=47 // pred_check_branch
        %734 = sbr.rel (%p732) target = $region52
      $region51: #{net_forward.10} parent=47 // pred_region
        %s735 = smul.u32 16, %s22
        %p736 = scmp.lt.s32.totalorder %s735, 175
        %s737 = scalar_select %p736, %s735, 175
        %p738 = scmp.lt.s32.totalorder %s23, 0
        %s739 = scalar_select %p738, %s23, 0
        %s740 = sadd.s32 %s739, %s737
        %s741 = smul.addr %s740, 8
        %s742 = scalar_lea.vmem %s3, %s741
      $region52: #{net_forward.10} parent=47 // pred_fallthru
        _
    $region48: #{net_forward.10} parent=5 // pred_fallthru
      _
  $region6: #{net_forward.10} parent=0 // loop_footer
    %s13 = sadd.s32 1, %s9
  $region7: #{net_forward.10} parent=0 // loop_footer_branch
    %8 = sbr.rel target = $region3
  $region8: #{net_forward.10} parent=0 // loop_exit
    _

// kernel: net_forward.11
$region0: #{net_forward.11}
  #allocation0 [shape = 'u32[]', space=smem, size = 0x4, offset = 0x4, fixed_abs, tag = 'smem constant byte address 0x4 - core index']
  #allocation1 [shape = 'u32[144,128]{1,0:T(1,128)}', space=vmem, size = 0x12000, scoped, tag = 'internal scratch']
  %s0 = inlined_call_operand.vmem [shape: f32[384,20], index: 0, kind: input, shape index: {}]
  %s1 = inlined_call_operand.vmem [shape: f32[384,20], index: 1, kind: input, shape index: {}]
  %s2 = inlined_call_operand.vmem [shape: f32[384,20], index: 2, kind: input, shape index: {}]
  %s3 = inlined_call_operand.vmem [shape: f32[384,20], index: 3, kind: input, shape index: {}]
  %s4 = inlined_call_operand.vmem [shape: f32[384,20], index: 4, kind: output, shape index: {}]
  %s5 = sld [smem:[#allocation0]]
  $region49: #{net_forward.11} parent=0
    _
  %s7 = ssub.s32 1, %s5
  %s8 = scalar_select 0, %s7, %s5
  loop: start=0, step=1, limit=5
  $region2: #{net_forward.11} parent=0 // loop_pre_header
    _
  $region3: #{net_forward.11} parent=0 // loop_header
    %s10 = sphi 0, %s14
    %p11 = scmp.ge.s32.totalorder %s10, 5
    %s20 = sphi 0, %s22
    %s23 = sphi 0, %s20
    %s24 = sphi 0, %s23
    %s40 = sphi 0, %s24
    %s46 = sphi 0, %s48
    %s49 = sphi 0, %s46
    %s50 = sphi 0, %s49
    %s66 = sphi 0, %s50
    %s72 = sphi 0, %s74
    %s75 = sphi 0, %s72
    %s76 = sphi 0, %s75
    %s92 = sphi 0, %s76
    %s98 = sphi 0, %s100
    %s101 = sphi 0, %s98
    %s102 = sphi 0, %s101
    %s118 = sphi 0, %s102
    %s124 = sphi 0, %s126
    %s127 = sphi 0, %s124
    %s128 = sphi 0, %s127
    %s144 = sphi 0, %s128
  $region4: #{net_forward.11} parent=0 // loop_header_branch
    %13 = sbr.rel (%p11) target = $region8
  $region5: #{net_forward.11} parent=0 // loop_body
    %s15 = ssub.s32 %s10, 1
    %s16 = ssub.s32 %s10, 2
    %s17 = sadd.s32 %s10, 1
    %s18 = ssub.s32 %s10, %s17
    %p19 = scmp.eq.s32.totalorder %s18, 0
    %s21 = sadd.s32 %s20, 1
    %s22 = scalar_select %p19, %s20, %s21
    %p25 = pneg %p19
    %p26 = scmp.eq.s32.totalorder %s10, 2
    %p27 = por %p25, %p26
    %p28 = scmp.ne.s32.totalorder %s20, %s23
    %p29 = scmp.eq.s32.totalorder %s10, 0
    %p30 = por %p28, %p29
    %p31 = scmp.ne.s32.totalorder %s20, %s23
    %p32 = scmp.eq.s32.totalorder %s15, 2
    %p33 = por %p31, %p32
    %p34 = scmp.ne.s32.totalorder %s23, %s24
    %p35 = scmp.eq.s32.totalorder %s15, 0
    %p36 = por %p34, %p35
    %p37 = scmp.ne.s32.totalorder %s23, %s24
    %p38 = scmp.eq.s32.totalorder %s16, 2
    %p39 = por %p37, %p38
    %p41 = scmp.ne.s32.totalorder %s24, %s40
    %p42 = scmp.eq.s32.totalorder %s16, 0
    %p43 = por %p41, %p42
    %s44 = ssub.s32 %s10, %s17
    %p45 = scmp.eq.s32.totalorder %s44, 0
    %s47 = sadd.s32 %s46, 1
    %s48 = scalar_select %p45, %s46, %s47
    %p51 = pneg %p45
    %p52 = scmp.eq.s32.totalorder %s10, 2
    %p53 = por %p51, %p52
    %p54 = scmp.ne.s32.totalorder %s46, %s49
    %p55 = scmp.eq.s32.totalorder %s10, 0
    %p56 = por %p54, %p55
    %p57 = scmp.ne.s32.totalorder %s46, %s49
    %p58 = scmp.eq.s32.totalorder %s15, 2
    %p59 = por %p57, %p58
    %p60 = scmp.ne.s32.totalorder %s49, %s50
    %p61 = scmp.eq.s32.totalorder %s15, 0
    %p62 = por %p60, %p61
    %p63 = scmp.ne.s32.totalorder %s49, %s50
    %p64 = scmp.eq.s32.totalorder %s16, 2
    %p65 = por %p63, %p64
    %p67 = scmp.ne.s32.totalorder %s50, %s66
    %p68 = scmp.eq.s32.totalorder %s16, 0
    %p69 = por %p67, %p68
    %s70 = ssub.s32 %s10, %s17
    %p71 = scmp.eq.s32.totalorder %s70, 0
    %s73 = sadd.s32 %s72, 1
    %s74 = scalar_select %p71, %s72, %s73
    %p77 = pneg %p71
    %p78 = scmp.eq.s32.totalorder %s10, 2
    %p79 = por %p77, %p78
    %p80 = scmp.ne.s32.totalorder %s72, %s75
    %p81 = scmp.eq.s32.totalorder %s10, 0
    %p82 = por %p80, %p81
    %p83 = scmp.ne.s32.totalorder %s72, %s75
    %p84 = scmp.eq.s32.totalorder %s15, 2
    %p85 = por %p83, %p84
    %p86 = scmp.ne.s32.totalorder %s75, %s76
    %p87 = scmp.eq.s32.totalorder %s15, 0
    %p88 = por %p86, %p87
    %p89 = scmp.ne.s32.totalorder %s75, %s76
    %p90 = scmp.eq.s32.totalorder %s16, 2
    %p91 = por %p89, %p90
    %p93 = scmp.ne.s32.totalorder %s76, %s92
    %p94 = scmp.eq.s32.totalorder %s16, 0
    %p95 = por %p93, %p94
    %s96 = ssub.s32 %s10, %s17
    %p97 = scmp.eq.s32.totalorder %s96, 0
    %s99 = sadd.s32 %s98, 1
    %s100 = scalar_select %p97, %s98, %s99
    %p103 = pneg %p97
    %p104 = scmp.eq.s32.totalorder %s10, 2
    %p105 = por %p103, %p104
    %p106 = scmp.ne.s32.totalorder %s98, %s101
    %p107 = scmp.eq.s32.totalorder %s10, 0
    %p108 = por %p106, %p107
    %p109 = scmp.ne.s32.totalorder %s98, %s101
    %p110 = scmp.eq.s32.totalorder %s15, 2
    %p111 = por %p109, %p110
    %p112 = scmp.ne.s32.totalorder %s101, %s102
    %p113 = scmp.eq.s32.totalorder %s15, 0
    %p114 = por %p112, %p113
    %p115 = scmp.ne.s32.totalorder %s101, %s102
    %p116 = scmp.eq.s32.totalorder %s16, 2
    %p117 = por %p115, %p116
    %p119 = scmp.ne.s32.totalorder %s102, %s118
    %p120 = scmp.eq.s32.totalorder %s16, 0
    %p121 = por %p119, %p120
    %s122 = ssub.s32 %s10, %s17
    %p123 = scmp.eq.s32.totalorder %s122, 0
    %s125 = sadd.s32 %s124, 1
    %s126 = scalar_select %p123, %s124, %s125
    %p129 = pneg %p123
    %p130 = scmp.eq.s32.totalorder %s10, 2
    %p131 = por %p129, %p130
    %p132 = scmp.ne.s32.totalorder %s124, %s127
    %p133 = scmp.eq.s32.totalorder %s10, 0
    %p134 = por %p132, %p133
    %p135 = scmp.ne.s32.totalorder %s124, %s127
    %p136 = scmp.eq.s32.totalorder %s15, 2
    %p137 = por %p135, %p136
    %p138 = scmp.ne.s32.totalorder %s127, %s128
    %p139 = scmp.eq.s32.totalorder %s15, 0
    %p140 = por %p138, %p139
    %p141 = scmp.ne.s32.totalorder %s127, %s128
    %p142 = scmp.eq.s32.totalorder %s16, 2
    %p143 = por %p141, %p142
    %p145 = scmp.ne.s32.totalorder %s128, %s144
    %p146 = scmp.eq.s32.totalorder %s16, 0
    %p147 = por %p145, %p146
    %p148 = scmp.le.s32.totalorder 1, %s10
    %p149 = scmp.lt.s32.totalorder %s10, 4
    %p150 = pnand %p148, %p149
    %p151 = pneg %p150
    // Predicated region
    $region9: #{net_forward.11} parent=5 // pred_check
      _
    $region10: #{net_forward.11} parent=5 // pred_check_branch
      %153 = sbr.rel (%p150) target = $region12
    $region11: #{net_forward.11} parent=5 // pred_region
      %s154 = ssub.s32 %s10, 1
    $region12: #{net_forward.11} parent=5 // pred_fallthru
      _
    %p155 = scmp.lt.s32.totalorder %s10, 3
    // Predicated region
    $region13: #{net_forward.11} parent=5 // pred_check
      %p156 = pneg %p155
    $region14: #{net_forward.11} parent=5 // pred_check_branch
      %158 = sbr.rel (%p156) target = $region16
    $region15: #{net_forward.11} parent=5 // pred_region
      // Predicated region
      $region17: #{net_forward.11} parent=15 // pred_check
        %p159 = pneg %p30
      $region18: #{net_forward.11} parent=15 // pred_check_branch
        %161 = sbr.rel (%p159) target = $region20
      $region19: #{net_forward.11} parent=15 // pred_region
        %s162 = smul.u32 16, %s10
        %p163 = scmp.lt.s32.totalorder %s162, 47
        %s164 = scalar_select %p163, %s162, 47
        %s165 = smul.addr %s164, 8
        %s166 = scalar_lea.vmem %s0, %s165
        %s167 = smul.u32 16, %s10
      $region20: #{net_forward.11} parent=15 // pred_fallthru
        _
      // Predicated region
      $region21: #{net_forward.11} parent=15 // pred_check
        %p168 = pneg %p56
      $region22: #{net_forward.11} parent=15 // pred_check_branch
        %170 = sbr.rel (%p168) target = $region24
      $region23: #{net_forward.11} parent=15 // pred_region
        %s171 = smul.u32 16, %s10
        %p172 = scmp.lt.s32.totalorder %s171, 47
        %s173 = scalar_select %p172, %s171, 47
        %s174 = smul.addr %s173, 8
        %s175 = scalar_lea.vmem %s1, %s174
        %s176 = smul.u32 16, %s10
      $region24: #{net_forward.11} parent=15 // pred_fallthru
        _
      // Predicated region
      $region25: #{net_forward.11} parent=15 // pred_check
        %p177 = pneg %p82
      $region26: #{net_forward.11} parent=15 // pred_check_branch
        %179 = sbr.rel (%p177) target = $region28
      $region27: #{net_forward.11} parent=15 // pred_region
        %s180 = smul.u32 16, %s10
        %p181 = scmp.lt.s32.totalorder %s180, 47
        %s182 = scalar_select %p181, %s180, 47
        %s183 = smul.addr %s182, 8
        %s184 = scalar_lea.vmem %s2, %s183
        %s185 = smul.u32 16, %s10
      $region28: #{net_forward.11} parent=15 // pred_fallthru
        _
      // Predicated region
      $region29: #{net_forward.11} parent=15 // pred_check
        %p186 = pneg %p108
      $region30: #{net_forward.11} parent=15 // pred_check_branch
        %188 = sbr.rel (%p186) target = $region32
      $region31: #{net_forward.11} parent=15 // pred_region
        %s189 = smul.u32 16, %s10
        %p190 = scmp.lt.s32.totalorder %s189, 47
        %s191 = scalar_select %p190, %s189, 47
        %s192 = smul.addr %s191, 8
        %s193 = scalar_lea.vmem %s3, %s192
        %s194 = smul.u32 16, %s10
      $region32: #{net_forward.11} parent=15 // pred_fallthru
        _
    $region16: #{net_forward.11} parent=5 // pred_fallthru
      _
    %p195 = scmp.le.s32.totalorder 1, %s10
    %p196 = scmp.lt.s32.totalorder %s10, 4
    %p197 = pnand %p195, %p196
    %p198 = pneg %p197
    // Predicated region
    $region33: #{net_forward.11} parent=5 // pred_check
      _
    $region34: #{net_forward.11} parent=5 // pred_check_branch
      %200 = sbr.rel (%p197) target = $region36
    $region35: #{net_forward.11} parent=5 // pred_region
      %s201 = ssub.s32 %s10, 1
      %s202 = smul.u32 16, %s15
      %p203 = scmp.lt.s32.totalorder %s202, 47
      %s204 = scalar_select %p203, %s202, 47
      %s205 = smul.addr %s204, 8
      %s206 = scalar_lea.vmem %s0, %s205
      %p207 = pneg %p36
      %p208 = pneg %p33
      %s209 = smul.u32 16, %s15
      %p210 = scmp.lt.s32.totalorder %s209, 47
      %s211 = scalar_select %p210, %s209, 47
      %s212 = smul.addr %s211, 8
      %s213 = scalar_lea.vmem %s1, %s212
      %p214 = pneg %p62
      %p215 = pneg %p59
      %s216 = smul.u32 16, %s15
      %p217 = scmp.lt.s32.totalorder %s216, 47
      %s218 = scalar_select %p217, %s216, 47
      %s219 = smul.addr %s218, 8
      %s220 = scalar_lea.vmem %s2, %s219
      %p221 = pneg %p88
      %p222 = pneg %p85
      %s223 = smul.u32 16, %s15
      %p224 = scmp.lt.s32.totalorder %s223, 47
      %s225 = scalar_select %p224, %s223, 47
      %s226 = smul.addr %s225, 8
      %s227 = scalar_lea.vmem %s3, %s226
      %p228 = pneg %p114
      %p229 = pneg %p111
      %p230 = pneg %p140
      %p231 = pneg %p137
      %s232 = smul.u32 16, %s15
      %p233 = scmp.lt.s32.totalorder %s232, 47
      %s234 = scalar_select %p233, %s232, 47
      %s235 = smul.addr %s234, 8
      %s236 = scalar_lea.vmem %s4, %s235
      %s237 = smul.u32 16, %s15
      %p238 = scmp.lt.s32.totalorder %s237, 47
      %s239 = scalar_select %p238, %s237, 47
      %s240 = smul.addr %s239, 8
      %s241 = scalar_lea.vmem %s0, %s240
      %s242 = smul.u32 16, %s15
      %s243 = smul.u32 16, %s15
      %p244 = scmp.lt.s32.totalorder %s243, 47
      %s245 = scalar_select %p244, %s243, 47
      %s246 = smul.addr %s245, 8
      %s247 = scalar_lea.vmem %s1, %s246
      %s248 = smul.u32 16, %s15
      %s249 = smul.u32 16, %s15
      %p250 = scmp.lt.s32.totalorder %s249, 47
      %s251 = scalar_select %p250, %s249, 47
      %s252 = smul.addr %s251, 8
      %s253 = scalar_lea.vmem %s2, %s252
      %s254 = smul.u32 16, %s15
      %s255 = smul.u32 16, %s15
      %p256 = scmp.lt.s32.totalorder %s255, 47
      %s257 = scalar_select %p256, %s255, 47
      %s258 = smul.addr %s257, 8
      %s259 = scalar_lea.vmem %s3, %s258
      %s260 = smul.u32 16, %s15
      %s261 = smul.u32 16, %s15
      %p262 = scmp.lt.s32.totalorder %s261, 47
      %s263 = scalar_select %p262, %s261, 47
      %s264 = smul.addr %s263, 8
      %s265 = scalar_lea.vmem %s4, %s264
      %s266 = smul.u32 16, %s15
      %v267 = vld [vmem:[%s241] sm:$0xff]
      %v268 = vld [vmem:[%s241 + $0x8] sm:$0xff]
      %v269 = vld [vmem:[%s241 + $0x10] sm:$0xff]
      %v270 = vld [vmem:[%s241 + $0x18] sm:$0xff]
      %v271 = vld [vmem:[%s241 + $0x20] sm:$0xff]
      %v272 = vld [vmem:[%s241 + $0x28] sm:$0xff]
      %v273 = vld [vmem:[%s241 + $0x30] sm:$0xff]
      %v274 = vld [vmem:[%s241 + $0x38] sm:$0xff]
      %v275 = vld [vmem:[%s241 + $0x40] sm:$0xff]
      %v276 = vld [vmem:[%s241 + $0x48] sm:$0xff]
      %v277 = vld [vmem:[%s241 + $0x50] sm:$0xff]
      %v278 = vld [vmem:[%s241 + $0x58] sm:$0xff]
      %v279 = vld [vmem:[%s241 + $0x60] sm:$0xff]
      %v280 = vld [vmem:[%s241 + $0x68] sm:$0xff]
      %v281 = vld [vmem:[%s241 + $0x70] sm:$0xff]
      %v282 = vld [vmem:[%s241 + $0x78] sm:$0xff]
      %v283 = vld [vmem:[%s247] sm:$0xff]
      %v284 = vld [vmem:[%s247 + $0x8] sm:$0xff]
      %v285 = vld [vmem:[%s247 + $0x10] sm:$0xff]
      %v286 = vld [vmem:[%s247 + $0x18] sm:$0xff]
      %v287 = vld [vmem:[%s247 + $0x20] sm:$0xff]
      %v288 = vld [vmem:[%s247 + $0x28] sm:$0xff]
      %v289 = vld [vmem:[%s247 + $0x30] sm:$0xff]
      %v290 = vld [vmem:[%s247 + $0x38] sm:$0xff]
      %v291 = vld [vmem:[%s247 + $0x40] sm:$0xff]
      %v292 = vld [vmem:[%s247 + $0x48] sm:$0xff]
      %v293 = vld [vmem:[%s247 + $0x50] sm:$0xff]
      %v294 = vld [vmem:[%s247 + $0x58] sm:$0xff]
      %v295 = vld [vmem:[%s247 + $0x60] sm:$0xff]
      %v296 = vld [vmem:[%s247 + $0x68] sm:$0xff]
      %v297 = vld [vmem:[%s247 + $0x70] sm:$0xff]
      %v298 = vld [vmem:[%s247 + $0x78] sm:$0xff]
      %v299 = vmax.f32 %v267, %v283
      %v300 = vmax.f32 %v268, %v284
      %v301 = vmax.f32 %v269, %v285
      %v302 = vmax.f32 %v270, %v286
      %v303 = vmax.f32 %v271, %v287
      %v304 = vmax.f32 %v272, %v288
      %v305 = vmax.f32 %v273, %v289
      %v306 = vmax.f32 %v274, %v290
      %v307 = vmax.f32 %v275, %v291
      %v308 = vmax.f32 %v276, %v292
      %v309 = vmax.f32 %v277, %v293
      %v310 = vmax.f32 %v278, %v294
      %v311 = vmax.f32 %v279, %v295
      %v312 = vmax.f32 %v280, %v296
      %v313 = vmax.f32 %v281, %v297
      %v314 = vmax.f32 %v282, %v298
      %v315 = vld [vmem:[%s253] sm:$0xff]
      %v316 = vld [vmem:[%s253 + $0x8] sm:$0xff]
      %v317 = vld [vmem:[%s253 + $0x10] sm:$0xff]
      %v318 = vld [vmem:[%s253 + $0x18] sm:$0xff]
      %v319 = vld [vmem:[%s253 + $0x20] sm:$0xff]
      %v320 = vld [vmem:[%s253 + $0x28] sm:$0xff]
      %v321 = vld [vmem:[%s253 + $0x30] sm:$0xff]
      %v322 = vld [vmem:[%s253 + $0x38] sm:$0xff]
      %v323 = vld [vmem:[%s253 + $0x40] sm:$0xff]
      %v324 = vld [vmem:[%s253 + $0x48] sm:$0xff]
      %v325 = vld [vmem:[%s253 + $0x50] sm:$0xff]
      %v326 = vld [vmem:[%s253 + $0x58] sm:$0xff]
      %v327 = vld [vmem:[%s253 + $0x60] sm:$0xff]
      %v328 = vld [vmem:[%s253 + $0x68] sm:$0xff]
      %v329 = vld [vmem:[%s253 + $0x70] sm:$0xff]
      %v330 = vld [vmem:[%s253 + $0x78] sm:$0xff]
      %v331 = vld [vmem:[%s259] sm:$0xff]
      %v332 = vld [vmem:[%s259 + $0x8] sm:$0xff]
      %v333 = vld [vmem:[%s259 + $0x10] sm:$0xff]
      %v334 = vld [vmem:[%s259 + $0x18] sm:$0xff]
      %v335 = vld [vmem:[%s259 + $0x20] sm:$0xff]
      %v336 = vld [vmem:[%s259 + $0x28] sm:$0xff]
      %v337 = vld [vmem:[%s259 + $0x30] sm:$0xff]
      %v338 = vld [vmem:[%s259 + $0x38] sm:$0xff]
      %v339 = vld [vmem:[%s259 + $0x40] sm:$0xff]
      %v340 = vld [vmem:[%s259 + $0x48] sm:$0xff]
      %v341 = vld [vmem:[%s259 + $0x50] sm:$0xff]
      %v342 = vld [vmem:[%s259 + $0x58] sm:$0xff]
      %v343 = vld [vmem:[%s259 + $0x60] sm:$0xff]
      %v344 = vld [vmem:[%s259 + $0x68] sm:$0xff]
      %v345 = vld [vmem:[%s259 + $0x70] sm:$0xff]
      %v346 = vld [vmem:[%s259 + $0x78] sm:$0xff]
      %v347 = vmax.f32 %v315, %v331
      %v348 = vmax.f32 %v316, %v332
      %v349 = vmax.f32 %v317, %v333
      %v350 = vmax.f32 %v318, %v334
      %v351 = vmax.f32 %v319, %v335
      %v352 = vmax.f32 %v320, %v336
      %v353 = vmax.f32 %v321, %v337
      %v354 = vmax.f32 %v322, %v338
      %v355 = vmax.f32 %v323, %v339
      %v356 = vmax.f32 %v324, %v340
      %v357 = vmax.f32 %v325, %v341
      %v358 = vmax.f32 %v326, %v342
      %v359 = vmax.f32 %v327, %v343
      %v360 = vmax.f32 %v328, %v344
      %v361 = vmax.f32 %v329, %v345
      %v362 = vmax.f32 %v330, %v346
      %v363 = vmax.f32 %v299, %v347
      %v364 = vmax.f32 %v300, %v348
      %v365 = vmax.f32 %v301, %v349
      %v366 = vmax.f32 %v302, %v350
      %v367 = vmax.f32 %v303, %v351
      %v368 = vmax.f32 %v304, %v352
      %v369 = vmax.f32 %v305, %v353
      %v370 = vmax.f32 %v306, %v354
      %v371 = vmax.f32 %v307, %v355
      %v372 = vmax.f32 %v308, %v356
      %v373 = vmax.f32 %v309, %v357
      %v374 = vmax.f32 %v310, %v358
      %v375 = vmax.f32 %v311, %v359
      %v376 = vmax.f32 %v312, %v360
      %v377 = vmax.f32 %v313, %v361
      %v378 = vmax.f32 %v314, %v362
      %v379 = vmax.f32 %v363, 0.0
      %v380 = vmax.f32 %v364, 0.0
      %v381 = vmax.f32 %v365, 0.0
      %v382 = vmax.f32 %v366, 0.0
      %v383 = vmax.f32 %v367, 0.0
      %v384 = vmax.f32 %v368, 0.0
      %v385 = vmax.f32 %v369, 0.0
      %v386 = vmax.f32 %v370, 0.0
      %v387 = vmax.f32 %v371, 0.0
      %v388 = vmax.f32 %v372, 0.0
      %v389 = vmax.f32 %v373, 0.0
      %v390 = vmax.f32 %v374, 0.0
      %v391 = vmax.f32 %v375, 0.0
      %v392 = vmax.f32 %v376, 0.0
      %v393 = vmax.f32 %v377, 0.0
      %v394 = vmax.f32 %v378, 0.0
      %vm395 = vcmask 162816
      %396 = vst.msk [vmem:[%s265] sm:$0xff] %vm395, %v379
      %397 = vst.msk [vmem:[%s265 + $0x8] sm:$0xff] %vm395, %v380
      %398 = vst.msk [vmem:[%s265 + $0x10] sm:$0xff] %vm395, %v381
      %399 = vst.msk [vmem:[%s265 + $0x18] sm:$0xff] %vm395, %v382
      %400 = vst.msk [vmem:[%s265 + $0x20] sm:$0xff] %vm395, %v383
      %401 = vst.msk [vmem:[%s265 + $0x28] sm:$0xff] %vm395, %v384
      %402 = vst.msk [vmem:[%s265 + $0x30] sm:$0xff] %vm395, %v385
      %403 = vst.msk [vmem:[%s265 + $0x38] sm:$0xff] %vm395, %v386
      %404 = vst.msk [vmem:[%s265 + $0x40] sm:$0xff] %vm395, %v387
      %405 = vst.msk [vmem:[%s265 + $0x48] sm:$0xff] %vm395, %v388
      %406 = vst.msk [vmem:[%s265 + $0x50] sm:$0xff] %vm395, %v389
      %407 = vst.msk [vmem:[%s265 + $0x58] sm:$0xff] %vm395, %v390
      %408 = vst.msk [vmem:[%s265 + $0x60] sm:$0xff] %vm395, %v391
      %409 = vst.msk [vmem:[%s265 + $0x68] sm:$0xff] %vm395, %v392
      %410 = vst.msk [vmem:[%s265 + $0x70] sm:$0xff] %vm395, %v393
      %411 = vst.msk [vmem:[%s265 + $0x78] sm:$0xff] %vm395, %v394
      %s412 = smul.u32 16, %s15
      %p413 = scmp.lt.s32.totalorder %s412, 47
      %s414 = scalar_select %p413, %s412, 47
      %s415 = smul.addr %s414, 8
      %s416 = scalar_lea.vmem %s4, %s415
      // Predicated region
      $region37: #{net_forward.11} parent=35 // pred_check
        %p417 = pneg %p137
      $region38: #{net_forward.11} parent=35 // pred_check_branch
        %419 = sbr.rel (%p417) target = $region40
      $region39: #{net_forward.11} parent=35 // pred_region
        %s420 = smul.u32 16, %s15
      $region40: #{net_forward.11} parent=35 // pred_fallthru
        _
    $region36: #{net_forward.11} parent=5 // pred_fallthru
      _
    %p421 = scmp.le.s32.totalorder 2, %s10
    // Predicated region
    $region41: #{net_forward.11} parent=5 // pred_check
      %p422 = pneg %p421
    $region42: #{net_forward.11} parent=5 // pred_check_branch
      %424 = sbr.rel (%p422) target = $region44
    $region43: #{net_forward.11} parent=5 // pred_region
      %s425 = ssub.s32 %s10, 2
      // Predicated region
      $region45: #{net_forward.11} parent=43 // pred_check
        %p426 = pneg %p143
      $region46: #{net_forward.11} parent=43 // pred_check_branch
        %428 = sbr.rel (%p426) target = $region48
      $region47: #{net_forward.11} parent=43 // pred_region
        %s429 = smul.u32 16, %s16
        %p430 = scmp.lt.s32.totalorder %s429, 47
        %s431 = scalar_select %p430, %s429, 47
        %s432 = smul.addr %s431, 8
        %s433 = scalar_lea.vmem %s4, %s432
      $region48: #{net_forward.11} parent=43 // pred_fallthru
        _
    $region44: #{net_forward.11} parent=5 // pred_fallthru
      _
  $region6: #{net_forward.11} parent=0 // loop_footer
    %s14 = sadd.s32 1, %s10
  $region7: #{net_forward.11} parent=0 // loop_footer_branch
    %9 = sbr.rel target = $region3
  $region8: #{net_forward.11} parent=0 // loop_exit
    _

// kernel: net_forward.12
$region0: #{net_forward.12}
  #allocation0 [shape = 'u32[]', space=smem, size = 0x4, offset = 0x4, fixed_abs, tag = 'smem constant byte address 0x4 - core index']
  #allocation1 [shape = 'u32[144,128]{1,0:T(1,128)}', space=vmem, size = 0x12000, scoped, tag = 'internal scratch']
  #allocation2 [shape = 'f32[128,128]{1,0:T(8,128)}', space=vmem, size = 0x10000, scoped, tag = 'scratch operand']
  %s0 = inlined_call_operand.vmem [shape: bf16[256,512], index: 0, kind: input, shape index: {}]
  %s1 = inlined_call_operand.vmem [shape: bf16[512,128], index: 1, kind: input, shape index: {}]
  %s2 = inlined_call_operand.vmem [shape: f32[1,128], index: 2, kind: input, shape index: {}]
  %s3 = inlined_call_operand.vmem [shape: f32[256,128], index: 3, kind: output, shape index: {}]
  %s4 = sld [smem:[#allocation0]]
  $region53: #{net_forward.12} parent=0
    _
  %s6 = ssub.s32 1, %s4
  %s7 = scalar_select 0, %s6, %s4
  loop: start=0, step=1, limit=4
  $region2: #{net_forward.12} parent=0 // loop_pre_header
    _
  $region3: #{net_forward.12} parent=0 // loop_header
    %s9 = sphi 0, %s13
    %p10 = scmp.ge.s32.totalorder %s9, 4
    %s16 = sphi 0, %s35
    %s17 = sphi 0, %s31
    %s18 = sphi 0, %s27
    %s19 = sphi 0, %s16
    %s20 = sphi 0, %s17
    %s21 = sphi 0, %s18
    %s22 = sphi 0, %s19
    %s23 = sphi 0, %s20
    %s24 = sphi 0, %s21
    %s40 = sphi 0, %s42
    %s43 = sphi 0, %s40
    %s44 = sphi 0, %s43
    %s60 = sphi 0, %s44
    %s68 = sphi 0, %s70
    %s71 = sphi 0, %s68
    %s72 = sphi 0, %s71
    %s88 = sphi 0, %s72
    %s94 = sphi 0, %s96
    %s97 = sphi 0, %s94
    %s98 = sphi 0, %s97
    %s114 = sphi 0, %s98
    %s122 = sphi 0, %s124
    %s125 = sphi 0, %s122
    %s126 = sphi 0, %s125
    %s142 = sphi 0, %s126
  $region4: #{net_forward.12} parent=0 // loop_header_branch
    %12 = sbr.rel (%p10) target = $region8
  $region5: #{net_forward.12} parent=0 // loop_body
    %s14 = ssub.s32 %s9, 1
    %s15 = ssub.s32 %s9, 2
    %s25 = sadd.s32 1, %s18
    %p26 = scmp.ge.s32.totalorder %s25, 1
    %s27 = scalar_select %p26, 0, %s25
    %s28 = sadd.s32 1, %s17
    %s29 = scalar_select %p26, %s28, %s17
    %p30 = scmp.ge.s32.totalorder %s29, 1
    %s31 = scalar_select %p30, 0, %s29
    %s32 = sadd.s32 1, %s16
    %s33 = scalar_select %p30, %s32, %s16
    %p34 = scmp.ge.s32.totalorder %s33, 2
    %s35 = scalar_select %p34, 0, %s33
    %s36 = ssub.s32 %s16, %s35
    %s37 = ssub.s32 %s18, %s27
    %s38 = sor.u32 %s36, %s37
    %p39 = scmp.eq.s32.totalorder %s38, 0
    %s41 = sadd.s32 %s40, 1
    %s42 = scalar_select %p39, %s40, %s41
    %p45 = pneg %p39
    %p46 = scmp.eq.s32.totalorder %s9, 1
    %p47 = por %p45, %p46
    %p48 = scmp.ne.s32.totalorder %s40, %s43
    %p49 = scmp.eq.s32.totalorder %s9, 0
    %p50 = por %p48, %p49
    %p51 = scmp.ne.s32.totalorder %s40, %s43
    %p52 = scmp.eq.s32.totalorder %s14, 1
    %p53 = por %p51, %p52
    %p54 = scmp.ne.s32.totalorder %s43, %s44
    %p55 = scmp.eq.s32.totalorder %s14, 0
    %p56 = por %p54, %p55
    %p57 = scmp.ne.s32.totalorder %s43, %s44
    %p58 = scmp.eq.s32.totalorder %s15, 1
    %p59 = por %p57, %p58
    %p61 = scmp.ne.s32.totalorder %s44, %s60
    %p62 = scmp.eq.s32.totalorder %s15, 0
    %p63 = por %p61, %p62
    %s64 = ssub.s32 %s18, %s27
    %s65 = ssub.s32 %s17, %s31
    %s66 = sor.u32 %s64, %s65
    %p67 = scmp.eq.s32.totalorder %s66, 0
    %s69 = sadd.s32 %s68, 1
    %s70 = scalar_select %p67, %s68, %s69
    %p73 = pneg %p67
    %p74 = scmp.eq.s32.totalorder %s9, 1
    %p75 = por %p73, %p74
    %p76 = scmp.ne.s32.totalorder %s68, %s71
    %p77 = scmp.eq.s32.totalorder %s9, 0
    %p78 = por %p76, %p77
    %p79 = scmp.ne.s32.totalorder %s68, %s71
    %p80 = scmp.eq.s32.totalorder %s14, 1
    %p81 = por %p79, %p80
    %p82 = scmp.ne.s32.totalorder %s71, %s72
    %p83 = scmp.eq.s32.totalorder %s14, 0
    %p84 = por %p82, %p83
    %p85 = scmp.ne.s32.totalorder %s71, %s72
    %p86 = scmp.eq.s32.totalorder %s15, 1
    %p87 = por %p85, %p86
    %p89 = scmp.ne.s32.totalorder %s72, %s88
    %p90 = scmp.eq.s32.totalorder %s15, 0
    %p91 = por %p89, %p90
    %s92 = ssub.s32 %s17, %s31
    %p93 = scmp.eq.s32.totalorder %s92, 0
    %s95 = sadd.s32 %s94, 1
    %s96 = scalar_select %p93, %s94, %s95
    %p99 = pneg %p93
    %p100 = scmp.eq.s32.totalorder %s9, 1
    %p101 = por %p99, %p100
    %p102 = scmp.ne.s32.totalorder %s94, %s97
    %p103 = scmp.eq.s32.totalorder %s9, 0
    %p104 = por %p102, %p103
    %p105 = scmp.ne.s32.totalorder %s94, %s97
    %p106 = scmp.eq.s32.totalorder %s14, 1
    %p107 = por %p105, %p106
    %p108 = scmp.ne.s32.totalorder %s97, %s98
    %p109 = scmp.eq.s32.totalorder %s14, 0
    %p110 = por %p108, %p109
    %p111 = scmp.ne.s32.totalorder %s97, %s98
    %p112 = scmp.eq.s32.totalorder %s15, 1
    %p113 = por %p111, %p112
    %p115 = scmp.ne.s32.totalorder %s98, %s114
    %p116 = scmp.eq.s32.totalorder %s15, 0
    %p117 = por %p115, %p116
    %s118 = ssub.s32 %s16, %s35
    %s119 = ssub.s32 %s17, %s31
    %s120 = sor.u32 %s118, %s119
    %p121 = scmp.eq.s32.totalorder %s120, 0
    %s123 = sadd.s32 %s122, 1
    %s124 = scalar_select %p121, %s122, %s123
    %p127 = pneg %p121
    %p128 = scmp.eq.s32.totalorder %s9, 1
    %p129 = por %p127, %p128
    %p130 = scmp.ne.s32.totalorder %s122, %s125
    %p131 = scmp.eq.s32.totalorder %s9, 0
    %p132 = por %p130, %p131
    %p133 = scmp.ne.s32.totalorder %s122, %s125
    %p134 = scmp.eq.s32.totalorder %s14, 1
    %p135 = por %p133, %p134
    %p136 = scmp.ne.s32.totalorder %s125, %s126
    %p137 = scmp.eq.s32.totalorder %s14, 0
    %p138 = por %p136, %p137
    %p139 = scmp.ne.s32.totalorder %s125, %s126
    %p140 = scmp.eq.s32.totalorder %s15, 1
    %p141 = por %p139, %p140
    %p143 = scmp.ne.s32.totalorder %s126, %s142
    %p144 = scmp.eq.s32.totalorder %s15, 0
    %p145 = por %p143, %p144
    %p146 = scmp.le.s32.totalorder 1, %s9
    %p147 = scmp.lt.s32.totalorder %s9, 3
    %p148 = pnand %p146, %p147
    %p149 = pneg %p148
    // Predicated region
    $region9: #{net_forward.12} parent=5 // pred_check
      _
    $region10: #{net_forward.12} parent=5 // pred_check_branch
      %151 = sbr.rel (%p148) target = $region12
    $region11: #{net_forward.12} parent=5 // pred_region
      %s152 = ssub.s32 %s9, 1
      // Predicated region
      $region13: #{net_forward.12} parent=11 // pred_check
        %p153 = pneg %p84
      $region14: #{net_forward.12} parent=11 // pred_check_branch
        %155 = sbr.rel (%p153) target = $region16
      $region15: #{net_forward.12} parent=11 // pred_region
        %s156 = smul.u32 64, %s21
        %p157 = scmp.lt.s32.totalorder %s156, 63
        %s158 = scalar_select %p157, %s156, 63
        %p159 = scmp.lt.s32.totalorder %s20, 0
        %s160 = scalar_select %p159, %s20, 0
        %s161 = sadd.s32 %s160, %s158
        %s162 = smul.addr %s161, 4
        %s163 = scalar_lea.vmem %s1, %s162
        %s164 = smul.u32 64, %s21
      $region16: #{net_forward.12} parent=11 // pred_fallthru
        _
      // Predicated region
      $region17: #{net_forward.12} parent=11 // pred_check
        %p165 = pneg %p110
      $region18: #{net_forward.12} parent=11 // pred_check_branch
        %167 = sbr.rel (%p165) target = $region20
      $region19: #{net_forward.12} parent=11 // pred_region
        %p168 = scmp.lt.s32.totalorder %s20, 0
        %s169 = scalar_select %p168, %s20, 0
        %s170 = scalar_lea.vmem %s2, %s169
      $region20: #{net_forward.12} parent=11 // pred_fallthru
        _
    $region12: #{net_forward.12} parent=5 // pred_fallthru
      _
    %p171 = scmp.lt.s32.totalorder %s9, 2
    // Predicated region
    $region21: #{net_forward.12} parent=5 // pred_check
      %p172 = pneg %p171
    $region22: #{net_forward.12} parent=5 // pred_check_branch
      %174 = sbr.rel (%p172) target = $region24
    $region23: #{net_forward.12} parent=5 // pred_region
      // Predicated region
      $region25: #{net_forward.12} parent=23 // pred_check
        %p175 = pneg %p50
      $region26: #{net_forward.12} parent=23 // pred_check_branch
        %177 = sbr.rel (%p175) target = $region28
      $region27: #{net_forward.12} parent=23 // pred_region
        %s178 = smul.u32 16, %s16
        %s179 = smul.u32 4, %s18
        %p180 = scmp.lt.s32.totalorder %s178, 31
        %s181 = scalar_select %p180, %s178, 31
        %p182 = scmp.lt.s32.totalorder %s179, 3
        %s183 = scalar_select %p182, %s179, 3
        %s184 = smul.addr %s181, 4
        %s185 = sadd.s32 %s183, %s184
        %s186 = smul.addr %s185, 4
        %s187 = scalar_lea.vmem %s0, %s186
        %s188 = smul.u32 16, %s16
        %s189 = smul.u32 4, %s18
      $region28: #{net_forward.12} parent=23 // pred_fallthru
        _
    $region24: #{net_forward.12} parent=5 // pred_fallthru
      _
    %p190 = scmp.le.s32.totalorder 1, %s9
    %p191 = scmp.lt.s32.totalorder %s9, 3
    %p192 = pnand %p190, %p191
    %p193 = pneg %p192
    // Predicated region
    $region29: #{net_forward.12} parent=5 // pred_check
      _
    $region30: #{net_forward.12} parent=5 // pred_check_branch
      %195 = sbr.rel (%p192) target = $region32
    $region31: #{net_forward.12} parent=5 // pred_region
      %s196 = ssub.s32 %s9, 1
      %s197 = smul.u32 16, %s19
      %s198 = smul.u32 4, %s21
      %p199 = scmp.lt.s32.totalorder %s197, 31
      %s200 = scalar_select %p199, %s197, 31
      %p201 = scmp.lt.s32.totalorder %s198, 3
      %s202 = scalar_select %p201, %s198, 3
      %s203 = smul.addr %s200, 4
      %s204 = sadd.s32 %s202, %s203
      %s205 = smul.addr %s204, 4
      %s206 = scalar_lea.vmem %s0, %s205
      %p207 = pneg %p56
      %p208 = pneg %p53
      %s209 = smul.u32 64, %s21
      %p210 = scmp.lt.s32.totalorder %s209, 63
      %s211 = scalar_select %p210, %s209, 63
      %p212 = scmp.lt.s32.totalorder %s20, 0
      %s213 = scalar_select %p212, %s20, 0
      %s214 = sadd.s32 %s213, %s211
      %s215 = smul.addr %s214, 4
      %s216 = scalar_lea.vmem %s1, %s215
      %p217 = pneg %p84
      %p218 = pneg %p81
      %p219 = scmp.lt.s32.totalorder %s20, 0
      %s220 = scalar_select %p219, %s20, 0
      %s221 = scalar_lea.vmem %s2, %s220
      %p222 = pneg %p110
      %p223 = pneg %p107
      %p224 = pneg %p138
      %p225 = pneg %p135
      %s226 = smul.u32 16, %s19
      %p227 = scmp.lt.s32.totalorder %s226, 31
      %s228 = scalar_select %p227, %s226, 31
      %p229 = scmp.lt.s32.totalorder %s20, 0
      %s230 = scalar_select %p229, %s20, 0
      %s231 = sadd.s32 %s230, %s228
      %s232 = smul.addr %s231, 8
      %s233 = scalar_lea.vmem %s3, %s232
      %s234 = smul.u32 16, %s19
      %s235 = smul.u32 4, %s21
      %p236 = scmp.lt.s32.totalorder %s234, 31
      %s237 = scalar_select %p236, %s234, 31
      %p238 = scmp.lt.s32.totalorder %s235, 3
      %s239 = scalar_select %p238, %s235, 3
      %s240 = smul.addr %s237, 4
      %s241 = sadd.s32 %s239, %s240
      %s242 = smul.addr %s241, 4
      %s243 = scalar_lea.vmem %s0, %s242
      %s244 = smul.u32 16, %s19
      %s245 = smul.u32 4, %s21
      %s246 = smul.u32 64, %s21
      %p247 = scmp.lt.s32.totalorder %s246, 63
      %s248 = scalar_select %p247, %s246, 63
      %p249 = scmp.lt.s32.totalorder %s20, 0
      %s250 = scalar_select %p249, %s20, 0
      %s251 = sadd.s32 %s250, %s248
      %s252 = smul.addr %s251, 4
      %s253 = scalar_lea.vmem %s1, %s252
      %s254 = smul.u32 64, %s21
      %p255 = scmp.lt.s32.totalorder %s20, 0
      %s256 = scalar_select %p255, %s20, 0
      %s257 = scalar_lea.vmem %s2, %s256
      %s258 = smul.u32 16, %s19
      %p259 = scmp.lt.s32.totalorder %s258, 31
      %s260 = scalar_select %p259, %s258, 31
      %p261 = scmp.lt.s32.totalorder %s20, 0
      %s262 = scalar_select %p261, %s20, 0
      %s263 = sadd.s32 %s262, %s260
      %s264 = smul.addr %s263, 8
      %s265 = scalar_lea.vmem %s3, %s264
      %s266 = smul.u32 16, %s19
      %p268 = scmp.eq.s32.totalorder %s21, 0
      // Predicated region
      $region33: #{net_forward.12} parent=31 // pred_check
        %p269 = pneg %p268
      $region34: #{net_forward.12} parent=31 // pred_check_branch
        %271 = sbr.rel (%p269) target = $region36
      $region35: #{net_forward.12} parent=31 // pred_region
        %272 = vst [vmem:[#allocation2] sm:$0xff] 0.0
        %273 = vst [vmem:[#allocation2 + $0x8] sm:$0xff] 0.0
        %274 = vst [vmem:[#allocation2 + $0x10] sm:$0xff] 0.0
        %275 = vst [vmem:[#allocation2 + $0x18] sm:$0xff] 0.0
        %276 = vst [vmem:[#allocation2 + $0x20] sm:$0xff] 0.0
        %277 = vst [vmem:[#allocation2 + $0x28] sm:$0xff] 0.0
        %278 = vst [vmem:[#allocation2 + $0x30] sm:$0xff] 0.0
        %279 = vst [vmem:[#allocation2 + $0x38] sm:$0xff] 0.0
        %280 = vst [vmem:[#allocation2 + $0x40] sm:$0xff] 0.0
        %281 = vst [vmem:[#allocation2 + $0x48] sm:$0xff] 0.0
        %282 = vst [vmem:[#allocation2 + $0x50] sm:$0xff] 0.0
        %283 = vst [vmem:[#allocation2 + $0x58] sm:$0xff] 0.0
        %284 = vst [vmem:[#allocation2 + $0x60] sm:$0xff] 0.0
        %285 = vst [vmem:[#allocation2 + $0x68] sm:$0xff] 0.0
        %286 = vst [vmem:[#allocation2 + $0x70] sm:$0xff] 0.0
        %287 = vst [vmem:[#allocation2 + $0x78] sm:$0xff] 0.0
      $region36: #{net_forward.12} parent=31 // pred_fallthru
        _
      %v288 = vld [vmem:[#allocation2] sm:$0xff]
      %v289 = vld [vmem:[#allocation2 + $0x8] sm:$0xff]
      %v290 = vld [vmem:[#allocation2 + $0x10] sm:$0xff]
      %v291 = vld [vmem:[#allocation2 + $0x18] sm:$0xff]
      %v292 = vld [vmem:[#allocation2 + $0x20] sm:$0xff]
      %v293 = vld [vmem:[#allocation2 + $0x28] sm:$0xff]
      %v294 = vld [vmem:[#allocation2 + $0x30] sm:$0xff]
      %v295 = vld [vmem:[#allocation2 + $0x38] sm:$0xff]
      %v296 = vld [vmem:[#allocation2 + $0x40] sm:$0xff]
      %v297 = vld [vmem:[#allocation2 + $0x48] sm:$0xff]
      %v298 = vld [vmem:[#allocation2 + $0x50] sm:$0xff]
      %v299 = vld [vmem:[#allocation2 + $0x58] sm:$0xff]
      %v300 = vld [vmem:[#allocation2 + $0x60] sm:$0xff]
      %v301 = vld [vmem:[#allocation2 + $0x68] sm:$0xff]
      %v302 = vld [vmem:[#allocation2 + $0x70] sm:$0xff]
      %v303 = vld [vmem:[#allocation2 + $0x78] sm:$0xff]
      %v304 = vld [vmem:[%s243] sm:$0xff]
      %v305 = vld [vmem:[%s243 + $0x8] sm:$0xff]
      %v306 = vld [vmem:[%s243 + $0x10] sm:$0xff]
      %v307 = vld [vmem:[%s243 + $0x18] sm:$0xff]
      %v308 = vld [vmem:[%s243 + $0x20] sm:$0xff]
      %v309 = vld [vmem:[%s243 + $0x28] sm:$0xff]
      %v310 = vld [vmem:[%s243 + $0x30] sm:$0xff]
      %v311 = vld [vmem:[%s243 + $0x38] sm:$0xff]
      %v312 = vld [vmem:[%s243 + $0x40] sm:$0xff]
      %v313 = vld [vmem:[%s243 + $0x48] sm:$0xff]
      %v314 = vld [vmem:[%s243 + $0x50] sm:$0xff]
      %v315 = vld [vmem:[%s243 + $0x58] sm:$0xff]
      %v316 = vld [vmem:[%s243 + $0x60] sm:$0xff]
      %v317 = vld [vmem:[%s243 + $0x68] sm:$0xff]
      %v318 = vld [vmem:[%s243 + $0x70] sm:$0xff]
      %v319 = vld [vmem:[%s243 + $0x78] sm:$0xff]
      %v320 = vld [vmem:[%s243 + $0x80] sm:$0xff]
      %v321 = vld [vmem:[%s243 + $0x88] sm:$0xff]
      %v322 = vld [vmem:[%s243 + $0x90] sm:$0xff]
      %v323 = vld [vmem:[%s243 + $0x98] sm:$0xff]
      %v324 = vld [vmem:[%s243 + $0xa0] sm:$0xff]
      %v325 = vld [vmem:[%s243 + $0xa8] sm:$0xff]
      %v326 = vld [vmem:[%s243 + $0xb0] sm:$0xff]
      %v327 = vld [vmem:[%s243 + $0xb8] sm:$0xff]
      %v328 = vld [vmem:[%s243 + $0xc0] sm:$0xff]
      %v329 = vld [vmem:[%s243 + $0xc8] sm:$0xff]
      %v330 = vld [vmem:[%s243 + $0xd0] sm:$0xff]
      %v331 = vld [vmem:[%s243 + $0xd8] sm:$0xff]
      %v332 = vld [vmem:[%s243 + $0xe0] sm:$0xff]
      %v333 = vld [vmem:[%s243 + $0xe8] sm:$0xff]
      %v334 = vld [vmem:[%s243 + $0xf0] sm:$0xff]
      %v335 = vld [vmem:[%s243 + $0xf8] sm:$0xff]
      %v336 = vld [vmem:[%s253] sm:$0xf]
      %v337 = vld [vmem:[%s253 + $0x4] sm:$0xf]
      %v338 = vld [vmem:[%s253 + $0x8] sm:$0xf]
      %v339 = vld [vmem:[%s253 + $0xc] sm:$0xf]
      %v340 = vld [vmem:[%s253 + $0x10] sm:$0xf]
      %v341 = vld [vmem:[%s253 + $0x14] sm:$0xf]
      %v342 = vld [vmem:[%s253 + $0x18] sm:$0xf]
      %v343 = vld [vmem:[%s253 + $0x1c] sm:$0xf]
      %v344 = vld [vmem:[%s253 + $0x20] sm:$0xf]
      %v345 = vld [vmem:[%s253 + $0x24] sm:$0xf]
      %v346 = vld [vmem:[%s253 + $0x28] sm:$0xf]
      %v347 = vld [vmem:[%s253 + $0x2c] sm:$0xf]
      %v348 = vld [vmem:[%s253 + $0x30] sm:$0xf]
      %v349 = vld [vmem:[%s253 + $0x34] sm:$0xf]
      %v350 = vld [vmem:[%s253 + $0x38] sm:$0xf]
      %v351 = vld [vmem:[%s253 + $0x3c] sm:$0xf]
      %v352 = vld [vmem:[%s253 + $0x40] sm:$0xf]
      %v353 = vld [vmem:[%s253 + $0x44] sm:$0xf]
      %v354 = vld [vmem:[%s253 + $0x48] sm:$0xf]
      %v355 = vld [vmem:[%s253 + $0x4c] sm:$0xf]
      %v356 = vld [vmem:[%s253 + $0x50] sm:$0xf]
      %v357 = vld [vmem:[%s253 + $0x54] sm:$0xf]
      %v358 = vld [vmem:[%s253 + $0x58] sm:$0xf]
      %v359 = vld [vmem:[%s253 + $0x5c] sm:$0xf]
      %v360 = vld [vmem:[%s253 + $0x60] sm:$0xf]
      %v361 = vld [vmem:[%s253 + $0x64] sm:$0xf]
      %v362 = vld [vmem:[%s253 + $0x68] sm:$0xf]
      %v363 = vld [vmem:[%s253 + $0x6c] sm:$0xf]
      %v364 = vld [vmem:[%s253 + $0x70] sm:$0xf]
      %v365 = vld [vmem:[%s253 + $0x74] sm:$0xf]
      %v366 = vld [vmem:[%s253 + $0x78] sm:$0xf]
      %v367 = vld [vmem:[%s253 + $0x7c] sm:$0xf]
      %v368 = vld [vmem:[%s253 + $0x80] sm:$0xf]
      %v369 = vld [vmem:[%s253 + $0x84] sm:$0xf]
      %v370 = vld [vmem:[%s253 + $0x88] sm:$0xf]
      %v371 = vld [vmem:[%s253 + $0x8c] sm:$0xf]
      %v372 = vld [vmem:[%s253 + $0x90] sm:$0xf]
      %v373 = vld [vmem:[%s253 + $0x94] sm:$0xf]
      %v374 = vld [vmem:[%s253 + $0x98] sm:$0xf]
      %v375 = vld [vmem:[%s253 + $0x9c] sm:$0xf]
      %v376 = vld [vmem:[%s253 + $0xa0] sm:$0xf]
      %v377 = vld [vmem:[%s253 + $0xa4] sm:$0xf]
      %v378 = vld [vmem:[%s253 + $0xa8] sm:$0xf]
      %v379 = vld [vmem:[%s253 + $0xac] sm:$0xf]
      %v380 = vld [vmem:[%s253 + $0xb0] sm:$0xf]
      %v381 = vld [vmem:[%s253 + $0xb4] sm:$0xf]
      %v382 = vld [vmem:[%s253 + $0xb8] sm:$0xf]
      %v383 = vld [vmem:[%s253 + $0xbc] sm:$0xf]
      %v384 = vld [vmem:[%s253 + $0xc0] sm:$0xf]
      %v385 = vld [vmem:[%s253 + $0xc4] sm:$0xf]
      %v386 = vld [vmem:[%s253 + $0xc8] sm:$0xf]
      %v387 = vld [vmem:[%s253 + $0xcc] sm:$0xf]
      %v388 = vld [vmem:[%s253 + $0xd0] sm:$0xf]
      %v389 = vld [vmem:[%s253 + $0xd4] sm:$0xf]
      %v390 = vld [vmem:[%s253 + $0xd8] sm:$0xf]
      %v391 = vld [vmem:[%s253 + $0xdc] sm:$0xf]
      %v392 = vld [vmem:[%s253 + $0xe0] sm:$0xf]
      %v393 = vld [vmem:[%s253 + $0xe4] sm:$0xf]
      %v394 = vld [vmem:[%s253 + $0xe8] sm:$0xf]
      %v395 = vld [vmem:[%s253 + $0xec] sm:$0xf]
      %v396 = vld [vmem:[%s253 + $0xf0] sm:$0xf]
      %v397 = vld [vmem:[%s253 + $0xf4] sm:$0xf]
      %v398 = vld [vmem:[%s253 + $0xf8] sm:$0xf]
      %v399 = vld [vmem:[%s253 + $0xfc] sm:$0xf]
      %v432 = vunpack.c.l.b16 %v304
      %v433 = vunpack.c.h.b16 %v304
      %v434 = vunpack.c.l.b16 %v305
      %v435 = vunpack.c.h.b16 %v305
      %v436 = vunpack.c.l.b16 %v306
      %v437 = vunpack.c.h.b16 %v306
      %v438 = vunpack.c.l.b16 %v307
      %v439 = vunpack.c.h.b16 %v307
      %v440 = vunpack.c.l.b16 %v308
      %v441 = vunpack.c.h.b16 %v308
      %v442 = vunpack.c.l.b16 %v309
      %v443 = vunpack.c.h.b16 %v309
      %v444 = vunpack.c.l.b16 %v310
      %v445 = vunpack.c.h.b16 %v310
      %v446 = vunpack.c.l.b16 %v311
      %v447 = vunpack.c.h.b16 %v311
      %v448 = vunpack.c.l.b16 %v312
      %v449 = vunpack.c.h.b16 %v312
      %v450 = vunpack.c.l.b16 %v313
      %v451 = vunpack.c.h.b16 %v313
      %v452 = vunpack.c.l.b16 %v314
      %v453 = vunpack.c.h.b16 %v314
      %v454 = vunpack.c.l.b16 %v315
      %v455 = vunpack.c.h.b16 %v315
      %v456 = vunpack.c.l.b16 %v316
      %v457 = vunpack.c.h.b16 %v316
      %v458 = vunpack.c.l.b16 %v317
      %v459 = vunpack.c.h.b16 %v317
      %v460 = vunpack.c.l.b16 %v318
      %v461 = vunpack.c.h.b16 %v318
      %v462 = vunpack.c.l.b16 %v319
      %v463 = vunpack.c.h.b16 %v319
      %v464 = vunpack.c.l.b16 %v320
      %v465 = vunpack.c.h.b16 %v320
      %v466 = vunpack.c.l.b16 %v321
      %v467 = vunpack.c.h.b16 %v321
      %v468 = vunpack.c.l.b16 %v322
      %v469 = vunpack.c.h.b16 %v322
      %v470 = vunpack.c.l.b16 %v323
      %v471 = vunpack.c.h.b16 %v323
      %v472 = vunpack.c.l.b16 %v324
      %v473 = vunpack.c.h.b16 %v324
      %v474 = vunpack.c.l.b16 %v325
      %v475 = vunpack.c.h.b16 %v325
      %v476 = vunpack.c.l.b16 %v326
      %v477 = vunpack.c.h.b16 %v326
      %v478 = vunpack.c.l.b16 %v327
      %v479 = vunpack.c.h.b16 %v327
      %v480 = vunpack.c.l.b16 %v328
      %v481 = vunpack.c.h.b16 %v328
      %v482 = vunpack.c.l.b16 %v329
      %v483 = vunpack.c.h.b16 %v329
      %v484 = vunpack.c.l.b16 %v330
      %v485 = vunpack.c.h.b16 %v330
      %v486 = vunpack.c.l.b16 %v331
      %v487 = vunpack.c.h.b16 %v331
      %v488 = vunpack.c.l.b16 %v332
      %v489 = vunpack.c.h.b16 %v332
      %v490 = vunpack.c.l.b16 %v333
      %v491 = vunpack.c.h.b16 %v333
      %v492 = vunpack.c.l.b16 %v334
      %v493 = vunpack.c.h.b16 %v334
      %v494 = vunpack.c.l.b16 %v335
      %v495 = vunpack.c.h.b16 %v335
      %v496 = vpack.c.b16 %v436, %v432
      %v497 = vpack.c.b16 %v437, %v433
      %v498 = vpack.c.b16 %v438, %v434
      %v499 = vpack.c.b16 %v439, %v435
      %v500 = vpack.c.b16 %v444, %v440
      %v501 = vpack.c.b16 %v445, %v441
      %v502 = vpack.c.b16 %v446, %v442
      %v503 = vpack.c.b16 %v447, %v443
      %v504 = vpack.c.b16 %v452, %v448
      %v505 = vpack.c.b16 %v453, %v449
      %v506 = vpack.c.b16 %v454, %v450
      %v507 = vpack.c.b16 %v455, %v451
      %v508 = vpack.c.b16 %v460, %v456
      %v509 = vpack.c.b16 %v461, %v457
      %v510 = vpack.c.b16 %v462, %v458
      %v511 = vpack.c.b16 %v463, %v459
      %v512 = vpack.c.b16 %v468, %v464
      %v513 = vpack.c.b16 %v469, %v465
      %v514 = vpack.c.b16 %v470, %v466
      %v515 = vpack.c.b16 %v471, %v467
      %v516 = vpack.c.b16 %v476, %v472
      %v517 = vpack.c.b16 %v477, %v473
      %v518 = vpack.c.b16 %v478, %v474
      %v519 = vpack.c.b16 %v479, %v475
      %v520 = vpack.c.b16 %v484, %v480
      %v521 = vpack.c.b16 %v485, %v481
      %v522 = vpack.c.b16 %v486, %v482
      %v523 = vpack.c.b16 %v487, %v483
      %v524 = vpack.c.b16 %v492, %v488
      %v525 = vpack.c.b16 %v493, %v489
      %v526 = vpack.c.b16 %v494, %v490
      %v527 = vpack.c.b16 %v495, %v491
      %v624 = vunpack.c.l.b16 %v336
      %v625 = vunpack.c.l.b16 %v337
      %v626 = vunpack.c.l.b16 %v338
      %v627 = vunpack.c.l.b16 %v339
      %v628 = vunpack.c.l.b16 %v340
      %v629 = vunpack.c.l.b16 %v341
      %v630 = vunpack.c.l.b16 %v342
      %v631 = vunpack.c.l.b16 %v343
      %v632 = vunpack.c.l.b16 %v344
      %v633 = vunpack.c.l.b16 %v345
      %v634 = vunpack.c.l.b16 %v346
      %v635 = vunpack.c.l.b16 %v347
      %v636 = vunpack.c.l.b16 %v348
      %v637 = vunpack.c.l.b16 %v349
      %v638 = vunpack.c.l.b16 %v350
      %v639 = vunpack.c.l.b16 %v351
      %v640 = vunpack.c.l.b16 %v352
      %v641 = vunpack.c.l.b16 %v353
      %v642 = vunpack.c.l.b16 %v354
      %v643 = vunpack.c.l.b16 %v355
      %v644 = vunpack.c.l.b16 %v356
      %v645 = vunpack.c.l.b16 %v357
      %v646 = vunpack.c.l.b16 %v358
      %v647 = vunpack.c.l.b16 %v359
      %v648 = vunpack.c.l.b16 %v360
      %v649 = vunpack.c.l.b16 %v361
      %v650 = vunpack.c.l.b16 %v362
      %v651 = vunpack.c.l.b16 %v363
      %v652 = vunpack.c.l.b16 %v364
      %v653 = vunpack.c.l.b16 %v365
      %v654 = vunpack.c.l.b16 %v366
      %v655 = vunpack.c.l.b16 %v367
      %v656 = vunpack.c.l.b16 %v368
      %v657 = vunpack.c.l.b16 %v369
      %v658 = vunpack.c.l.b16 %v370
      %v659 = vunpack.c.l.b16 %v371
      %v660 = vunpack.c.l.b16 %v372
      %v661 = vunpack.c.l.b16 %v373
      %v662 = vunpack.c.l.b16 %v374
      %v663 = vunpack.c.l.b16 %v375
      %v664 = vunpack.c.l.b16 %v376
      %v665 = vunpack.c.l.b16 %v377
      %v666 = vunpack.c.l.b16 %v378
      %v667 = vunpack.c.l.b16 %v379
      %v668 = vunpack.c.l.b16 %v380
      %v669 = vunpack.c.l.b16 %v381
      %v670 = vunpack.c.l.b16 %v382
      %v671 = vunpack.c.l.b16 %v383
      %v672 = vunpack.c.l.b16 %v384
      %v673 = vunpack.c.l.b16 %v385
      %v674 = vunpack.c.l.b16 %v386
      %v675 = vunpack.c.l.b16 %v387
      %v676 = vunpack.c.l.b16 %v388
      %v677 = vunpack.c.l.b16 %v389
      %v678 = vunpack.c.l.b16 %v390
      %v679 = vunpack.c.l.b16 %v391
      %v680 = vunpack.c.l.b16 %v392
      %v681 = vunpack.c.l.b16 %v393
      %v682 = vunpack.c.l.b16 %v394
      %v683 = vunpack.c.l.b16 %v395
      %v684 = vunpack.c.l.b16 %v396
      %v685 = vunpack.c.l.b16 %v397
      %v686 = vunpack.c.l.b16 %v398
      %v687 = vunpack.c.l.b16 %v399
      %v688 = vpack.c.b16 %v625, %v624
      %v689 = vpack.c.b16 %v627, %v626
      %v690 = vpack.c.b16 %v629, %v628
      %v691 = vpack.c.b16 %v631, %v630
      %v692 = vpack.c.b16 %v633, %v632
      %v693 = vpack.c.b16 %v635, %v634
      %v694 = vpack.c.b16 %v637, %v636
      %v695 = vpack.c.b16 %v639, %v638
      %v696 = vpack.c.b16 %v641, %v640
      %v697 = vpack.c.b16 %v643, %v642
      %v698 = vpack.c.b16 %v645, %v644
      %v699 = vpack.c.b16 %v647, %v646
      %v700 = vpack.c.b16 %v649, %v648
      %v701 = vpack.c.b16 %v651, %v650
      %v702 = vpack.c.b16 %v653, %v652
      %v703 = vpack.c.b16 %v655, %v654
      %v704 = vpack.c.b16 %v657, %v656
      %v705 = vpack.c.b16 %v659, %v658
      %v706 = vpack.c.b16 %v661, %v660
      %v707 = vpack.c.b16 %v663, %v662
      %v708 = vpack.c.b16 %v665, %v664
      %v709 = vpack.c.b16 %v667, %v666
      %v710 = vpack.c.b16 %v669, %v668
      %v711 = vpack.c.b16 %v671, %v670
      %v712 = vpack.c.b16 %v673, %v672
      %v713 = vpack.c.b16 %v675, %v674
      %v714 = vpack.c.b16 %v677, %v676
      %v715 = vpack.c.b16 %v679, %v678
      %v716 = vpack.c.b16 %v681, %v680
      %v717 = vpack.c.b16 %v683, %v682
      %v718 = vpack.c.b16 %v685, %v684
      %v719 = vpack.c.b16 %v687, %v686
      %752 = vmatprep.subr.bf16.mxu0 0
      %753 = vmatpush1.bf16.msra.mxu0 %v688
      %754 = vmatprep.subr.bf16.mxu0 0
      %755 = vmatpush1.bf16.msra.mxu0 %v689
      %756 = vmatprep.subr.bf16.mxu0 0
      %757 = vmatpush1.bf16.msra.mxu0 %v690
      %758 = vmatprep.subr.bf16.mxu0 0
      %759 = vmatpush1.bf16.msra.mxu0 %v691
      %760 = vmatprep.subr.bf16.mxu0 0
      %761 = vmatpush1.bf16.msra.mxu0 %v692
      %762 = vmatprep.subr.bf16.mxu0 0
      %763 = vmatpush1.bf16.msra.mxu0 %v693
      %764 = vmatprep.subr.bf16.mxu0 0
      %765 = vmatpush1.bf16.msra.mxu0 %v694
      %766 = vmatprep.subr.bf16.mxu0 0
      %767 = vmatpush1.bf16.msra.mxu0 %v695
      %768 = vmatprep.subr.bf16.mxu0 0
      %769 = vmatpush1.bf16.msra.mxu0 %v696
      %770 = vmatprep.subr.bf16.mxu0 0
      %771 = vmatpush1.bf16.msra.mxu0 %v697
      %772 = vmatprep.subr.bf16.mxu0 0
      %773 = vmatpush1.bf16.msra.mxu0 %v698
      %774 = vmatprep.subr.bf16.mxu0 0
      %775 = vmatpush1.bf16.msra.mxu0 %v699
      %776 = vmatprep.subr.bf16.mxu0 0
      %777 = vmatpush1.bf16.msra.mxu0 %v700
      %778 = vmatprep.subr.bf16.mxu0 0
      %779 = vmatpush1.bf16.msra.mxu0 %v701
      %780 = vmatprep.subr.bf16.mxu0 0
      %781 = vmatpush1.bf16.msra.mxu0 %v702
      %782 = vmatprep.subr.bf16.mxu0 0
      %783 = vmatpush1.bf16.msra.mxu0 %v703
      %784 = vmatprep.mubr.bf16.mxu0 %v497
      %785 = vmatmul.mubr.bf16.gmra.mrb[0].mxu0 %v496
      %v786 = vpop.f32.mrb[0].mxu0
      %v787 = vadd.f32 0.0, %v786
      %v788 = vpop.f32.mrb[0].mxu0
      %v789 = vpop.f32.mrb[0].mxu0
      %v790 = vadd.f32 0.0, %v789
      %v791 = vpop.f32.mrb[0].mxu0
      %792 = vmatprep.mubr.bf16.mxu0 %v501
      %793 = vmatmul.mubr.bf16.gmra.mrb[0].mxu0 %v500
      %v794 = vpop.f32.mrb[0].mxu0
      %v795 = vadd.f32 0.0, %v794
      %v796 = vpop.f32.mrb[0].mxu0
      %v797 = vpop.f32.mrb[0].mxu0
      %v798 = vadd.f32 0.0, %v797
      %v799 = vpop.f32.mrb[0].mxu0
      %800 = vmatprep.mubr.bf16.mxu0 %v505
      %801 = vmatmul.mubr.bf16.gmra.mrb[0].mxu0 %v504
      %v802 = vpop.f32.mrb[0].mxu0
      %v803 = vadd.f32 0.0, %v802
      %v804 = vpop.f32.mrb[0].mxu0
      %v805 = vpop.f32.mrb[0].mxu0
      %v806 = vadd.f32 0.0, %v805
      %v807 = vpop.f32.mrb[0].mxu0
      %808 = vmatprep.mubr.bf16.mxu0 %v509
      %809 = vmatmul.mubr.bf16.gmra.mrb[0].mxu0 %v508
      %v810 = vpop.f32.mrb[0].mxu0
      %v811 = vadd.f32 0.0, %v810
      %v812 = vpop.f32.mrb[0].mxu0
      %v813 = vpop.f32.mrb[0].mxu0
      %v814 = vadd.f32 0.0, %v813
      %v815 = vpop.f32.mrb[0].mxu0
      %816 = vmatprep.mubr.bf16.mxu0 %v513
      %817 = vmatmul.mubr.bf16.gmra.mrb[0].mxu0 %v512
      %v818 = vpop.f32.mrb[0].mxu0
      %v819 = vadd.f32 0.0, %v818
      %v820 = vpop.f32.mrb[0].mxu0
      %v821 = vpop.f32.mrb[0].mxu0
      %v822 = vadd.f32 0.0, %v821
      %v823 = vpop.f32.mrb[0].mxu0
      %824 = vmatprep.mubr.bf16.mxu0 %v517
      %825 = vmatmul.mubr.bf16.gmra.mrb[0].mxu0 %v516
      %v826 = vpop.f32.mrb[0].mxu0
      %v827 = vadd.f32 0.0, %v826
      %v828 = vpop.f32.mrb[0].mxu0
      %v829 = vpop.f32.mrb[0].mxu0
      %v830 = vadd.f32 0.0, %v829
      %v831 = vpop.f32.mrb[0].mxu0
      %832 = vmatprep.mubr.bf16.mxu0 %v521
      %833 = vmatmul.mubr.bf16.gmra.mrb[0].mxu0 %v520
      %v834 = vpop.f32.mrb[0].mxu0
      %v835 = vadd.f32 0.0, %v834
      %v836 = vpop.f32.mrb[0].mxu0
      %v837 = vpop.f32.mrb[0].mxu0
      %v838 = vadd.f32 0.0, %v837
      %v839 = vpop.f32.mrb[0].mxu0
      %840 = vmatprep.mubr.bf16.mxu0 %v525
      %841 = vmatmul.mubr.bf16.gmra.mrb[0].mxu0 %v524
      %v842 = vpop.f32.mrb[0].mxu0
      %v843 = vadd.f32 0.0, %v842
      %v844 = vpop.f32.mrb[0].mxu0
      %v845 = vpop.f32.mrb[0].mxu0
      %v846 = vadd.f32 0.0, %v845
      %v847 = vpop.f32.mrb[0].mxu0
      %848 = vdwg.mxu0
      %849 = vmatprep.subr.bf16.mxu0 0
      %850 = vmatpush1.bf16.msra.mxu0 %v704
      %851 = vmatprep.subr.bf16.mxu0 0
      %852 = vmatpush1.bf16.msra.mxu0 %v705
      %853 = vmatprep.subr.bf16.mxu0 0
      %854 = vmatpush1.bf16.msra.mxu0 %v706
      %855 = vmatprep.subr.bf16.mxu0 0
      %856 = vmatpush1.bf16.msra.mxu0 %v707
      %857 = vmatprep.subr.bf16.mxu0 0
      %858 = vmatpush1.bf16.msra.mxu0 %v708
      %859 = vmatprep.subr.bf16.mxu0 0
      %860 = vmatpush1.bf16.msra.mxu0 %v709
      %861 = vmatprep.subr.bf16.mxu0 0
      %862 = vmatpush1.bf16.msra.mxu0 %v710
      %863 = vmatprep.subr.bf16.mxu0 0
      %864 = vmatpush1.bf16.msra.mxu0 %v711
      %865 = vmatprep.subr.bf16.mxu0 0
      %866 = vmatpush1.bf16.msra.mxu0 %v712
      %867 = vmatprep.subr.bf16.mxu0 0
      %868 = vmatpush1.bf16.msra.mxu0 %v713
      %869 = vmatprep.subr.bf16.mxu0 0
      %870 = vmatpush1.bf16.msra.mxu0 %v714
      %871 = vmatprep.subr.bf16.mxu0 0
      %872 = vmatpush1.bf16.msra.mxu0 %v715
      %873 = vmatprep.subr.bf16.mxu0 0
      %874 = vmatpush1.bf16.msra.mxu0 %v716
      %875 = vmatprep.subr.bf16.mxu0 0
      %876 = vmatpush1.bf16.msra.mxu0 %v717
      %877 = vmatprep.subr.bf16.mxu0 0
      %878 = vmatpush1.bf16.msra.mxu0 %v718
      %879 = vmatprep.subr.bf16.mxu0 0
      %880 = vmatpush1.bf16.msra.mxu0 %v719
      %881 = vmatprep.mubr.bf16.mxu0 %v499
      %882 = vmatmul.mubr.bf16.gmra.mrb[0].mxu0 %v498
      %v883 = vpop.f32.mrb[0].mxu0
      %v884 = vadd.f32 %v787, %v883
      %v885 = vpop.f32.mrb[0].mxu0
      %v886 = vpop.f32.mrb[0].mxu0
      %v887 = vadd.f32 %v790, %v886
      %v888 = vpop.f32.mrb[0].mxu0
      %889 = vmatprep.mubr.bf16.mxu0 %v503
      %890 = vmatmul.mubr.bf16.gmra.mrb[0].mxu0 %v502
      %v891 = vpop.f32.mrb[0].mxu0
      %v892 = vadd.f32 %v795, %v891
      %v893 = vpop.f32.mrb[0].mxu0
      %v894 = vpop.f32.mrb[0].mxu0
      %v895 = vadd.f32 %v798, %v894
      %v896 = vpop.f32.mrb[0].mxu0
      %897 = vmatprep.mubr.bf16.mxu0 %v507
      %898 = vmatmul.mubr.bf16.gmra.mrb[0].mxu0 %v506
      %v899 = vpop.f32.mrb[0].mxu0
      %v900 = vadd.f32 %v803, %v899
      %v901 = vpop.f32.mrb[0].mxu0
      %v902 = vpop.f32.mrb[0].mxu0
      %v903 = vadd.f32 %v806, %v902
      %v904 = vpop.f32.mrb[0].mxu0
      %905 = vmatprep.mubr.bf16.mxu0 %v511
      %906 = vmatmul.mubr.bf16.gmra.mrb[0].mxu0 %v510
      %v907 = vpop.f32.mrb[0].mxu0
      %v908 = vadd.f32 %v811, %v907
      %v909 = vpop.f32.mrb[0].mxu0
      %v910 = vpop.f32.mrb[0].mxu0
      %v911 = vadd.f32 %v814, %v910
      %v912 = vpop.f32.mrb[0].mxu0
      %913 = vmatprep.mubr.bf16.mxu0 %v515
      %914 = vmatmul.mubr.bf16.gmra.mrb[0].mxu0 %v514
      %v915 = vpop.f32.mrb[0].mxu0
      %v916 = vadd.f32 %v819, %v915
      %v917 = vpop.f32.mrb[0].mxu0
      %v918 = vpop.f32.mrb[0].mxu0
      %v919 = vadd.f32 %v822, %v918
      %v920 = vpop.f32.mrb[0].mxu0
      %921 = vmatprep.mubr.bf16.mxu0 %v519
      %922 = vmatmul.mubr.bf16.gmra.mrb[0].mxu0 %v518
      %v923 = vpop.f32.mrb[0].mxu0
      %v924 = vadd.f32 %v827, %v923
      %v925 = vpop.f32.mrb[0].mxu0
      %v926 = vpop.f32.mrb[0].mxu0
      %v927 = vadd.f32 %v830, %v926
      %v928 = vpop.f32.mrb[0].mxu0
      %929 = vmatprep.mubr.bf16.mxu0 %v523
      %930 = vmatmul.mubr.bf16.gmra.mrb[0].mxu0 %v522
      %v931 = vpop.f32.mrb[0].mxu0
      %v932 = vadd.f32 %v835, %v931
      %v933 = vpop.f32.mrb[0].mxu0
      %v934 = vpop.f32.mrb[0].mxu0
      %v935 = vadd.f32 %v838, %v934
      %v936 = vpop.f32.mrb[0].mxu0
      %937 = vmatprep.mubr.bf16.mxu0 %v527
      %938 = vmatmul.mubr.bf16.gmra.mrb[0].mxu0 %v526
      %v939 = vpop.f32.mrb[0].mxu0
      %v940 = vadd.f32 %v843, %v939
      %v941 = vpop.f32.mrb[0].mxu0
      %v942 = vpop.f32.mrb[0].mxu0
      %v943 = vadd.f32 %v846, %v942
      %v944 = vpop.f32.mrb[0].mxu0
      %945 = vdwg.mxu0
      %v946 = vadd.f32 %v288, %v884
      %v947 = vadd.f32 %v289, %v887
      %v948 = vadd.f32 %v290, %v892
      %v949 = vadd.f32 %v291, %v895
      %v950 = vadd.f32 %v292, %v900
      %v951 = vadd.f32 %v293, %v903
      %v952 = vadd.f32 %v294, %v908
      %v953 = vadd.f32 %v295, %v911
      %v954 = vadd.f32 %v296, %v916
      %v955 = vadd.f32 %v297, %v919
      %v956 = vadd.f32 %v298, %v924
      %v957 = vadd.f32 %v299, %v927
      %v958 = vadd.f32 %v300, %v932
      %v959 = vadd.f32 %v301, %v935
      %v960 = vadd.f32 %v302, %v940
      %v961 = vadd.f32 %v303, %v943
      %962 = vst [vmem:[#allocation2] sm:$0xff] %v946
      %963 = vst [vmem:[#allocation2 + $0x8] sm:$0xff] %v947
      %964 = vst [vmem:[#allocation2 + $0x10] sm:$0xff] %v948
      %965 = vst [vmem:[#allocation2 + $0x18] sm:$0xff] %v949
      %966 = vst [vmem:[#allocation2 + $0x20] sm:$0xff] %v950
      %967 = vst [vmem:[#allocation2 + $0x28] sm:$0xff] %v951
      %968 = vst [vmem:[#allocation2 + $0x30] sm:$0xff] %v952
      %969 = vst [vmem:[#allocation2 + $0x38] sm:$0xff] %v953
      %970 = vst [vmem:[#allocation2 + $0x40] sm:$0xff] %v954
      %971 = vst [vmem:[#allocation2 + $0x48] sm:$0xff] %v955
      %972 = vst [vmem:[#allocation2 + $0x50] sm:$0xff] %v956
      %973 = vst [vmem:[#allocation2 + $0x58] sm:$0xff] %v957
      %974 = vst [vmem:[#allocation2 + $0x60] sm:$0xff] %v958
      %975 = vst [vmem:[#allocation2 + $0x68] sm:$0xff] %v959
      %976 = vst [vmem:[#allocation2 + $0x70] sm:$0xff] %v960
      %977 = vst [vmem:[#allocation2 + $0x78] sm:$0xff] %v961
      // Predicated region
      $region37: #{net_forward.12} parent=31 // pred_check
        %p978 = pneg %p268
      $region38: #{net_forward.12} parent=31 // pred_check_branch
        %980 = sbr.rel (%p978) target = $region40
      $region39: #{net_forward.12} parent=31 // pred_region
        %v981 = vld [vmem:[#allocation2] sm:$0xff]
        %v982 = vld [vmem:[#allocation2 + $0x8] sm:$0xff]
        %v983 = vld [vmem:[#allocation2 + $0x10] sm:$0xff]
        %v984 = vld [vmem:[#allocation2 + $0x18] sm:$0xff]
        %v985 = vld [vmem:[#allocation2 + $0x20] sm:$0xff]
        %v986 = vld [vmem:[#allocation2 + $0x28] sm:$0xff]
        %v987 = vld [vmem:[#allocation2 + $0x30] sm:$0xff]
        %v988 = vld [vmem:[#allocation2 + $0x38] sm:$0xff]
        %v989 = vld [vmem:[#allocation2 + $0x40] sm:$0xff]
        %v990 = vld [vmem:[#allocation2 + $0x48] sm:$0xff]
        %v991 = vld [vmem:[#allocation2 + $0x50] sm:$0xff]
        %v992 = vld [vmem:[#allocation2 + $0x58] sm:$0xff]
        %v993 = vld [vmem:[#allocation2 + $0x60] sm:$0xff]
        %v994 = vld [vmem:[#allocation2 + $0x68] sm:$0xff]
        %v995 = vld [vmem:[#allocation2 + $0x70] sm:$0xff]
        %v996 = vld [vmem:[#allocation2 + $0x78] sm:$0xff]
        %v997 = vld [vmem:[%s257] sm:$0x1]
        %v999 = vlaneseq
        %v1000 = vshrl.u32 %v999, 7
        %v1001 = vsub.s32 0, %v1000
        %v1002 = vrot.slane %v997, %v1001
        %v1004 = vadd.f32 %v981, %v1002
        %v1005 = vadd.f32 %v982, %v1002
        %v1006 = vadd.f32 %v983, %v1002
        %v1007 = vadd.f32 %v984, %v1002
        %v1008 = vadd.f32 %v985, %v1002
        %v1009 = vadd.f32 %v986, %v1002
        %v1010 = vadd.f32 %v987, %v1002
        %v1011 = vadd.f32 %v988, %v1002
        %v1012 = vadd.f32 %v989, %v1002
        %v1013 = vadd.f32 %v990, %v1002
        %v1014 = vadd.f32 %v991, %v1002
        %v1015 = vadd.f32 %v992, %v1002
        %v1016 = vadd.f32 %v993, %v1002
        %v1017 = vadd.f32 %v994, %v1002
        %v1018 = vadd.f32 %v995, %v1002
        %v1019 = vadd.f32 %v996, %v1002
        %1020 = vst [vmem:[%s265] sm:$0xff] %v1004
        %1021 = vst [vmem:[%s265 + $0x8] sm:$0xff] %v1005
        %1022 = vst [vmem:[%s265 + $0x10] sm:$0xff] %v1006
        %1023 = vst [vmem:[%s265 + $0x18] sm:$0xff] %v1007
        %1024 = vst [vmem:[%s265 + $0x20] sm:$0xff] %v1008
        %1025 = vst [vmem:[%s265 + $0x28] sm:$0xff] %v1009
        %1026 = vst [vmem:[%s265 + $0x30] sm:$0xff] %v1010
        %1027 = vst [vmem:[%s265 + $0x38] sm:$0xff] %v1011
        %1028 = vst [vmem:[%s265 + $0x40] sm:$0xff] %v1012
        %1029 = vst [vmem:[%s265 + $0x48] sm:$0xff] %v1013
        %1030 = vst [vmem:[%s265 + $0x50] sm:$0xff] %v1014
        %1031 = vst [vmem:[%s265 + $0x58] sm:$0xff] %v1015
        %1032 = vst [vmem:[%s265 + $0x60] sm:$0xff] %v1016
        %1033 = vst [vmem:[%s265 + $0x68] sm:$0xff] %v1017
        %1034 = vst [vmem:[%s265 + $0x70] sm:$0xff] %v1018
        %1035 = vst [vmem:[%s265 + $0x78] sm:$0xff] %v1019
      $region40: #{net_forward.12} parent=31 // pred_fallthru
        _
      %s1036 = smul.u32 16, %s19
      %p1037 = scmp.lt.s32.totalorder %s1036, 31
      %s1038 = scalar_select %p1037, %s1036, 31
      %p1039 = scmp.lt.s32.totalorder %s20, 0
      %s1040 = scalar_select %p1039, %s20, 0
      %s1041 = sadd.s32 %s1040, %s1038
      %s1042 = smul.addr %s1041, 8
      %s1043 = scalar_lea.vmem %s3, %s1042
      // Predicated region
      $region41: #{net_forward.12} parent=31 // pred_check
        %p1044 = pneg %p135
      $region42: #{net_forward.12} parent=31 // pred_check_branch
        %1046 = sbr.rel (%p1044) target = $region44
      $region43: #{net_forward.12} parent=31 // pred_region
        %s1047 = smul.u32 16, %s19
      $region44: #{net_forward.12} parent=31 // pred_fallthru
        _
    $region32: #{net_forward.12} parent=5 // pred_fallthru
      _
    %p1048 = scmp.le.s32.totalorder 2, %s9
    // Predicated region
    $region45: #{net_forward.12} parent=5 // pred_check
      %p1049 = pneg %p1048
    $region46: #{net_forward.12} parent=5 // pred_check_branch
      %1051 = sbr.rel (%p1049) target = $region48
    $region47: #{net_forward.12} parent=5 // pred_region
      %s1052 = ssub.s32 %s9, 2
      // Predicated region
      $region49: #{net_forward.12} parent=47 // pred_check
        %p1053 = pneg %p141
      $region50: #{net_forward.12} parent=47 // pred_check_branch
        %1055 = sbr.rel (%p1053) target = $region52
      $region51: #{net_forward.12} parent=47 // pred_region
        %s1056 = smul.u32 16, %s22
        %p1057 = scmp.lt.s32.totalorder %s1056, 31
        %s1058 = scalar_select %p1057, %s1056, 31
        %p1059 = scmp.lt.s32.totalorder %s23, 0
        %s1060 = scalar_select %p1059, %s23, 0
        %s1061 = sadd.s32 %s1060, %s1058
        %s1062 = smul.addr %s1061, 8
        %s1063 = scalar_lea.vmem %s3, %s1062
      $region52: #{net_forward.12} parent=47 // pred_fallthru
        _
    $region48: #{net_forward.12} parent=5 // pred_fallthru
      _
  $region6: #{net_forward.12} parent=0 // loop_footer
    %s13 = sadd.s32 1, %s9
  $region7: #{net_forward.12} parent=0 // loop_footer_branch
    %8 = sbr.rel target = $region3
  $region8: #{net_forward.12} parent=0 // loop_exit
    _

// kernel: net_forward.13
$region0: #{net_forward.13}
  #allocation0 [shape = 'u32[]', space=smem, size = 0x4, offset = 0x4, fixed_abs, tag = 'smem constant byte address 0x4 - core index']
  #allocation1 [shape = 'u32[144,128]{1,0:T(1,128)}', space=vmem, size = 0x12000, scoped, tag = 'internal scratch']
  %s0 = inlined_call_operand.vmem [shape: f32[128,20], index: 0, kind: input, shape index: {}]
  %s1 = inlined_call_operand.vmem [shape: f32[128,20], index: 1, kind: input, shape index: {}]
  %s2 = inlined_call_operand.vmem [shape: f32[128,20], index: 2, kind: input, shape index: {}]
  %s3 = inlined_call_operand.vmem [shape: f32[128,20], index: 3, kind: input, shape index: {}]
  %s4 = inlined_call_operand.vmem [shape: f32[128,20], index: 4, kind: output, shape index: {}]
  %s5 = sld [smem:[#allocation0]]
  $region26: #{net_forward.13} parent=0
    _
  %s7 = ssub.s32 1, %s5
  %s8 = scalar_select 0, %s7, %s5
  // Predicated region
  $region2: #{net_forward.13} parent=0 // pred_check
    _
  $region3: #{net_forward.13} parent=0 // pred_check_branch
    %10 = sbr.rel (0) target = $region5
  $region4: #{net_forward.13} parent=0 // pred_region
    _
  $region5: #{net_forward.13} parent=0 // pred_fallthru
    _
  // Predicated region
  $region6: #{net_forward.13} parent=0 // pred_check
    _
  $region7: #{net_forward.13} parent=0 // pred_check_branch
    %12 = sbr.rel (0) target = $region9
  $region8: #{net_forward.13} parent=0 // pred_region
    _
  $region9: #{net_forward.13} parent=0 // pred_fallthru
    _
  // Predicated region
  $region10: #{net_forward.13} parent=0 // pred_check
    _
  $region11: #{net_forward.13} parent=0 // pred_check_branch
    %14 = sbr.rel (0) target = $region13
  $region12: #{net_forward.13} parent=0 // pred_region
    _
  $region13: #{net_forward.13} parent=0 // pred_fallthru
    _
  // Predicated region
  $region14: #{net_forward.13} parent=0 // pred_check
    _
  $region15: #{net_forward.13} parent=0 // pred_check_branch
    %16 = sbr.rel (0) target = $region17
  $region16: #{net_forward.13} parent=0 // pred_region
    _
  $region17: #{net_forward.13} parent=0 // pred_fallthru
    _
  %v17 = vld [vmem:[%s0] sm:$0xff]
  %v18 = vld [vmem:[%s0 + $0x8] sm:$0xff]
  %v19 = vld [vmem:[%s0 + $0x10] sm:$0xff]
  %v20 = vld [vmem:[%s0 + $0x18] sm:$0xff]
  %v21 = vld [vmem:[%s0 + $0x20] sm:$0xff]
  %v22 = vld [vmem:[%s0 + $0x28] sm:$0xff]
  %v23 = vld [vmem:[%s0 + $0x30] sm:$0xff]
  %v24 = vld [vmem:[%s0 + $0x38] sm:$0xff]
  %v25 = vld [vmem:[%s0 + $0x40] sm:$0xff]
  %v26 = vld [vmem:[%s0 + $0x48] sm:$0xff]
  %v27 = vld [vmem:[%s0 + $0x50] sm:$0xff]
  %v28 = vld [vmem:[%s0 + $0x58] sm:$0xff]
  %v29 = vld [vmem:[%s0 + $0x60] sm:$0xff]
  %v30 = vld [vmem:[%s0 + $0x68] sm:$0xff]
  %v31 = vld [vmem:[%s0 + $0x70] sm:$0xff]
  %v32 = vld [vmem:[%s0 + $0x78] sm:$0xff]
  %v33 = vld [vmem:[%s1] sm:$0xff]
  %v34 = vld [vmem:[%s1 + $0x8] sm:$0xff]
  %v35 = vld [vmem:[%s1 + $0x10] sm:$0xff]
  %v36 = vld [vmem:[%s1 + $0x18] sm:$0xff]
  %v37 = vld [vmem:[%s1 + $0x20] sm:$0xff]
  %v38 = vld [vmem:[%s1 + $0x28] sm:$0xff]
  %v39 = vld [vmem:[%s1 + $0x30] sm:$0xff]
  %v40 = vld [vmem:[%s1 + $0x38] sm:$0xff]
  %v41 = vld [vmem:[%s1 + $0x40] sm:$0xff]
  %v42 = vld [vmem:[%s1 + $0x48] sm:$0xff]
  %v43 = vld [vmem:[%s1 + $0x50] sm:$0xff]
  %v44 = vld [vmem:[%s1 + $0x58] sm:$0xff]
  %v45 = vld [vmem:[%s1 + $0x60] sm:$0xff]
  %v46 = vld [vmem:[%s1 + $0x68] sm:$0xff]
  %v47 = vld [vmem:[%s1 + $0x70] sm:$0xff]
  %v48 = vld [vmem:[%s1 + $0x78] sm:$0xff]
  %v49 = vmax.f32 %v17, %v33
  %v50 = vmax.f32 %v18, %v34
  %v51 = vmax.f32 %v19, %v35
  %v52 = vmax.f32 %v20, %v36
  %v53 = vmax.f32 %v21, %v37
  %v54 = vmax.f32 %v22, %v38
  %v55 = vmax.f32 %v23, %v39
  %v56 = vmax.f32 %v24, %v40
  %v57 = vmax.f32 %v25, %v41
  %v58 = vmax.f32 %v26, %v42
  %v59 = vmax.f32 %v27, %v43
  %v60 = vmax.f32 %v28, %v44
  %v61 = vmax.f32 %v29, %v45
  %v62 = vmax.f32 %v30, %v46
  %v63 = vmax.f32 %v31, %v47
  %v64 = vmax.f32 %v32, %v48
  %v65 = vld [vmem:[%s2] sm:$0xff]
  %v66 = vld [vmem:[%s2 + $0x8] sm:$0xff]
  %v67 = vld [vmem:[%s2 + $0x10] sm:$0xff]
  %v68 = vld [vmem:[%s2 + $0x18] sm:$0xff]
  %v69 = vld [vmem:[%s2 + $0x20] sm:$0xff]
  %v70 = vld [vmem:[%s2 + $0x28] sm:$0xff]
  %v71 = vld [vmem:[%s2 + $0x30] sm:$0xff]
  %v72 = vld [vmem:[%s2 + $0x38] sm:$0xff]
  %v73 = vld [vmem:[%s2 + $0x40] sm:$0xff]
  %v74 = vld [vmem:[%s2 + $0x48] sm:$0xff]
  %v75 = vld [vmem:[%s2 + $0x50] sm:$0xff]
  %v76 = vld [vmem:[%s2 + $0x58] sm:$0xff]
  %v77 = vld [vmem:[%s2 + $0x60] sm:$0xff]
  %v78 = vld [vmem:[%s2 + $0x68] sm:$0xff]
  %v79 = vld [vmem:[%s2 + $0x70] sm:$0xff]
  %v80 = vld [vmem:[%s2 + $0x78] sm:$0xff]
  %v81 = vld [vmem:[%s3] sm:$0xff]
  %v82 = vld [vmem:[%s3 + $0x8] sm:$0xff]
  %v83 = vld [vmem:[%s3 + $0x10] sm:$0xff]
  %v84 = vld [vmem:[%s3 + $0x18] sm:$0xff]
  %v85 = vld [vmem:[%s3 + $0x20] sm:$0xff]
  %v86 = vld [vmem:[%s3 + $0x28] sm:$0xff]
  %v87 = vld [vmem:[%s3 + $0x30] sm:$0xff]
  %v88 = vld [vmem:[%s3 + $0x38] sm:$0xff]
  %v89 = vld [vmem:[%s3 + $0x40] sm:$0xff]
  %v90 = vld [vmem:[%s3 + $0x48] sm:$0xff]
  %v91 = vld [vmem:[%s3 + $0x50] sm:$0xff]
  %v92 = vld [vmem:[%s3 + $0x58] sm:$0xff]
  %v93 = vld [vmem:[%s3 + $0x60] sm:$0xff]
  %v94 = vld [vmem:[%s3 + $0x68] sm:$0xff]
  %v95 = vld [vmem:[%s3 + $0x70] sm:$0xff]
  %v96 = vld [vmem:[%s3 + $0x78] sm:$0xff]
  %v97 = vmax.f32 %v65, %v81
  %v98 = vmax.f32 %v66, %v82
  %v99 = vmax.f32 %v67, %v83
  %v100 = vmax.f32 %v68, %v84
  %v101 = vmax.f32 %v69, %v85
  %v102 = vmax.f32 %v70, %v86
  %v103 = vmax.f32 %v71, %v87
  %v104 = vmax.f32 %v72, %v88
  %v105 = vmax.f32 %v73, %v89
  %v106 = vmax.f32 %v74, %v90
  %v107 = vmax.f32 %v75, %v91
  %v108 = vmax.f32 %v76, %v92
  %v109 = vmax.f32 %v77, %v93
  %v110 = vmax.f32 %v78, %v94
  %v111 = vmax.f32 %v79, %v95
  %v112 = vmax.f32 %v80, %v96
  %v113 = vmax.f32 %v49, %v97
  %v114 = vmax.f32 %v50, %v98
  %v115 = vmax.f32 %v51, %v99
  %v116 = vmax.f32 %v52, %v100
  %v117 = vmax.f32 %v53, %v101
  %v118 = vmax.f32 %v54, %v102
  %v119 = vmax.f32 %v55, %v103
  %v120 = vmax.f32 %v56, %v104
  %v121 = vmax.f32 %v57, %v105
  %v122 = vmax.f32 %v58, %v106
  %v123 = vmax.f32 %v59, %v107
  %v124 = vmax.f32 %v60, %v108
  %v125 = vmax.f32 %v61, %v109
  %v126 = vmax.f32 %v62, %v110
  %v127 = vmax.f32 %v63, %v111
  %v128 = vmax.f32 %v64, %v112
  %v129 = vmax.f32 %v113, 0.0
  %v130 = vmax.f32 %v114, 0.0
  %v131 = vmax.f32 %v115, 0.0
  %v132 = vmax.f32 %v116, 0.0
  %v133 = vmax.f32 %v117, 0.0
  %v134 = vmax.f32 %v118, 0.0
  %v135 = vmax.f32 %v119, 0.0
  %v136 = vmax.f32 %v120, 0.0
  %v137 = vmax.f32 %v121, 0.0
  %v138 = vmax.f32 %v122, 0.0
  %v139 = vmax.f32 %v123, 0.0
  %v140 = vmax.f32 %v124, 0.0
  %v141 = vmax.f32 %v125, 0.0
  %v142 = vmax.f32 %v126, 0.0
  %v143 = vmax.f32 %v127, 0.0
  %v144 = vmax.f32 %v128, 0.0
  %vm145 = vcmask 162816
  %146 = vst.msk [vmem:[%s4] sm:$0xff] %vm145, %v129
  %147 = vst.msk [vmem:[%s4 + $0x8] sm:$0xff] %vm145, %v130
  %148 = vst.msk [vmem:[%s4 + $0x10] sm:$0xff] %vm145, %v131
  %149 = vst.msk [vmem:[%s4 + $0x18] sm:$0xff] %vm145, %v132
  %150 = vst.msk [vmem:[%s4 + $0x20] sm:$0xff] %vm145, %v133
  %151 = vst.msk [vmem:[%s4 + $0x28] sm:$0xff] %vm145, %v134
  %152 = vst.msk [vmem:[%s4 + $0x30] sm:$0xff] %vm145, %v135
  %153 = vst.msk [vmem:[%s4 + $0x38] sm:$0xff] %vm145, %v136
  %154 = vst.msk [vmem:[%s4 + $0x40] sm:$0xff] %vm145, %v137
  %155 = vst.msk [vmem:[%s4 + $0x48] sm:$0xff] %vm145, %v138
  %156 = vst.msk [vmem:[%s4 + $0x50] sm:$0xff] %vm145, %v139
  %157 = vst.msk [vmem:[%s4 + $0x58] sm:$0xff] %vm145, %v140
  %158 = vst.msk [vmem:[%s4 + $0x60] sm:$0xff] %vm145, %v141
  %159 = vst.msk [vmem:[%s4 + $0x68] sm:$0xff] %vm145, %v142
  %160 = vst.msk [vmem:[%s4 + $0x70] sm:$0xff] %vm145, %v143
  %161 = vst.msk [vmem:[%s4 + $0x78] sm:$0xff] %vm145, %v144
  // Predicated region
  $region18: #{net_forward.13} parent=0 // pred_check
    _
  $region19: #{net_forward.13} parent=0 // pred_check_branch
    %163 = sbr.rel (0) target = $region21
  $region20: #{net_forward.13} parent=0 // pred_region
    _
  $region21: #{net_forward.13} parent=0 // pred_fallthru
    _
  // Predicated region
  $region22: #{net_forward.13} parent=0 // pred_check
    _
  $region23: #{net_forward.13} parent=0 // pred_check_branch
    %165 = sbr.rel (0) target = $region25
  $region24: #{net_forward.13} parent=0 // pred_region
    _
  $region25: #{net_forward.13} parent=0 // pred_fallthru
    _

// kernel: net_forward.14
$region0: #{net_forward.14}
  #allocation0 [shape = 'u32[]', space=smem, size = 0x4, offset = 0x4, fixed_abs, tag = 'smem constant byte address 0x4 - core index']
  #allocation1 [shape = 'u32[144,128]{1,0:T(1,128)}', space=vmem, size = 0x12000, scoped, tag = 'internal scratch']
  #allocation2 [shape = 'f32[16,128]{1,0:T(8,128)}', space=vmem, size = 0x2000, scoped, tag = 'scratch operand']
  %s0 = inlined_call_operand.vmem [shape: bf16[16,384], index: 0, kind: input, shape index: {}]
  %s1 = inlined_call_operand.vmem [shape: bf16[384,128], index: 1, kind: input, shape index: {}]
  %s2 = inlined_call_operand.vmem [shape: f32[1,128], index: 2, kind: input, shape index: {}]
  %s3 = inlined_call_operand.vmem [shape: f32[16,128], index: 3, kind: output, shape index: {}]
  %s4 = sld [smem:[#allocation0]]
  $region30: #{net_forward.14} parent=0
    _
  %s6 = ssub.s32 1, %s4
  %s7 = scalar_select 0, %s6, %s4
  // Predicated region
  $region2: #{net_forward.14} parent=0 // pred_check
    _
  $region3: #{net_forward.14} parent=0 // pred_check_branch
    %9 = sbr.rel (0) target = $region5
  $region4: #{net_forward.14} parent=0 // pred_region
    _
  $region5: #{net_forward.14} parent=0 // pred_fallthru
    _
  // Predicated region
  $region6: #{net_forward.14} parent=0 // pred_check
    _
  $region7: #{net_forward.14} parent=0 // pred_check_branch
    %11 = sbr.rel (0) target = $region9
  $region8: #{net_forward.14} parent=0 // pred_region
    _
  $region9: #{net_forward.14} parent=0 // pred_fallthru
    _
  // Predicated region
  $region10: #{net_forward.14} parent=0 // pred_check
    _
  $region11: #{net_forward.14} parent=0 // pred_check_branch
    %13 = sbr.rel (0) target = $region13
  $region12: #{net_forward.14} parent=0 // pred_region
    _
  $region13: #{net_forward.14} parent=0 // pred_fallthru
    _
  %p15 = scmp.eq.s32.totalorder 0, 0
  // Predicated region
  $region14: #{net_forward.14} parent=0 // pred_check
    %p16 = pneg %p15
  $region15: #{net_forward.14} parent=0 // pred_check_branch
    %18 = sbr.rel (%p16) target = $region17
  $region16: #{net_forward.14} parent=0 // pred_region
    %19 = vst [vmem:[#allocation2] sm:$0xff] 0.0
    %20 = vst [vmem:[#allocation2 + $0x8] sm:$0xff] 0.0
  $region17: #{net_forward.14} parent=0 // pred_fallthru
    _
  %v21 = vld [vmem:[#allocation2] sm:$0xff]
  %v22 = vld [vmem:[#allocation2 + $0x8] sm:$0xff]
  %v23 = vld [vmem:[%s0] sm:$0xff]
  %v24 = vld [vmem:[%s0 + $0x8] sm:$0xf]
  %v25 = vld [vmem:[%s0 + $0xc] sm:$0xff]
  %v26 = vld [vmem:[%s0 + $0x14] sm:$0xf]
  %v27 = vld [vmem:[%s1] sm:$0xf]
  %v28 = vld [vmem:[%s1 + $0x4] sm:$0xf]
  %v29 = vld [vmem:[%s1 + $0x8] sm:$0xf]
  %v30 = vld [vmem:[%s1 + $0xc] sm:$0xf]
  %v31 = vld [vmem:[%s1 + $0x10] sm:$0xf]
  %v32 = vld [vmem:[%s1 + $0x14] sm:$0xf]
  %v33 = vld [vmem:[%s1 + $0x18] sm:$0xf]
  %v34 = vld [vmem:[%s1 + $0x1c] sm:$0xf]
  %v35 = vld [vmem:[%s1 + $0x20] sm:$0xf]
  %v36 = vld [vmem:[%s1 + $0x24] sm:$0xf]
  %v37 = vld [vmem:[%s1 + $0x28] sm:$0xf]
  %v38 = vld [vmem:[%s1 + $0x2c] sm:$0xf]
  %v39 = vld [vmem:[%s1 + $0x30] sm:$0xf]
  %v40 = vld [vmem:[%s1 + $0x34] sm:$0xf]
  %v41 = vld [vmem:[%s1 + $0x38] sm:$0xf]
  %v42 = vld [vmem:[%s1 + $0x3c] sm:$0xf]
  %v43 = vld [vmem:[%s1 + $0x40] sm:$0xf]
  %v44 = vld [vmem:[%s1 + $0x44] sm:$0xf]
  %v45 = vld [vmem:[%s1 + $0x48] sm:$0xf]
  %v46 = vld [vmem:[%s1 + $0x4c] sm:$0xf]
  %v47 = vld [vmem:[%s1 + $0x50] sm:$0xf]
  %v48 = vld [vmem:[%s1 + $0x54] sm:$0xf]
  %v49 = vld [vmem:[%s1 + $0x58] sm:$0xf]
  %v50 = vld [vmem:[%s1 + $0x5c] sm:$0xf]
  %v51 = vld [vmem:[%s1 + $0x60] sm:$0xf]
  %v52 = vld [vmem:[%s1 + $0x64] sm:$0xf]
  %v53 = vld [vmem:[%s1 + $0x68] sm:$0xf]
  %v54 = vld [vmem:[%s1 + $0x6c] sm:$0xf]
  %v55 = vld [vmem:[%s1 + $0x70] sm:$0xf]
  %v56 = vld [vmem:[%s1 + $0x74] sm:$0xf]
  %v57 = vld [vmem:[%s1 + $0x78] sm:$0xf]
  %v58 = vld [vmem:[%s1 + $0x7c] sm:$0xf]
  %v59 = vld [vmem:[%s1 + $0x80] sm:$0xf]
  %v60 = vld [vmem:[%s1 + $0x84] sm:$0xf]
  %v61 = vld [vmem:[%s1 + $0x88] sm:$0xf]
  %v62 = vld [vmem:[%s1 + $0x8c] sm:$0xf]
  %v63 = vld [vmem:[%s1 + $0x90] sm:$0xf]
  %v64 = vld [vmem:[%s1 + $0x94] sm:$0xf]
  %v65 = vld [vmem:[%s1 + $0x98] sm:$0xf]
  %v66 = vld [vmem:[%s1 + $0x9c] sm:$0xf]
  %v67 = vld [vmem:[%s1 + $0xa0] sm:$0xf]
  %v68 = vld [vmem:[%s1 + $0xa4] sm:$0xf]
  %v69 = vld [vmem:[%s1 + $0xa8] sm:$0xf]
  %v70 = vld [vmem:[%s1 + $0xac] sm:$0xf]
  %v71 = vld [vmem:[%s1 + $0xb0] sm:$0xf]
  %v72 = vld [vmem:[%s1 + $0xb4] sm:$0xf]
  %v73 = vld [vmem:[%s1 + $0xb8] sm:$0xf]
  %v74 = vld [vmem:[%s1 + $0xbc] sm:$0xf]
  %v79 = vunpack.c.l.b16 %v23
  %v80 = vunpack.c.h.b16 %v23
  %v81 = vunpack.c.l.b16 %v24
  %v82 = vunpack.c.l.b16 %v25
  %v83 = vunpack.c.h.b16 %v25
  %v84 = vunpack.c.l.b16 %v26
  %v85 = vpack.c.b16 %v82, %v79
  %v86 = vpack.c.b16 %v83, %v80
  %v87 = vpack.c.b16 %v84, %v81
  %v139 = vunpack.c.l.b16 %v27
  %v140 = vunpack.c.l.b16 %v28
  %v141 = vunpack.c.l.b16 %v29
  %v142 = vunpack.c.l.b16 %v30
  %v143 = vunpack.c.l.b16 %v31
  %v144 = vunpack.c.l.b16 %v32
  %v145 = vunpack.c.l.b16 %v33
  %v146 = vunpack.c.l.b16 %v34
  %v147 = vunpack.c.l.b16 %v35
  %v148 = vunpack.c.l.b16 %v36
  %v149 = vunpack.c.l.b16 %v37
  %v150 = vunpack.c.l.b16 %v38
  %v151 = vunpack.c.l.b16 %v39
  %v152 = vunpack.c.l.b16 %v40
  %v153 = vunpack.c.l.b16 %v41
  %v154 = vunpack.c.l.b16 %v42
  %v155 = vunpack.c.l.b16 %v43
  %v156 = vunpack.c.l.b16 %v44
  %v157 = vunpack.c.l.b16 %v45
  %v158 = vunpack.c.l.b16 %v46
  %v159 = vunpack.c.l.b16 %v47
  %v160 = vunpack.c.l.b16 %v48
  %v161 = vunpack.c.l.b16 %v49
  %v162 = vunpack.c.l.b16 %v50
  %v163 = vunpack.c.l.b16 %v51
  %v164 = vunpack.c.l.b16 %v52
  %v165 = vunpack.c.l.b16 %v53
  %v166 = vunpack.c.l.b16 %v54
  %v167 = vunpack.c.l.b16 %v55
  %v168 = vunpack.c.l.b16 %v56
  %v169 = vunpack.c.l.b16 %v57
  %v170 = vunpack.c.l.b16 %v58
  %v171 = vunpack.c.l.b16 %v59
  %v172 = vunpack.c.l.b16 %v60
  %v173 = vunpack.c.l.b16 %v61
  %v174 = vunpack.c.l.b16 %v62
  %v175 = vunpack.c.l.b16 %v63
  %v176 = vunpack.c.l.b16 %v64
  %v177 = vunpack.c.l.b16 %v65
  %v178 = vunpack.c.l.b16 %v66
  %v179 = vunpack.c.l.b16 %v67
  %v180 = vunpack.c.l.b16 %v68
  %v181 = vunpack.c.l.b16 %v69
  %v182 = vunpack.c.l.b16 %v70
  %v183 = vunpack.c.l.b16 %v71
  %v184 = vunpack.c.l.b16 %v72
  %v185 = vunpack.c.l.b16 %v73
  %v186 = vunpack.c.l.b16 %v74
  %v187 = vpack.c.b16 %v140, %v139
  %v188 = vpack.c.b16 %v142, %v141
  %v189 = vpack.c.b16 %v144, %v143
  %v190 = vpack.c.b16 %v146, %v145
  %v191 = vpack.c.b16 %v148, %v147
  %v192 = vpack.c.b16 %v150, %v149
  %v193 = vpack.c.b16 %v152, %v151
  %v194 = vpack.c.b16 %v154, %v153
  %v195 = vpack.c.b16 %v156, %v155
  %v196 = vpack.c.b16 %v158, %v157
  %v197 = vpack.c.b16 %v160, %v159
  %v198 = vpack.c.b16 %v162, %v161
  %v199 = vpack.c.b16 %v164, %v163
  %v200 = vpack.c.b16 %v166, %v165
  %v201 = vpack.c.b16 %v168, %v167
  %v202 = vpack.c.b16 %v170, %v169
  %v203 = vpack.c.b16 %v172, %v171
  %v204 = vpack.c.b16 %v174, %v173
  %v205 = vpack.c.b16 %v176, %v175
  %v206 = vpack.c.b16 %v178, %v177
  %v207 = vpack.c.b16 %v180, %v179
  %v208 = vpack.c.b16 %v182, %v181
  %v209 = vpack.c.b16 %v184, %v183
  %v210 = vpack.c.b16 %v186, %v185
  %235 = vmatprep.subr.bf16.mxu0 0
  %236 = vmatpush1.bf16.msra.mxu0 %v187
  %237 = vmatprep.subr.bf16.mxu0 0
  %238 = vmatpush1.bf16.msra.mxu0 %v188
  %239 = vmatprep.subr.bf16.mxu0 0
  %240 = vmatpush1.bf16.msra.mxu0 %v189
  %241 = vmatprep.subr.bf16.mxu0 0
  %242 = vmatpush1.bf16.msra.mxu0 %v190
  %243 = vmatprep.subr.bf16.mxu0 0
  %244 = vmatpush1.bf16.msra.mxu0 %v191
  %245 = vmatprep.subr.bf16.mxu0 0
  %246 = vmatpush1.bf16.msra.mxu0 %v192
  %247 = vmatprep.subr.bf16.mxu0 0
  %248 = vmatpush1.bf16.msra.mxu0 %v193
  %249 = vmatprep.subr.bf16.mxu0 0
  %250 = vmatpush1.bf16.msra.mxu0 %v194
  %251 = vmatprep.subr.bf16.mxu0 0
  %252 = vmatpush1.bf16.msra.mxu0 %v195
  %253 = vmatprep.subr.bf16.mxu0 0
  %254 = vmatpush1.bf16.msra.mxu0 %v196
  %255 = vmatprep.subr.bf16.mxu0 0
  %256 = vmatpush1.bf16.msra.mxu0 %v197
  %257 = vmatprep.subr.bf16.mxu0 0
  %258 = vmatpush1.bf16.msra.mxu0 %v198
  %259 = vmatprep.subr.bf16.mxu0 0
  %260 = vmatpush1.bf16.msra.mxu0 %v199
  %261 = vmatprep.subr.bf16.mxu0 0
  %262 = vmatpush1.bf16.msra.mxu0 %v200
  %263 = vmatprep.subr.bf16.mxu0 0
  %264 = vmatpush1.bf16.msra.mxu0 %v201
  %265 = vmatprep.subr.bf16.mxu0 0
  %266 = vmatpush1.bf16.msra.mxu0 %v202
  %267 = vmatprep.mubr.bf16.mxu0 %v86
  %268 = vmatmul.mubr.bf16.gmra.mrb[0].mxu0 %v85
  %v269 = vpop.f32.mrb[0].mxu0
  %v270 = vadd.f32 0.0, %v269
  %v271 = vpop.f32.mrb[0].mxu0
  %v272 = vpop.f32.mrb[0].mxu0
  %v273 = vadd.f32 0.0, %v272
  %v274 = vpop.f32.mrb[0].mxu0
  %275 = vdwg.mxu0
  %276 = vmatprep.subr.bf16.mxu0 0
  %277 = vmatpush1.bf16.msra.mxu0 %v203
  %278 = vmatprep.subr.bf16.mxu0 0
  %279 = vmatpush1.bf16.msra.mxu0 %v204
  %280 = vmatprep.subr.bf16.mxu0 0
  %281 = vmatpush1.bf16.msra.mxu0 %v205
  %282 = vmatprep.subr.bf16.mxu0 0
  %283 = vmatpush1.bf16.msra.mxu0 %v206
  %284 = vmatprep.subr.bf16.mxu0 0
  %285 = vmatpush1.bf16.msra.mxu0 %v207
  %286 = vmatprep.subr.bf16.mxu0 0
  %287 = vmatpush1.bf16.msra.mxu0 %v208
  %288 = vmatprep.subr.bf16.mxu0 0
  %289 = vmatpush1.bf16.msra.mxu0 %v209
  %290 = vmatprep.subr.bf16.mxu0 0
  %291 = vmatpush1.bf16.msra.mxu0 %v210
  %292 = vmatprep.subr.bf16.mxu0 0
  %293 = vmatpush1.bf16.msra.mxu0 0
  %294 = vmatprep.subr.bf16.mxu0 0
  %295 = vmatpush1.bf16.msra.mxu0 0
  %296 = vmatprep.subr.bf16.mxu0 0
  %297 = vmatpush1.bf16.msra.mxu0 0
  %298 = vmatprep.subr.bf16.mxu0 0
  %299 = vmatpush1.bf16.msra.mxu0 0
  %300 = vmatprep.subr.bf16.mxu0 0
  %301 = vmatpush1.bf16.msra.mxu0 0
  %302 = vmatprep.subr.bf16.mxu0 0
  %303 = vmatpush1.bf16.msra.mxu0 0
  %304 = vmatprep.subr.bf16.mxu0 0
  %305 = vmatpush1.bf16.msra.mxu0 0
  %306 = vmatprep.subr.bf16.mxu0 0
  %307 = vmatpush1.bf16.msra.mxu0 0
  %308 = vmatprep.mubr.bf16.mxu0 0
  %309 = vmatmul.mubr.bf16.gmra.mrb[0].mxu0 %v87
  %v310 = vpop.f32.mrb[0].mxu0
  %v311 = vadd.f32 %v270, %v310
  %v312 = vpop.f32.mrb[0].mxu0
  %v313 = vpop.f32.mrb[0].mxu0
  %v314 = vadd.f32 %v273, %v313
  %v315 = vpop.f32.mrb[0].mxu0
  %316 = vdwg.mxu0
  %v317 = vadd.f32 %v21, %v311
  %v318 = vadd.f32 %v22, %v314
  %319 = vst [vmem:[#allocation2] sm:$0xff] %v317
  %320 = vst [vmem:[#allocation2 + $0x8] sm:$0xff] %v318
  // Predicated region
  $region18: #{net_forward.14} parent=0 // pred_check
    %p321 = pneg %p15
  $region19: #{net_forward.14} parent=0 // pred_check_branch
    %323 = sbr.rel (%p321) target = $region21
  $region20: #{net_forward.14} parent=0 // pred_region
    %v324 = vld [vmem:[#allocation2] sm:$0xff]
    %v325 = vld [vmem:[#allocation2 + $0x8] sm:$0xff]
    %v326 = vld [vmem:[%s2] sm:$0x1]
    %v328 = vlaneseq
    %v329 = vshrl.u32 %v328, 7
    %v330 = vsub.s32 0, %v329
    %v331 = vrot.slane %v326, %v330
    %v333 = vadd.f32 %v324, %v331
    %v334 = vadd.f32 %v325, %v331
    %v335 = vmax.f32 %v333, 0.0
    %v336 = vmax.f32 %v334, 0.0
    %337 = vst [vmem:[%s3] sm:$0xff] %v335
    %338 = vst [vmem:[%s3 + $0x8] sm:$0xff] %v336
  $region21: #{net_forward.14} parent=0 // pred_fallthru
    _
  // Predicated region
  $region22: #{net_forward.14} parent=0 // pred_check
    _
  $region23: #{net_forward.14} parent=0 // pred_check_branch
    %340 = sbr.rel (0) target = $region25
  $region24: #{net_forward.14} parent=0 // pred_region
    _
  $region25: #{net_forward.14} parent=0 // pred_fallthru
    _
  // Predicated region
  $region26: #{net_forward.14} parent=0 // pred_check
    _
  $region27: #{net_forward.14} parent=0 // pred_check_branch
    %342 = sbr.rel (0) target = $region29
  $region28: #{net_forward.14} parent=0 // pred_region
    _
  $region29: #{net_forward.14} parent=0 // pred_fallthru
    _

// kernel: net_forward.15
$region0: #{net_forward.15}
  #allocation0 [shape = 'u32[]', space=smem, size = 0x4, offset = 0x4, fixed_abs, tag = 'smem constant byte address 0x4 - core index']
  #allocation1 [shape = 'u32[144,128]{1,0:T(1,128)}', space=vmem, size = 0x12000, scoped, tag = 'internal scratch']
  #allocation2 [shape = 'f32[16,128]{1,0:T(8,128)}', space=vmem, size = 0x2000, scoped, tag = 'scratch operand']
  %s0 = inlined_call_operand.vmem [shape: bf16[16,128], index: 0, kind: input, shape index: {}]
  %s1 = inlined_call_operand.vmem [shape: bf16[128,256], index: 1, kind: input, shape index: {}]
  %s2 = inlined_call_operand.vmem [shape: f32[1,256], index: 2, kind: input, shape index: {}]
  %s3 = inlined_call_operand.vmem [shape: f32[16,256], index: 3, kind: output, shape index: {}]
  %s4 = sld [smem:[#allocation0]]
  $region128: #{net_forward.15} parent=0
    _
  %s6 = ssub.s32 1, %s4
  %s7 = scalar_select 0, %s6, %s4
  $region1: #{net_forward.15} parent=0
    #allocation3 [shape = 'u8[65536]{0}', space=vmem, size = 0x10000, scoped, tag = 'input window, operand 1']
    #allocation4 [shape = 'u8[16384]{0}', space=vmem, size = 0x4000, scoped, tag = 'output window, operand 0']
    loop: start=0, step=1, limit=4
    $region2: #{net_forward.15} parent=1 // loop_pre_header
      _
    $region3: #{net_forward.15} parent=1 // loop_header
      %s9 = sphi 0, %s13
      %p10 = scmp.ge.s32.totalorder %s9, 4
      %s16 = sphi 0, %s35
      %s17 = sphi 0, %s31
      %s18 = sphi 0, %s27
      %s19 = sphi 0, %s16
      %s20 = sphi 0, %s17
      %s21 = sphi 0, %s18
      %s22 = sphi 0, %s19
      %s23 = sphi 0, %s20
      %s24 = sphi 0, %s21
      %s40 = sphi 0, %s42
      %s43 = sphi 0, %s40
      %s44 = sphi 0, %s43
      %s60 = sphi 0, %s44
      %s68 = sphi 0, %s70
      %s71 = sphi 0, %s68
      %s72 = sphi 0, %s71
      %s88 = sphi 0, %s72
      %s94 = sphi 0, %s96
      %s97 = sphi 0, %s94
      %s98 = sphi 0, %s97
      %s114 = sphi 0, %s98
      %s122 = sphi 0, %s124
      %s125 = sphi 0, %s122
      %s126 = sphi 0, %s125
      %s142 = sphi 0, %s126
    $region4: #{net_forward.15} parent=1 // loop_header_branch
      %12 = sbr.rel (%p10) target = $region8
    $region5: #{net_forward.15} parent=1 // loop_body
      %s14 = ssub.s32 %s9, 1
      %s15 = ssub.s32 %s9, 2
      %s25 = sadd.s32 1, %s18
      %p26 = scmp.ge.s32.totalorder %s25, 1
      %s27 = scalar_select %p26, 0, %s25
      %s28 = sadd.s32 1, %s17
      %s29 = scalar_select %p26, %s28, %s17
      %p30 = scmp.ge.s32.totalorder %s29, 2
      %s31 = scalar_select %p30, 0, %s29
      %s32 = sadd.s32 1, %s16
      %s33 = scalar_select %p30, %s32, %s16
      %p34 = scmp.ge.s32.totalorder %s33, 1
      %s35 = scalar_select %p34, 0, %s33
      %s36 = ssub.s32 %s16, %s35
      %s37 = ssub.s32 %s18, %s27
      %s38 = sor.u32 %s36, %s37
      %p39 = scmp.eq.s32.totalorder %s38, 0
      %s41 = sadd.s32 %s40, 1
      %s42 = scalar_select %p39, %s40, %s41
      %p45 = pneg %p39
      %p46 = scmp.eq.s32.totalorder %s9, 1
      %p47 = por %p45, %p46
      %p48 = scmp.ne.s32.totalorder %s40, %s43
      %p49 = scmp.eq.s32.totalorder %s9, 0
      %p50 = por %p48, %p49
      %p51 = scmp.ne.s32.totalorder %s40, %s43
      %p52 = scmp.eq.s32.totalorder %s14, 1
      %p53 = por %p51, %p52
      %p54 = scmp.ne.s32.totalorder %s43, %s44
      %p55 = scmp.eq.s32.totalorder %s14, 0
      %p56 = por %p54, %p55
      %p57 = scmp.ne.s32.totalorder %s43, %s44
      %p58 = scmp.eq.s32.totalorder %s15, 1
      %p59 = por %p57, %p58
      %p61 = scmp.ne.s32.totalorder %s44, %s60
      %p62 = scmp.eq.s32.totalorder %s15, 0
      %p63 = por %p61, %p62
      %s64 = ssub.s32 %s18, %s27
      %s65 = ssub.s32 %s17, %s31
      %s66 = sor.u32 %s64, %s65
      %p67 = scmp.eq.s32.totalorder %s66, 0
      %s69 = sadd.s32 %s68, 1
      %s70 = scalar_select %p67, %s68, %s69
      %p73 = pneg %p67
      %p74 = scmp.eq.s32.totalorder %s9, 1
      %p75 = por %p73, %p74
      %p76 = scmp.ne.s32.totalorder %s68, %s71
      %p77 = scmp.eq.s32.totalorder %s9, 0
      %p78 = por %p76, %p77
      %p79 = scmp.ne.s32.totalorder %s68, %s71
      %p80 = scmp.eq.s32.totalorder %s14, 1
      %p81 = por %p79, %p80
      %p82 = scmp.ne.s32.totalorder %s71, %s72
      %p83 = scmp.eq.s32.totalorder %s14, 0
      %p84 = por %p82, %p83
      %p85 = scmp.ne.s32.totalorder %s71, %s72
      %p86 = scmp.eq.s32.totalorder %s15, 1
      %p87 = por %p85, %p86
      %p89 = scmp.ne.s32.totalorder %s72, %s88
      %p90 = scmp.eq.s32.totalorder %s15, 0
      %p91 = por %p89, %p90
      %s92 = ssub.s32 %s17, %s31
      %p93 = scmp.eq.s32.totalorder %s92, 0
      %s95 = sadd.s32 %s94, 1
      %s96 = scalar_select %p93, %s94, %s95
      %p99 = pneg %p93
      %p100 = scmp.eq.s32.totalorder %s9, 1
      %p101 = por %p99, %p100
      %p102 = scmp.ne.s32.totalorder %s94, %s97
      %p103 = scmp.eq.s32.totalorder %s9, 0
      %p104 = por %p102, %p103
      %p105 = scmp.ne.s32.totalorder %s94, %s97
      %p106 = scmp.eq.s32.totalorder %s14, 1
      %p107 = por %p105, %p106
      %p108 = scmp.ne.s32.totalorder %s97, %s98
      %p109 = scmp.eq.s32.totalorder %s14, 0
      %p110 = por %p108, %p109
      %p111 = scmp.ne.s32.totalorder %s97, %s98
      %p112 = scmp.eq.s32.totalorder %s15, 1
      %p113 = por %p111, %p112
      %p115 = scmp.ne.s32.totalorder %s98, %s114
      %p116 = scmp.eq.s32.totalorder %s15, 0
      %p117 = por %p115, %p116
      %s118 = ssub.s32 %s16, %s35
      %s119 = ssub.s32 %s17, %s31
      %s120 = sor.u32 %s118, %s119
      %p121 = scmp.eq.s32.totalorder %s120, 0
      %s123 = sadd.s32 %s122, 1
      %s124 = scalar_select %p121, %s122, %s123
      %p127 = pneg %p121
      %p128 = scmp.eq.s32.totalorder %s9, 1
      %p129 = por %p127, %p128
      %p130 = scmp.ne.s32.totalorder %s122, %s125
      %p131 = scmp.eq.s32.totalorder %s9, 0
      %p132 = por %p130, %p131
      %p133 = scmp.ne.s32.totalorder %s122, %s125
      %p134 = scmp.eq.s32.totalorder %s14, 1
      %p135 = por %p133, %p134
      %p136 = scmp.ne.s32.totalorder %s125, %s126
      %p137 = scmp.eq.s32.totalorder %s14, 0
      %p138 = por %p136, %p137
      %p139 = scmp.ne.s32.totalorder %s125, %s126
      %p140 = scmp.eq.s32.totalorder %s15, 1
      %p141 = por %p139, %p140
      %p143 = scmp.ne.s32.totalorder %s126, %s142
      %p144 = scmp.eq.s32.totalorder %s15, 0
      %p145 = por %p143, %p144
      %p146 = scmp.le.s32.totalorder 1, %s9
      %p147 = scmp.lt.s32.totalorder %s9, 3
      %p148 = pnand %p146, %p147
      %p149 = pneg %p148
      // Predicated region
      $region9: #{net_forward.15} parent=5 // pred_check
        _
      $region10: #{net_forward.15} parent=5 // pred_check_branch
        %151 = sbr.rel (%p148) target = $region12
      $region11: #{net_forward.15} parent=5 // pred_region
        %s152 = ssub.s32 %s9, 1
        // Predicated region
        $region13: #{net_forward.15} parent=11 // pred_check
          %p153 = pneg %p56
        $region14: #{net_forward.15} parent=11 // pred_check_branch
          %155 = sbr.rel (%p153) target = $region16
        $region15: #{net_forward.15} parent=11 // pred_region
          %s156 = smul.u32 2, %s19
          %p157 = scmp.lt.s32.totalorder %s156, 1
          %s158 = scalar_select %p157, %s156, 1
          %p159 = scmp.lt.s32.totalorder %s21, 0
          %s160 = scalar_select %p159, %s21, 0
          %s161 = sadd.s32 %s160, %s158
          %s162 = smul.addr %s161, 4
          %s163 = scalar_lea.vmem %s0, %s162
          %s164 = smul.u32 2, %s19
        $region16: #{net_forward.15} parent=11 // pred_fallthru
          _
      $region12: #{net_forward.15} parent=5 // pred_fallthru
        _
      %p165 = scmp.lt.s32.totalorder %s9, 2
      // Predicated region
      $region17: #{net_forward.15} parent=5 // pred_check
        %p166 = pneg %p165
      $region18: #{net_forward.15} parent=5 // pred_check_branch
        %168 = sbr.rel (%p166) target = $region20
      $region19: #{net_forward.15} parent=5 // pred_region
        // Predicated region
        $region21: #{net_forward.15} parent=19 // pred_check
          %p169 = pneg %p78
        $region22: #{net_forward.15} parent=19 // pred_check_branch
          %171 = sbr.rel (%p169) target = $region24
        $region23: #{net_forward.15} parent=19 // pred_region
          %s172 = sand.u32 %s68, 1
          %s173 = sand.u32 %s68, 1
          %s174 = smul.addr %s173, 64
          %s175 = scalar_lea.vmem [#allocation3], %s174
          %s176 = smul.u32 16, %s18
          %s177 = smul.addr %s176, 2
          %s178 = sadd.s32 %s17, %s177
          %s179 = smul.addr %s178, 4
          %s180 = scalar_lea.vmem %s1, %s179
          // Predicated region
          $region25: #{net_forward.15} parent=23 // pred_check
            _
          $region26: #{net_forward.15} parent=23 // pred_check_branch
            %182 = sbr.rel (0) target = $region28
          $region27: #{net_forward.15} parent=23 // pred_region
            // Predicated region
            $region29: #{net_forward.15} parent=27 // pred_check
              _
            $region30: #{net_forward.15} parent=27 // pred_check_branch
              %184 = sbr.rel target = $region32
            $region31: #{net_forward.15} parent=27 // pred_region
              // Predicated region
              $region44: #{net_forward.15} parent=31 // pred_check
                _
              $region45: #{net_forward.15} parent=31 // pred_check_branch
                %229 = sbr.rel (0) target = $region47
              $region46: #{net_forward.15} parent=31 // pred_region
                loop: start=0, step=1, limit=1
                $region48: #{net_forward.15} parent=46 // loop_pre_header
                  _
                $region49: #{net_forward.15} parent=46 // loop_header
                  %s231 = sphi 0, %s235
                  %p232 = scmp.ge.s32.totalorder %s231, 1
                  %s236 = sphi %s180, %s180
                  %s237 = sphi %s175, %s175
                $region50: #{net_forward.15} parent=46 // loop_header_branch
                  %234 = sbr.rel (%p232) target = $region54
                $region51: #{net_forward.15} parent=46 // loop_body
                  _
                $region52: #{net_forward.15} parent=46 // loop_footer
                  %s235 = sadd.s32 1, %s231
                $region53: #{net_forward.15} parent=46 // loop_footer_branch
                  %230 = sbr.rel target = $region49
                $region54: #{net_forward.15} parent=46 // loop_exit
                  _
                loop: start=0, step=1, limit=1
                $region55: #{net_forward.15} parent=46 // loop_pre_header
                  _
                $region56: #{net_forward.15} parent=46 // loop_header
                  %s240 = sphi 0, %s244
                  %p241 = scmp.ge.s32.totalorder %s240, 1
                  %s245 = sphi %s180, %s180
                  %s246 = sphi %s175, %s175
                $region57: #{net_forward.15} parent=46 // loop_header_branch
                  %243 = sbr.rel (%p241) target = $region61
                $region58: #{net_forward.15} parent=46 // loop_body
                  %v247 = vld [vmem:[%s245] sm:$0xf]
                  %248 = vst [vmem:[%s246] sm:$0xf] %v247
                  %v249 = vld [vmem:[%s245 + $0x8] sm:$0xf]
                  %250 = vst [vmem:[%s246 + $0x4] sm:$0xf] %v249
                  %v251 = vld [vmem:[%s245 + $0x10] sm:$0xf]
                  %252 = vst [vmem:[%s246 + $0x8] sm:$0xf] %v251
                  %v253 = vld [vmem:[%s245 + $0x18] sm:$0xf]
                  %254 = vst [vmem:[%s246 + $0xc] sm:$0xf] %v253
                  %v255 = vld [vmem:[%s245 + $0x20] sm:$0xf]
                  %256 = vst [vmem:[%s246 + $0x10] sm:$0xf] %v255
                  %v257 = vld [vmem:[%s245 + $0x28] sm:$0xf]
                  %258 = vst [vmem:[%s246 + $0x14] sm:$0xf] %v257
                  %v259 = vld [vmem:[%s245 + $0x30] sm:$0xf]
                  %260 = vst [vmem:[%s246 + $0x18] sm:$0xf] %v259
                  %v261 = vld [vmem:[%s245 + $0x38] sm:$0xf]
                  %262 = vst [vmem:[%s246 + $0x1c] sm:$0xf] %v261
                  %v263 = vld [vmem:[%s245 + $0x40] sm:$0xf]
                  %264 = vst [vmem:[%s246 + $0x20] sm:$0xf] %v263
                  %v265 = vld [vmem:[%s245 + $0x48] sm:$0xf]
                  %266 = vst [vmem:[%s246 + $0x24] sm:$0xf] %v265
                  %v267 = vld [vmem:[%s245 + $0x50] sm:$0xf]
                  %268 = vst [vmem:[%s246 + $0x28] sm:$0xf] %v267
                  %v269 = vld [vmem:[%s245 + $0x58] sm:$0xf]
                  %270 = vst [vmem:[%s246 + $0x2c] sm:$0xf] %v269
                  %v271 = vld [vmem:[%s245 + $0x60] sm:$0xf]
                  %272 = vst [vmem:[%s246 + $0x30] sm:$0xf] %v271
                  %v273 = vld [vmem:[%s245 + $0x68] sm:$0xf]
                  %274 = vst [vmem:[%s246 + $0x34] sm:$0xf] %v273
                  %v275 = vld [vmem:[%s245 + $0x70] sm:$0xf]
                  %276 = vst [vmem:[%s246 + $0x38] sm:$0xf] %v275
                  %v277 = vld [vmem:[%s245 + $0x78] sm:$0xf]
                  %278 = vst [vmem:[%s246 + $0x3c] sm:$0xf] %v277
                $region59: #{net_forward.15} parent=46 // loop_footer
                  %s244 = sadd.s32 1, %s240
                $region60: #{net_forward.15} parent=46 // loop_footer_branch
                  %239 = sbr.rel target = $region56
                $region61: #{net_forward.15} parent=46 // loop_exit
                  _
              $region47: #{net_forward.15} parent=31 // pred_fallthru
                _
            $region32: #{net_forward.15} parent=27 // pred_fallthru
              _
            // Predicated region
            $region33: #{net_forward.15} parent=27 // pred_check
              _
            $region34: #{net_forward.15} parent=27 // pred_check_branch
              %186 = sbr.rel (0) target = $region36
            $region35: #{net_forward.15} parent=27 // pred_region
              loop: start=0, step=1, limit=1
              $region37: #{net_forward.15} parent=35 // loop_pre_header
                _
              $region38: #{net_forward.15} parent=35 // loop_header
                %s189 = sphi 0, %s193
                %p190 = scmp.ge.s32.totalorder %s189, 1
                %s194 = sphi %s180, %s180
                %s195 = sphi %s175, %s175
              $region39: #{net_forward.15} parent=35 // loop_header_branch
                %192 = sbr.rel (%p190) target = $region43
              $region40: #{net_forward.15} parent=35 // loop_body
                %v196 = vld [vmem:[%s194] sm:$0xf]
                %197 = vst [vmem:[%s195] sm:$0xf] %v196
                %v198 = vld [vmem:[%s194 + $0x8] sm:$0xf]
                %199 = vst [vmem:[%s195 + $0x4] sm:$0xf] %v198
                %v200 = vld [vmem:[%s194 + $0x10] sm:$0xf]
                %201 = vst [vmem:[%s195 + $0x8] sm:$0xf] %v200
                %v202 = vld [vmem:[%s194 + $0x18] sm:$0xf]
                %203 = vst [vmem:[%s195 + $0xc] sm:$0xf] %v202
                %v204 = vld [vmem:[%s194 + $0x20] sm:$0xf]
                %205 = vst [vmem:[%s195 + $0x10] sm:$0xf] %v204
                %v206 = vld [vmem:[%s194 + $0x28] sm:$0xf]
                %207 = vst [vmem:[%s195 + $0x14] sm:$0xf] %v206
                %v208 = vld [vmem:[%s194 + $0x30] sm:$0xf]
                %209 = vst [vmem:[%s195 + $0x18] sm:$0xf] %v208
                %v210 = vld [vmem:[%s194 + $0x38] sm:$0xf]
                %211 = vst [vmem:[%s195 + $0x1c] sm:$0xf] %v210
                %v212 = vld [vmem:[%s194 + $0x40] sm:$0xf]
                %213 = vst [vmem:[%s195 + $0x20] sm:$0xf] %v212
                %v214 = vld [vmem:[%s194 + $0x48] sm:$0xf]
                %215 = vst [vmem:[%s195 + $0x24] sm:$0xf] %v214
                %v216 = vld [vmem:[%s194 + $0x50] sm:$0xf]
                %217 = vst [vmem:[%s195 + $0x28] sm:$0xf] %v216
                %v218 = vld [vmem:[%s194 + $0x58] sm:$0xf]
                %219 = vst [vmem:[%s195 + $0x2c] sm:$0xf] %v218
                %v220 = vld [vmem:[%s194 + $0x60] sm:$0xf]
                %221 = vst [vmem:[%s195 + $0x30] sm:$0xf] %v220
                %v222 = vld [vmem:[%s194 + $0x68] sm:$0xf]
                %223 = vst [vmem:[%s195 + $0x34] sm:$0xf] %v222
                %v224 = vld [vmem:[%s194 + $0x70] sm:$0xf]
                %225 = vst [vmem:[%s195 + $0x38] sm:$0xf] %v224
                %v226 = vld [vmem:[%s194 + $0x78] sm:$0xf]
                %227 = vst [vmem:[%s195 + $0x3c] sm:$0xf] %v226
              $region41: #{net_forward.15} parent=35 // loop_footer
                %s193 = sadd.s32 1, %s189
              $region42: #{net_forward.15} parent=35 // loop_footer_branch
                %188 = sbr.rel target = $region38
              $region43: #{net_forward.15} parent=35 // loop_exit
                _
            $region36: #{net_forward.15} parent=27 // pred_fallthru
              _
          $region28: #{net_forward.15} parent=23 // pred_fallthru
            _
          %279 = vnop
        $region24: #{net_forward.15} parent=19 // pred_fallthru
          _
        // Predicated region
        $region62: #{net_forward.15} parent=19 // pred_check
          %p280 = pneg %p104
        $region63: #{net_forward.15} parent=19 // pred_check_branch
          %282 = sbr.rel (%p280) target = $region65
        $region64: #{net_forward.15} parent=19 // pred_region
          %p283 = scmp.lt.s32.totalorder %s17, 1
          %s284 = scalar_select %p283, %s17, 1
          %s285 = scalar_lea.vmem %s2, %s284
        $region65: #{net_forward.15} parent=19 // pred_fallthru
          _
      $region20: #{net_forward.15} parent=5 // pred_fallthru
        _
      %p286 = scmp.le.s32.totalorder 1, %s9
      %p287 = scmp.lt.s32.totalorder %s9, 3
      %p288 = pnand %p286, %p287
      %p289 = pneg %p288
      // Predicated region
      $region66: #{net_forward.15} parent=5 // pred_check
        _
      $region67: #{net_forward.15} parent=5 // pred_check_branch
        %291 = sbr.rel (%p288) target = $region69
      $region68: #{net_forward.15} parent=5 // pred_region
        %s292 = ssub.s32 %s9, 1
        %s293 = sand.u32 %s71, 1
        %s294 = sand.u32 %s71, 1
        %s295 = smul.addr %s294, 64
        %s296 = scalar_lea.vmem [#allocation3], %s295
        // Predicated region
        $region70: #{net_forward.15} parent=68 // pred_check
          %p297 = pneg %p84
        $region71: #{net_forward.15} parent=68 // pred_check_branch
          %299 = sbr.rel (%p297) target = $region73
        $region72: #{net_forward.15} parent=68 // pred_region
          _
        $region73: #{net_forward.15} parent=68 // pred_fallthru
          _
        %s300 = smul.u32 2, %s19
        %p301 = scmp.lt.s32.totalorder %s300, 1
        %s302 = scalar_select %p301, %s300, 1
        %p303 = scmp.lt.s32.totalorder %s21, 0
        %s304 = scalar_select %p303, %s21, 0
        %s305 = sadd.s32 %s304, %s302
        %s306 = smul.addr %s305, 4
        %s307 = scalar_lea.vmem %s0, %s306
        %p308 = pneg %p56
        %p309 = pneg %p53
        %s310 = sand.u32 %s71, 1
        %s311 = sand.u32 %s71, 1
        %s312 = smul.addr %s311, 64
        %s313 = scalar_lea.vmem [#allocation3], %s312
        %p314 = pneg %p84
        %p315 = pneg %p81
        %p316 = scmp.lt.s32.totalorder %s20, 1
        %s317 = scalar_select %p316, %s20, 1
        %s318 = scalar_lea.vmem %s2, %s317
        %p319 = pneg %p110
        %p320 = pneg %p107
        %p321 = pneg %p138
        %p322 = pneg %p135
        %s323 = sand.u32 %s125, 1
        %s324 = sand.u32 %s125, 1
        %s325 = smul.addr %s324, 16
        %s326 = scalar_lea.vmem [#allocation4], %s325
        %s327 = smul.u32 2, %s19
        %p328 = scmp.lt.s32.totalorder %s327, 1
        %s329 = scalar_select %p328, %s327, 1
        %p330 = scmp.lt.s32.totalorder %s21, 0
        %s331 = scalar_select %p330, %s21, 0
        %s332 = sadd.s32 %s331, %s329
        %s333 = smul.addr %s332, 4
        %s334 = scalar_lea.vmem %s0, %s333
        %s335 = smul.u32 2, %s19
        %s336 = smul.u32 16, %s21
        %p337 = scmp.lt.s32.totalorder %s20, 1
        %s338 = scalar_select %p337, %s20, 1
        %s339 = scalar_lea.vmem %s2, %s338
        %s340 = smul.u32 2, %s19
        %p342 = scmp.eq.s32.totalorder %s21, 0
        // Predicated region
        $region74: #{net_forward.15} parent=68 // pred_check
          %p343 = pneg %p342
        $region75: #{net_forward.15} parent=68 // pred_check_branch
          %345 = sbr.rel (%p343) target = $region77
        $region76: #{net_forward.15} parent=68 // pred_region
          %346 = vst [vmem:[#allocation2] sm:$0xff] 0.0
          %347 = vst [vmem:[#allocation2 + $0x8] sm:$0xff] 0.0
        $region77: #{net_forward.15} parent=68 // pred_fallthru
          _
        %v348 = vld [vmem:[#allocation2] sm:$0xff]
        %v349 = vld [vmem:[#allocation2 + $0x8] sm:$0xff]
        %v350 = vld [vmem:[%s334] sm:$0xf]
        %v351 = vld [vmem:[%s334 + $0x4] sm:$0xf]
        %v352 = vld [vmem:[%s296] sm:$0xf]
        %v353 = vld [vmem:[%s296 + $0x4] sm:$0xf]
        %v354 = vld [vmem:[%s296 + $0x8] sm:$0xf]
        %v355 = vld [vmem:[%s296 + $0xc] sm:$0xf]
        %v356 = vld [vmem:[%s296 + $0x10] sm:$0xf]
        %v357 = vld [vmem:[%s296 + $0x14] sm:$0xf]
        %v358 = vld [vmem:[%s296 + $0x18] sm:$0xf]
        %v359 = vld [vmem:[%s296 + $0x1c] sm:$0xf]
        %v360 = vld [vmem:[%s296 + $0x20] sm:$0xf]
        %v361 = vld [vmem:[%s296 + $0x24] sm:$0xf]
        %v362 = vld [vmem:[%s296 + $0x28] sm:$0xf]
        %v363 = vld [vmem:[%s296 + $0x2c] sm:$0xf]
        %v364 = vld [vmem:[%s296 + $0x30] sm:$0xf]
        %v365 = vld [vmem:[%s296 + $0x34] sm:$0xf]
        %v366 = vld [vmem:[%s296 + $0x38] sm:$0xf]
        %v367 = vld [vmem:[%s296 + $0x3c] sm:$0xf]
        %v370 = vunpack.c.l.b16 %v350
        %v371 = vunpack.c.l.b16 %v351
        %v372 = vpack.c.b16 %v371, %v370
        %v390 = vunpack.c.l.b16 %v352
        %v391 = vunpack.c.l.b16 %v353
        %v392 = vunpack.c.l.b16 %v354
        %v393 = vunpack.c.l.b16 %v355
        %v394 = vunpack.c.l.b16 %v356
        %v395 = vunpack.c.l.b16 %v357
        %v396 = vunpack.c.l.b16 %v358
        %v397 = vunpack.c.l.b16 %v359
        %v398 = vunpack.c.l.b16 %v360
        %v399 = vunpack.c.l.b16 %v361
        %v400 = vunpack.c.l.b16 %v362
        %v401 = vunpack.c.l.b16 %v363
        %v402 = vunpack.c.l.b16 %v364
        %v403 = vunpack.c.l.b16 %v365
        %v404 = vunpack.c.l.b16 %v366
        %v405 = vunpack.c.l.b16 %v367
        %v406 = vpack.c.b16 %v391, %v390
        %v407 = vpack.c.b16 %v393, %v392
        %v408 = vpack.c.b16 %v395, %v394
        %v409 = vpack.c.b16 %v397, %v396
        %v410 = vpack.c.b16 %v399, %v398
        %v411 = vpack.c.b16 %v401, %v400
        %v412 = vpack.c.b16 %v403, %v402
        %v413 = vpack.c.b16 %v405, %v404
        %422 = vmatprep.subr.bf16.mxu0 0
        %423 = vmatpush1.bf16.msra.mxu0 %v406
        %424 = vmatprep.subr.bf16.mxu0 0
        %425 = vmatpush1.bf16.msra.mxu0 %v407
        %426 = vmatprep.subr.bf16.mxu0 0
        %427 = vmatpush1.bf16.msra.mxu0 %v408
        %428 = vmatprep.subr.bf16.mxu0 0
        %429 = vmatpush1.bf16.msra.mxu0 %v409
        %430 = vmatprep.subr.bf16.mxu0 0
        %431 = vmatpush1.bf16.msra.mxu0 %v410
        %432 = vmatprep.subr.bf16.mxu0 0
        %433 = vmatpush1.bf16.msra.mxu0 %v411
        %434 = vmatprep.subr.bf16.mxu0 0
        %435 = vmatpush1.bf16.msra.mxu0 %v412
        %436 = vmatprep.subr.bf16.mxu0 0
        %437 = vmatpush1.bf16.msra.mxu0 %v413
        %438 = vmatprep.subr.bf16.mxu0 0
        %439 = vmatpush1.bf16.msra.mxu0 0
        %440 = vmatprep.subr.bf16.mxu0 0
        %441 = vmatpush1.bf16.msra.mxu0 0
        %442 = vmatprep.subr.bf16.mxu0 0
        %443 = vmatpush1.bf16.msra.mxu0 0
        %444 = vmatprep.subr.bf16.mxu0 0
        %445 = vmatpush1.bf16.msra.mxu0 0
        %446 = vmatprep.subr.bf16.mxu0 0
        %447 = vmatpush1.bf16.msra.mxu0 0
        %448 = vmatprep.subr.bf16.mxu0 0
        %449 = vmatpush1.bf16.msra.mxu0 0
        %450 = vmatprep.subr.bf16.mxu0 0
        %451 = vmatpush1.bf16.msra.mxu0 0
        %452 = vmatprep.subr.bf16.mxu0 0
        %453 = vmatpush1.bf16.msra.mxu0 0
        %454 = vmatprep.mubr.bf16.mxu0 0
        %455 = vmatmul.mubr.bf16.gmra.mrb[0].mxu0 %v372
        %v456 = vpop.f32.mrb[0].mxu0
        %v457 = vadd.f32 0.0, %v456
        %v458 = vpop.f32.mrb[0].mxu0
        %v459 = vpop.f32.mrb[0].mxu0
        %v460 = vadd.f32 0.0, %v459
        %v461 = vpop.f32.mrb[0].mxu0
        %462 = vdwg.mxu0
        %v463 = vadd.f32 %v348, %v457
        %v464 = vadd.f32 %v349, %v460
        %465 = vst [vmem:[#allocation2] sm:$0xff] %v463
        %466 = vst [vmem:[#allocation2 + $0x8] sm:$0xff] %v464
        // Predicated region
        $region78: #{net_forward.15} parent=68 // pred_check
          %p467 = pneg %p342
        $region79: #{net_forward.15} parent=68 // pred_check_branch
          %469 = sbr.rel (%p467) target = $region81
        $region80: #{net_forward.15} parent=68 // pred_region
          %v470 = vld [vmem:[#allocation2] sm:$0xff]
          %v471 = vld [vmem:[#allocation2 + $0x8] sm:$0xff]
          %v472 = vld [vmem:[%s339] sm:$0x1]
          %v474 = vlaneseq
          %v475 = vshrl.u32 %v474, 7
          %v476 = vsub.s32 0, %v475
          %v477 = vrot.slane %v472, %v476
          %v479 = vadd.f32 %v470, %v477
          %v480 = vadd.f32 %v471, %v477
          %481 = vst [vmem:[%s326] sm:$0xff] %v479
          %482 = vst [vmem:[%s326 + $0x8] sm:$0xff] %v480
        $region81: #{net_forward.15} parent=68 // pred_fallthru
          _
        %s483 = sand.u32 %s125, 1
        %s484 = sand.u32 %s125, 1
        %s485 = smul.addr %s484, 16
        %s486 = scalar_lea.vmem [#allocation4], %s485
        // Predicated region
        $region82: #{net_forward.15} parent=68 // pred_check
          %p487 = pneg %p135
        $region83: #{net_forward.15} parent=68 // pred_check_branch
          %489 = sbr.rel (%p487) target = $region85
        $region84: #{net_forward.15} parent=68 // pred_region
          %s490 = smul.u32 2, %s19
          %s491 = smul.addr %s490, 2
          %s492 = sadd.s32 %s20, %s491
          %s493 = smul.addr %s492, 8
          %s494 = scalar_lea.vmem %s3, %s493
          // Predicated region
          $region86: #{net_forward.15} parent=84 // pred_check
            _
          $region87: #{net_forward.15} parent=84 // pred_check_branch
            %496 = sbr.rel (0) target = $region89
          $region88: #{net_forward.15} parent=84 // pred_region
            // Predicated region
            $region90: #{net_forward.15} parent=88 // pred_check
              _
            $region91: #{net_forward.15} parent=88 // pred_check_branch
              %498 = sbr.rel (0) target = $region93
            $region92: #{net_forward.15} parent=88 // pred_region
              // Predicated region
              $region105: #{net_forward.15} parent=92 // pred_check
                _
              $region106: #{net_forward.15} parent=92 // pred_check_branch
                %515 = sbr.rel (0) target = $region108
              $region107: #{net_forward.15} parent=92 // pred_region
                loop: start=0, step=1, limit=1
                $region109: #{net_forward.15} parent=107 // loop_pre_header
                  _
                $region110: #{net_forward.15} parent=107 // loop_header
                  %s517 = sphi 0, %s521
                  %p518 = scmp.ge.s32.totalorder %s517, 1
                  %s522 = sphi %s486, %s486
                  %s523 = sphi %s494, %s494
                $region111: #{net_forward.15} parent=107 // loop_header_branch
                  %520 = sbr.rel (%p518) target = $region115
                $region112: #{net_forward.15} parent=107 // loop_body
                  %v524 = vld [vmem:[%s522] sm:$0xff]
                  %525 = vst [vmem:[%s523] sm:$0xff] %v524
                  %v526 = vld [vmem:[%s522 + $0x8] sm:$0xff]
                  %527 = vst [vmem:[%s523 + $0x10] sm:$0xff] %v526
                $region113: #{net_forward.15} parent=107 // loop_footer
                  %s521 = sadd.s32 1, %s517
                $region114: #{net_forward.15} parent=107 // loop_footer_branch
                  %516 = sbr.rel target = $region110
                $region115: #{net_forward.15} parent=107 // loop_exit
                  _
              $region108: #{net_forward.15} parent=92 // pred_fallthru
                _
              // Predicated region
              $region116: #{net_forward.15} parent=92 // pred_check
                _
              $region117: #{net_forward.15} parent=92 // pred_check_branch
                %529 = sbr.rel target = $region119
              $region118: #{net_forward.15} parent=92 // pred_region
                _
              $region119: #{net_forward.15} parent=92 // pred_fallthru
                _
            $region93: #{net_forward.15} parent=88 // pred_fallthru
              _
            // Predicated region
            $region94: #{net_forward.15} parent=88 // pred_check
              _
            $region95: #{net_forward.15} parent=88 // pred_check_branch
              %500 = sbr.rel target = $region97
            $region96: #{net_forward.15} parent=88 // pred_region
              loop: start=0, step=1, limit=1
              $region98: #{net_forward.15} parent=96 // loop_pre_header
                _
              $region99: #{net_forward.15} parent=96 // loop_header
                %s503 = sphi 0, %s507
                %p504 = scmp.ge.s32.totalorder %s503, 1
                %s508 = sphi %s486, %s486
                %s509 = sphi %s494, %s494
              $region100: #{net_forward.15} parent=96 // loop_header_branch
                %506 = sbr.rel (%p504) target = $region104
              $region101: #{net_forward.15} parent=96 // loop_body
                %v510 = vld [vmem:[%s508] sm:$0xff]
                %511 = vst [vmem:[%s509] sm:$0xff] %v510
                %v512 = vld [vmem:[%s508 + $0x8] sm:$0xff]
                %513 = vst [vmem:[%s509 + $0x10] sm:$0xff] %v512
              $region102: #{net_forward.15} parent=96 // loop_footer
                %s507 = sadd.s32 1, %s503
              $region103: #{net_forward.15} parent=96 // loop_footer_branch
                %502 = sbr.rel target = $region99
              $region104: #{net_forward.15} parent=96 // loop_exit
                _
            $region97: #{net_forward.15} parent=88 // pred_fallthru
              _
          $region89: #{net_forward.15} parent=84 // pred_fallthru
            _
          %530 = vnop
        $region85: #{net_forward.15} parent=68 // pred_fallthru
          _
      $region69: #{net_forward.15} parent=5 // pred_fallthru
        _
      %p531 = scmp.le.s32.totalorder 2, %s9
      // Predicated region
      $region120: #{net_forward.15} parent=5 // pred_check
        %p532 = pneg %p531
      $region121: #{net_forward.15} parent=5 // pred_check_branch
        %534 = sbr.rel (%p532) target = $region123
      $region122: #{net_forward.15} parent=5 // pred_region
        %s535 = ssub.s32 %s9, 2
        // Predicated region
        $region124: #{net_forward.15} parent=122 // pred_check
          %p536 = pneg %p141
        $region125: #{net_forward.15} parent=122 // pred_check_branch
          %538 = sbr.rel (%p536) target = $region127
        $region126: #{net_forward.15} parent=122 // pred_region
          %s539 = sand.u32 %s126, 1
          %s540 = sand.u32 %s126, 1
          %s541 = smul.addr %s540, 16
          %s542 = scalar_lea.vmem [#allocation4], %s541
        $region127: #{net_forward.15} parent=122 // pred_fallthru
          _
      $region123: #{net_forward.15} parent=5 // pred_fallthru
        _
    $region6: #{net_forward.15} parent=1 // loop_footer
      %s13 = sadd.s32 1, %s9
    $region7: #{net_forward.15} parent=1 // loop_footer_branch
      %8 = sbr.rel target = $region3
    $region8: #{net_forward.15} parent=1 // loop_exit
      _

</llo_original>
